<compile_context>
chip_gen: v7x
topology: tpu7x:2x2x1
jax: 0.10.0
libtpu: 0.0.40
codegen_flags: <defaults>
</compile_context>

<pallas_src>
import functools

import numpy as np

import jax
import jax.numpy as jnp
from jax.experimental import pallas as pl
from jax.experimental.pallas import tpu as pltpu


# ----------------------------------------------------------------------------
# Fused mask-branch kernel: 4x(conv3x3+ReLU) -> deconv2x2 s2 + ReLU -> conv1x1
# ----------------------------------------------------------------------------
def _mask_branch_kernel(x_ref, im_ref, wc_ref, bc_ref, wd_ref, bd_ref,
                        wp_ref, bp_ref, o_ref, taps_ref,
                        *, num_layers, shifts, ch):
    """One grid step = one chunk of ROIs; activations never leave VMEM/vregs.

    Layout: channels on sublanes, pixels on lanes.  Every ROI occupies a
    (H+2)*(W+2)-pixel halo'ed tile, so the lane axis M is a multiple of 128
    and conv taps read halo zeros (no 9*Ch validity-mask tensor needed).

    x_ref   : (1, Ch, M)      bf16 input activations (halo'ed)
    im_ref  : (1, M)          f32 interior mask (1 inside ROI, 0 on halo)
    wc_ref  : (L, Ch, 9*Ch)   bf16 conv weights, cols ordered (ky, kx, cin)
    bc_ref  : (L, Ch, 1)      f32 conv biases
    wd_ref  : (4*Ch, Ch)      bf16 stacked deconv weights, rows (j=ky*2+kx, cout)
    bd_ref  : (4*Ch, 1)       f32 stacked deconv bias
    wp_ref  : (K, Ch)         bf16 1x1 class-predictor weight (transposed)
    bp_ref  : (K, 1)          f32 predictor bias
    o_ref   : (1, 4, K, M)    bf16 per-sub-position class logits (lane-dense)
    taps_ref: (9*Ch, M)       bf16 VMEM scratch for the 9-tap tensor
    """
    interior = im_ref[...]                                 # (1, M)
    a = x_ref[0].astype(jnp.float32)                       # (Ch, M)

    # mask_head: num_layers x (conv3x3 + ReLU).  Build the 9-tap tensor
    # directly in bf16 in the VMEM scratch, then ONE wide-K GEMM per layer.
    # (On v7x one could instead accumulate 9 per-tap (Ch,Ch) matmuls in the
    #  MRB and skip the taps scratch entirely.)
    for l in range(num_layers):
        for t, s in enumerate(shifts):
            v = a if s == 0 else pltpu.roll(a, shift=s, axis=1)
            taps_ref[pl.ds(t * ch, ch), :] = v.astype(jnp.bfloat16)
        y = jnp.dot(wc_ref[l], taps_ref[...],
                    preferred_element_type=jnp.float32)    # (Ch, M) f32 acc
        # bias + ReLU, then re-zero the halo so the next layer's taps read 0.
        a = jnp.maximum(y + bc_ref[l], 0.0) * interior

    # mask_predictor: ConvTranspose2d(2,2,stride=2)+ReLU as ONE stacked GEMM;
    # the 1x1 class predictor is applied BEFORE the pixel shuffle (per-pixel
    # channel op, so it commutes with the spatial scatter).
    yd = jnp.dot(wd_ref[...], a.astype(jnp.bfloat16),
                 preferred_element_type=jnp.float32) + bd_ref[...]
    y16 = jnp.maximum(yd, 0.0).astype(jnp.bfloat16)        # (4*Ch, M)
    for j in range(4):                                     # j = ky*2 + kx
        z = jnp.dot(wp_ref[...], y16[j * ch:(j + 1) * ch, :],
                    preferred_element_type=jnp.float32) + bp_ref[...]
        o_ref[0, j] = z.astype(o_ref.dtype)                # lane-dense store


def maskrcnn_mask_branch(mask_features_nchw, mask_head_params, deconv_w, deconv_b,
                         pred_w, pred_b, *, rois_per_block=None):
    """Fused Pallas mask branch.  NCHW f32 in, (N, K, 2H, 2W) bf16 logits out."""
    x = jnp.transpose(mask_features_nchw, (0, 2, 3, 1)).astype(jnp.float32)
    N, H, W, Cin = x.shape
    L = len(mask_head_params)
    Ch = mask_head_params[0][0].shape[-1]
    K = pred_w.shape[-1]
    Hp, Wp = H + 2, W + 2
    P = Hp * Wp                       # pixels per halo'ed ROI (256 for 14x14)

    if rois_per_block is None:
        # >=2 grid steps keep both v7x TensorCores busy; otherwise maximize
        # per-step work (v5e/v6e are single-TC: extra steps are serialization)
        # while keeping the lane axis at most a few thousand wide.
        max_r = max(1, 4096 // P)
        rois_per_block = max(1, min(max_r, -(-N // 2)))
    R = rois_per_block
    N_pad = -(-N // R) * R            # pad N instead of asserting N % R == 0
    NC = N_pad // R
    M = R * P                         # lane axis, multiple of 128

    # ---- one-time parameter packing (layout plumbing, outside the hot loop) --
    wcs, bcs = [], []
    for w, b in mask_head_params:
        ci = w.shape[2]
        if ci < Ch:                   # pad layer-0 Cin -> Ch with zeros
            w = jnp.pad(w, ((0, 0), (0, 0), (0, Ch - ci), (0, 0)))
        wcs.append(jnp.transpose(w, (3, 0, 1, 2)).reshape(Ch, 9 * Ch))
        bcs.append(b.reshape(Ch, 1))
    wc = jnp.stack(wcs).astype(jnp.bfloat16)               # (L, Ch, 9*Ch)
    bc = jnp.stack(bcs).astype(jnp.float32)                # (L, Ch, 1)

    # deconv weight given as (Cin, kH, kW, Cout); stack the 4 sub-positions.
    wd = jnp.transpose(deconv_w, (1, 2, 3, 0)).reshape(4 * Ch, Ch).astype(jnp.bfloat16)
    bd = jnp.tile(deconv_b.reshape(-1), 4).reshape(4 * Ch, 1).astype(jnp.float32)
    wp = jnp.transpose(pred_w, (1, 0)).astype(jnp.bfloat16)  # (K, Ch)
    bp = pred_b.reshape(K, 1).astype(jnp.float32)

    # input: zero-pad channels -> Ch, ROIs -> N_pad, add a 1-pixel zero halo;
    # then (chunks, Ch, M) with channels on sublanes / pixels on lanes, bf16.
    if Cin < Ch:
        x = jnp.pad(x, ((0, 0), (0, 0), (0, 0), (0, Ch - Cin)))
    if N_pad > N:
        x = jnp.pad(x, ((0, N_pad - N), (0, 0), (0, 0), (0, 0)))
    x = jnp.pad(x, ((0, 0), (1, 1), (1, 1), (0, 0)))        # halo
    xk = x.reshape(NC, R * P, Ch).transpose(0, 2, 1).astype(jnp.bfloat16)

    # (1, M) interior mask: 1 on real pixels, 0 on the halo ring (vectorized).
    hh = np.arange(Hp)[:, None]
    ww = np.arange(Wp)[None, :]
    interior2d = ((hh >= 1) & (hh <= H) & (ww >= 1) & (ww <= W)).astype(np.float32)
    interior = jnp.asarray(np.tile(interior2d.reshape(-1), R).reshape(1, M))

    # static lane-roll per tap: tap (ky,kx) of pixel m lives at pixel m + s
    shifts = tuple((-((ky - 1) * Wp + (kx - 1))) % M
                   for ky in range(3) for kx in range(3))

    # rough per-step working set -> explicit scoped-VMEM limit (v7x has 64 MiB)
    est = (9 * Ch * M * 2 + 2 * Ch * M * 2 + 2 * 4 * K * M * 2 + M * 4
           + L * Ch * 9 * Ch * 2 + 4 * Ch * Ch * 2 + K * Ch * 2
           + (L * Ch + 4 * Ch + K) * 4)
    vmem_limit = int(min(96 * 2**20, max(32 * 2**20, 4 * est)))

    kernel = functools.partial(_mask_branch_kernel,
                               num_layers=L, shifts=shifts, ch=Ch)
    out = pl.pallas_call(
        kernel,
        out_shape=jax.ShapeDtypeStruct((NC, 4, K, M), jnp.bfloat16),
        grid=(NC,),
        in_specs=[
            pl.BlockSpec((1, Ch, M), lambda n: (n, 0, 0)),
            # invariant operands: full-array blocks with constant index maps
            pl.BlockSpec((1, M), lambda n: (0, 0)),
            pl.BlockSpec((L, Ch, 9 * Ch), lambda n: (0, 0, 0)),
            pl.BlockSpec((L, Ch, 1), lambda n: (0, 0, 0)),
            pl.BlockSpec((4 * Ch, Ch), lambda n: (0, 0)),
            pl.BlockSpec((4 * Ch, 1), lambda n: (0, 0)),
            pl.BlockSpec((K, Ch), lambda n: (0, 0)),
            pl.BlockSpec((K, 1), lambda n: (0, 0)),
        ],
        out_specs=pl.BlockSpec((1, 4, K, M), lambda n: (n, 0, 0, 0)),
        scratch_shapes=[pltpu.VMEM((9 * Ch, M), jnp.bfloat16)],
        compiler_params=pltpu.CompilerParams(
            dimension_semantics=("parallel",),
            vmem_limit_bytes=vmem_limit),
    )(xk, interior, wc, bc, wd, bd, wp, bp)

    # transposed-conv pixel shuffle on the small K-channel logits (XLA), drop
    # the halo ring and the padded ROIs, back to NCHW.  Stays bf16.
    out = out.reshape(NC, 2, 2, K, R, Hp, Wp)[:, :, :, :, :, 1:1 + H, 1:1 + W]
    out = out.transpose(0, 4, 5, 1, 6, 2, 3).reshape(N_pad, 2 * H, 2 * W, K)[:N]
    return jnp.transpose(out, (0, 3, 1, 2))                # (N, K, 2H, 2W) bf16


# ----------------------------------------------------------------------------
# MaskRCNNMaskPostProcess.forward  (== torchvision maskrcnn_inference)
# ----------------------------------------------------------------------------
def _postprocess_kernel(idx_ref, x_hbm, o_ref, buf, sem, *, rois_per_block):
    """sigmoid of each ROI's labelled class plane, rois_per_block ROIs / step.

    idx_ref: (Nm_pad,) int32 in SMEM - flat (roi*C + label) plane indices
    x_hbm  : (Nm*C, HW)  mask logits left in HBM (pl.ANY); only the selected
             planes are ever DMA'd (1/num_classes of the tensor).
    o_ref  : (R, HW)     f32 probabilities for this chunk of ROIs
    buf    : (R, HW)     VMEM gather buffer, sem: (R,) DMA semaphores
    """
    g = pl.program_id(0)
    r0 = g * rois_per_block
    copies = []
    for r in range(rois_per_block):          # issue all label-selected gathers
        cp = pltpu.make_async_copy(x_hbm.at[idx_ref[r0 + r]], buf.at[r], sem.at[r])
        cp.start()
        copies.append(cp)
    for cp in copies:
        cp.wait()
    z = buf[...].astype(jnp.float32)
    o_ref[...] = 1.0 / (1.0 + jnp.exp(-z))   # exact sigmoid (no approx recip)


def maskrcnn_mask_postprocess(mask_logits, labels_list, *, rois_per_block=8):
    """mask_probs = maskrcnn_inference(mask_logits, labels)."""
    boxes_per_image = [int(l.shape[0]) for l in labels_list]
    labels = jnp.concatenate(
        [jnp.asarray(l, jnp.int32).reshape(-1) for l in labels_list])
    Nm, C, Ho, Wo = mask_logits.shape
    HW = Ho * Wo
    R = max(8, (rois_per_block // 8) * 8)    # sublane-aligned output blocks
    Nm_pad = -(-Nm // R) * R
    NC = Nm_pad // R

    labels = jnp.clip(labels, 0, C - 1)      # bounds-check: no silent OOB reads
    idx = jnp.arange(Nm, dtype=jnp.int32) * C + labels
    if Nm_pad > Nm:
        idx = jnp.pad(idx, (0, Nm_pad - Nm))  # padded rows just re-read plane 0

    x = mask_logits.reshape(Nm * C, HW)

    kernel = functools.partial(_postprocess_kernel, rois_per_block=R)
    out = pl.pallas_call(
        kernel,
        out_shape=jax.ShapeDtypeStruct((Nm_pad, HW), jnp.float32),
        grid_spec=pltpu.PrefetchScalarGridSpec(
            num_scalar_prefetch=1,           # plane indices land in SMEM
            grid=(NC,),
            in_specs=[pl.BlockSpec(memory_space=pl.ANY)],
            out_specs=pl.BlockSpec((R, HW), lambda g, idx: (g, 0)),
            scratch_shapes=[pltpu.VMEM((R, HW), mask_logits.dtype),
                            pltpu.SemaphoreType.DMA((R,))],
        ),
        compiler_params=pltpu.CompilerParams(dimension_semantics=("arbitrary",)),
    )(idx, x)

    mask_probs = out[:Nm].reshape(Nm, 1, Ho, Wo)
    # TODO(synk): per-image list split (torch Tensor.split) is host-side python
    #             list plumbing, not a kernel op.
    splits, start = [], 0
    for n in boxes_per_image:
        splits.append(mask_probs[start:start + n])
        start += n
    return splits


# ----------------------------------------------------------------------------
# Pure-JAX references (correctness checks)
# ----------------------------------------------------------------------------
def reference_mask_branch(mask_features_nchw, mask_head_params, deconv_w, deconv_b,
                          pred_w, pred_b):
    x = jnp.transpose(mask_features_nchw, (0, 2, 3, 1)).astype(jnp.float32)
    for w, b in mask_head_params:
        x = jax.lax.conv_general_dilated(
            x, w, (1, 1), 'SAME',
            dimension_numbers=('NHWC', 'HWIO', 'NHWC'),
            precision=jax.lax.Precision.HIGHEST)
        x = jax.nn.relu(x + b)
    N, H, W, C = x.shape
    Co = deconv_w.shape[-1]
    y = jnp.einsum('nhwc,cijk->nhwijk', x, deconv_w,
                   precision=jax.lax.Precision.HIGHEST)
    y = y.transpose(0, 1, 3, 2, 4, 5).reshape(N, 2 * H, 2 * W, Co)
    y = jax.nn.relu(y + deconv_b)
    z = jnp.einsum('nhwc,ck->nhwk', y, pred_w,
                   precision=jax.lax.Precision.HIGHEST) + pred_b
    return jnp.transpose(z, (0, 3, 1, 2))


def reference_postprocess(mask_logits, labels_list):
    labels = jnp.concatenate(
        [jnp.asarray(l, jnp.int32).reshape(-1) for l in labels_list])
    probs = jax.nn.sigmoid(mask_logits.astype(jnp.float32))[
        jnp.arange(mask_logits.shape[0]), labels][:, None]
    out, start = [], 0
    for l in labels_list:
        n = int(l.shape[0])
        out.append(probs[start:start + n])
        start += n
    return out


# ----------------------------------------------------------------------------
# Main
# ----------------------------------------------------------------------------
if __name__ == "__main__":
    # Small shapes consistent with the MaskRCNN mask branch: ROI features (N, C, 14, 14)
    N, C_in, H, W = 4, 8, 14, 14
    hidden, num_classes = 16, 4

    key = jax.random.PRNGKey(0)
    keys = jax.random.split(key, 16)

    def init(k, shape, scale=0.1):
        return (scale * jax.random.normal(k, shape)).astype(jnp.float32)

    mask_head_params = []
    c_prev = C_in
    for i in range(4):
        w = init(keys[2 * i], (3, 3, c_prev, hidden))          # HWIO
        b = init(keys[2 * i + 1], (hidden,), 0.01)
        mask_head_params.append((w, b))
        c_prev = hidden

    deconv_w = init(keys[8], (hidden, 2, 2, hidden))           # (Cin, kH, kW, Cout)
    deconv_b = init(keys[9], (hidden,), 0.01)
    pred_w = init(keys[10], (hidden, num_classes))             # 1x1 conv as (Cin, K)
    pred_b = init(keys[11], (num_classes,), 0.01)

    mask_features = jax.random.normal(keys[12], (N, C_in, H, W), dtype=jnp.float32)
    labels_list = [jnp.array([2, 0], jnp.int32), jnp.array([1, 3], jnp.int32)]

    # mask branch -> mask_logits (fused Pallas kernel, bf16 output)
    mask_logits = maskrcnn_mask_branch(
        mask_features, mask_head_params, deconv_w, deconv_b, pred_w, pred_b)
    mask_logits = jax.block_until_ready(mask_logits)
    assert mask_logits.shape == (N, num_classes, 2 * H, 2 * W), mask_logits.shape
    assert mask_logits.dtype == jnp.bfloat16

    # MaskRCNNMaskPostProcess.forward(mask_logits, labels)
    mask_probs = maskrcnn_mask_postprocess(mask_logits, labels_list)
    mask_probs = [jax.block_until_ready(p) for p in mask_probs]
    assert len(mask_probs) == len(labels_list)
    assert all(p.shape == (int(l.shape[0]), 1, 2 * H, 2 * W)
               for p, l in zip(mask_probs, labels_list))

    # correctness: fused branch vs pure-JAX f32 reference (bf16 MXU + bf16 out)
    ref_logits = reference_mask_branch(
        mask_features, mask_head_params, deconv_w, deconv_b, pred_w, pred_b)
    err_branch = float(jnp.max(jnp.abs(mask_logits.astype(jnp.float32) - ref_logits)))
    assert err_branch < 3e-2, f"mask-branch max abs err {err_branch}"

    # correctness: post-process vs pure-JAX reference on the same logits
    ref_probs = reference_postprocess(mask_logits, labels_list)
    err_pp = max(float(jnp.max(jnp.abs(a - b))) for a, b in zip(mask_probs, ref_probs))
    assert err_pp < 1e-5, f"post-process max abs err {err_pp}"

    print("KERNEL_OK")
</pallas_src>

<mosaic_0001>
module attributes {stable_mosaic.version = 11 : i64} {
  func.func @_mask_branch_kernel(%arg0: i32, %arg1: memref<1x16x512xbf16, #tpu.memory_space<vmem>>, %arg2: memref<1x512xf32, #tpu.memory_space<vmem>>, %arg3: memref<4x16x144xbf16, #tpu.memory_space<vmem>>, %arg4: memref<4x16x1xf32, #tpu.memory_space<vmem>>, %arg5: memref<64x16xbf16, #tpu.memory_space<vmem>>, %arg6: memref<64x1xf32, #tpu.memory_space<vmem>>, %arg7: memref<4x16xbf16, #tpu.memory_space<vmem>>, %arg8: memref<4x1xf32, #tpu.memory_space<vmem>>, %arg9: memref<1x4x4x512xbf16, #tpu.memory_space<vmem>>, %arg10: memref<144x512xbf16, #tpu.memory_space<vmem>>) attributes {dimension_semantics = [#tpu.dimension_semantics<parallel>], iteration_bounds = array<i64: 2>, scalar_prefetch = 0 : i64, scratch_operands = 1 : i64, tpu.core_type = #tpu.core_type<tc>, window_params = [{transform_indices = @transform_0, window_bounds = array<i64: 1, 16, 512>}, {pipeline_mode = #tpu.pipeline_mode<synchronous>, transform_indices = @transform_1, window_bounds = array<i64: 1, 512>}, {pipeline_mode = #tpu.pipeline_mode<synchronous>, transform_indices = @transform_2, window_bounds = array<i64: 4, 16, 144>}, {pipeline_mode = #tpu.pipeline_mode<synchronous>, transform_indices = @transform_3, window_bounds = array<i64: 4, 16, 1>}, {pipeline_mode = #tpu.pipeline_mode<synchronous>, transform_indices = @transform_4, window_bounds = array<i64: 64, 16>}, {pipeline_mode = #tpu.pipeline_mode<synchronous>, transform_indices = @transform_5, window_bounds = array<i64: 64, 1>}, {pipeline_mode = #tpu.pipeline_mode<synchronous>, transform_indices = @transform_6, window_bounds = array<i64: 4, 16>}, {pipeline_mode = #tpu.pipeline_mode<synchronous>, transform_indices = @transform_7, window_bounds = array<i64: 4, 1>}, {transform_indices = @transform_8, window_bounds = array<i64: 1, 4, 4, 512>}]} {
    %c0 = arith.constant 0 : index
    %c0_0 = arith.constant 0 : index
    %0 = vector.load %arg2[%c0, %c0_0] : memref<1x512xf32, #tpu.memory_space<vmem>>, vector<1x512xf32>
    %c0_1 = arith.constant 0 : index
    %c0_2 = arith.constant 0 : index
    %c0_3 = arith.constant 0 : index
    %1 = vector.load %arg1[%c0_1, %c0_2, %c0_3] : memref<1x16x512xbf16, #tpu.memory_space<vmem>>, vector<1x16x512xbf16>
    %2 = vector.shape_cast %1 : vector<1x16x512xbf16> to vector<16x512xbf16>
    %3 = arith.extf %2 : vector<16x512xbf16> to vector<16x512xf32>
    %c17_i32 = arith.constant 17 : i32
    %4 = tpu.dynamic_rotate %3 by %c17_i32 dim 1 : vector<16x512xf32>, i32 -> vector<16x512xf32>
    %5 = arith.truncf %4 : vector<16x512xf32> to vector<16x512xbf16>
    %c0_4 = arith.constant 0 : index
    %c0_5 = arith.constant 0 : index
    %6 = vector.load %arg10[%c0_4, %c0_5] : memref<144x512xbf16, #tpu.memory_space<vmem>>, vector<16x512xbf16>
    tpu.vector_store %arg10[%c0_4, %c0_5], %5 {strides = array<i32>} : memref<144x512xbf16, #tpu.memory_space<vmem>>, vector<16x512xbf16>,
    %c16_i32 = arith.constant 16 : i32
    %7 = tpu.dynamic_rotate %3 by %c16_i32 dim 1 : vector<16x512xf32>, i32 -> vector<16x512xf32>
    %8 = arith.truncf %7 : vector<16x512xf32> to vector<16x512xbf16>
    %c16 = arith.constant 16 : index
    %c0_6 = arith.constant 0 : index
    %9 = vector.load %arg10[%c16, %c0_6] : memref<144x512xbf16, #tpu.memory_space<vmem>>, vector<16x512xbf16>
    tpu.vector_store %arg10[%c16, %c0_6], %8 {strides = array<i32>} : memref<144x512xbf16, #tpu.memory_space<vmem>>, vector<16x512xbf16>,
    %c15_i32 = arith.constant 15 : i32
    %10 = tpu.dynamic_rotate %3 by %c15_i32 dim 1 : vector<16x512xf32>, i32 -> vector<16x512xf32>
    %11 = arith.truncf %10 : vector<16x512xf32> to vector<16x512xbf16>
    %c32 = arith.constant 32 : index
    %c0_7 = arith.constant 0 : index
    %12 = vector.load %arg10[%c32, %c0_7] : memref<144x512xbf16, #tpu.memory_space<vmem>>, vector<16x512xbf16>
    tpu.vector_store %arg10[%c32, %c0_7], %11 {strides = array<i32>} : memref<144x512xbf16, #tpu.memory_space<vmem>>, vector<16x512xbf16>,
    %c1_i32 = arith.constant 1 : i32
    %13 = tpu.dynamic_rotate %3 by %c1_i32 dim 1 : vector<16x512xf32>, i32 -> vector<16x512xf32>
    %14 = arith.truncf %13 : vector<16x512xf32> to vector<16x512xbf16>
    %c48 = arith.constant 48 : index
    %c0_8 = arith.constant 0 : index
    %15 = vector.load %arg10[%c48, %c0_8] : memref<144x512xbf16, #tpu.memory_space<vmem>>, vector<16x512xbf16>
    tpu.vector_store %arg10[%c48, %c0_8], %14 {strides = array<i32>} : memref<144x512xbf16, #tpu.memory_space<vmem>>, vector<16x512xbf16>,
    %16 = arith.truncf %3 : vector<16x512xf32> to vector<16x512xbf16>
    %c64 = arith.constant 64 : index
    %c0_9 = arith.constant 0 : index
    %17 = vector.load %arg10[%c64, %c0_9] : memref<144x512xbf16, #tpu.memory_space<vmem>>, vector<16x512xbf16>
    tpu.vector_store %arg10[%c64, %c0_9], %16 {strides = array<i32>} : memref<144x512xbf16, #tpu.memory_space<vmem>>, vector<16x512xbf16>,
    %c511_i32 = arith.constant 511 : i32
    %18 = tpu.dynamic_rotate %3 by %c511_i32 dim 1 : vector<16x512xf32>, i32 -> vector<16x512xf32>
    %19 = arith.truncf %18 : vector<16x512xf32> to vector<16x512xbf16>
    %c80 = arith.constant 80 : index
    %c0_10 = arith.constant 0 : index
    %20 = vector.load %arg10[%c80, %c0_10] : memref<144x512xbf16, #tpu.memory_space<vmem>>, vector<16x512xbf16>
    tpu.vector_store %arg10[%c80, %c0_10], %19 {strides = array<i32>} : memref<144x512xbf16, #tpu.memory_space<vmem>>, vector<16x512xbf16>,
    %c497_i32 = arith.constant 497 : i32
    %21 = tpu.dynamic_rotate %3 by %c497_i32 dim 1 : vector<16x512xf32>, i32 -> vector<16x512xf32>
    %22 = arith.truncf %21 : vector<16x512xf32> to vector<16x512xbf16>
    %c96 = arith.constant 96 : index
    %c0_11 = arith.constant 0 : index
    %23 = vector.load %arg10[%c96, %c0_11] : memref<144x512xbf16, #tpu.memory_space<vmem>>, vector<16x512xbf16>
    tpu.vector_store %arg10[%c96, %c0_11], %22 {strides = array<i32>} : memref<144x512xbf16, #tpu.memory_space<vmem>>, vector<16x512xbf16>,
    %c496_i32 = arith.constant 496 : i32
    %24 = tpu.dynamic_rotate %3 by %c496_i32 dim 1 : vector<16x512xf32>, i32 -> vector<16x512xf32>
    %25 = arith.truncf %24 : vector<16x512xf32> to vector<16x512xbf16>
    %c112 = arith.constant 112 : index
    %c0_12 = arith.constant 0 : index
    %26 = vector.load %arg10[%c112, %c0_12] : memref<144x512xbf16, #tpu.memory_space<vmem>>, vector<16x512xbf16>
    tpu.vector_store %arg10[%c112, %c0_12], %25 {strides = array<i32>} : memref<144x512xbf16, #tpu.memory_space<vmem>>, vector<16x512xbf16>,
    %c495_i32 = arith.constant 495 : i32
    %27 = tpu.dynamic_rotate %3 by %c495_i32 dim 1 : vector<16x512xf32>, i32 -> vector<16x512xf32>
    %28 = arith.truncf %27 : vector<16x512xf32> to vector<16x512xbf16>
    %c128 = arith.constant 128 : index
    %c0_13 = arith.constant 0 : index
    %29 = vector.load %arg10[%c128, %c0_13] : memref<144x512xbf16, #tpu.memory_space<vmem>>, vector<16x512xbf16>
    tpu.vector_store %arg10[%c128, %c0_13], %28 {strides = array<i32>} : memref<144x512xbf16, #tpu.memory_space<vmem>>, vector<16x512xbf16>,
    %c0_14 = arith.constant 0 : index
    %c0_15 = arith.constant 0 : index
    %c0_16 = arith.constant 0 : index
    %30 = vector.load %arg3[%c0_14, %c0_15, %c0_16] : memref<4x16x144xbf16, #tpu.memory_space<vmem>>, vector<1x16x144xbf16>
    %31 = vector.shape_cast %30 : vector<1x16x144xbf16> to vector<16x144xbf16>
    %c0_17 = arith.constant 0 : index
    %c0_18 = arith.constant 0 : index
    %32 = vector.load %arg10[%c0_17, %c0_18] : memref<144x512xbf16, #tpu.memory_space<vmem>>, vector<144x512xbf16>
    %cst = arith.constant dense<0.000000e+00> : vector<16x512xf32>
    %33 = tpu.matmul %31, %32, %cst {dimension_numbers = #tpu.dot_dimension_numbers<[1], [0], [0], [1], [0, 0, 1, 1], [], []>} : vector<16x144xbf16>, vector<144x512xbf16>, vector<16x512xf32> -> vector<16x512xf32>
    %c0_19 = arith.constant 0 : index
    %c0_20 = arith.constant 0 : index
    %c0_21 = arith.constant 0 : index
    %34 = vector.load %arg4[%c0_19, %c0_20, %c0_21] : memref<4x16x1xf32, #tpu.memory_space<vmem>>, vector<1x16x1xf32>
    %35 = vector.shape_cast %34 : vector<1x16x1xf32> to vector<16x1xf32>
    %36 = vector.broadcast %35 : vector<16x1xf32> to vector<16x512xf32>
    %37 = arith.addf %33, %36 : vector<16x512xf32>
    %cst_22 = arith.constant 0.000000e+00 : f32
    %38 = vector.broadcast %cst_22 : f32 to vector<16x512xf32>
    %39 = arith.maximumf %37, %38 : vector<16x512xf32>
    %40 = vector.broadcast %0 : vector<1x512xf32> to vector<16x512xf32>
    %41 = arith.mulf %39, %40 : vector<16x512xf32>
    %c17_i32_23 = arith.constant 17 : i32
    %42 = tpu.dynamic_rotate %41 by %c17_i32_23 dim 1 : vector<16x512xf32>, i32 -> vector<16x512xf32>
    %43 = arith.truncf %42 : vector<16x512xf32> to vector<16x512xbf16>
    %c0_24 = arith.constant 0 : index
    %c0_25 = arith.constant 0 : index
    %44 = vector.load %arg10[%c0_24, %c0_25] : memref<144x512xbf16, #tpu.memory_space<vmem>>, vector<16x512xbf16>
    tpu.vector_store %arg10[%c0_24, %c0_25], %43 {strides = array<i32>} : memref<144x512xbf16, #tpu.memory_space<vmem>>, vector<16x512xbf16>,
    %c16_i32_26 = arith.constant 16 : i32
    %45 = tpu.dynamic_rotate %41 by %c16_i32_26 dim 1 : vector<16x512xf32>, i32 -> vector<16x512xf32>
    %46 = arith.truncf %45 : vector<16x512xf32> to vector<16x512xbf16>
    %c16_27 = arith.constant 16 : index
    %c0_28 = arith.constant 0 : index
    %47 = vector.load %arg10[%c16_27, %c0_28] : memref<144x512xbf16, #tpu.memory_space<vmem>>, vector<16x512xbf16>
    tpu.vector_store %arg10[%c16_27, %c0_28], %46 {strides = array<i32>} : memref<144x512xbf16, #tpu.memory_space<vmem>>, vector<16x512xbf16>,
    %c15_i32_29 = arith.constant 15 : i32
    %48 = tpu.dynamic_rotate %41 by %c15_i32_29 dim 1 : vector<16x512xf32>, i32 -> vector<16x512xf32>
    %49 = arith.truncf %48 : vector<16x512xf32> to vector<16x512xbf16>
    %c32_30 = arith.constant 32 : index
    %c0_31 = arith.constant 0 : index
    %50 = vector.load %arg10[%c32_30, %c0_31] : memref<144x512xbf16, #tpu.memory_space<vmem>>, vector<16x512xbf16>
    tpu.vector_store %arg10[%c32_30, %c0_31], %49 {strides = array<i32>} : memref<144x512xbf16, #tpu.memory_space<vmem>>, vector<16x512xbf16>,
    %c1_i32_32 = arith.constant 1 : i32
    %51 = tpu.dynamic_rotate %41 by %c1_i32_32 dim 1 : vector<16x512xf32>, i32 -> vector<16x512xf32>
    %52 = arith.truncf %51 : vector<16x512xf32> to vector<16x512xbf16>
    %c48_33 = arith.constant 48 : index
    %c0_34 = arith.constant 0 : index
    %53 = vector.load %arg10[%c48_33, %c0_34] : memref<144x512xbf16, #tpu.memory_space<vmem>>, vector<16x512xbf16>
    tpu.vector_store %arg10[%c48_33, %c0_34], %52 {strides = array<i32>} : memref<144x512xbf16, #tpu.memory_space<vmem>>, vector<16x512xbf16>,
    %54 = arith.truncf %41 : vector<16x512xf32> to vector<16x512xbf16>
    %c64_35 = arith.constant 64 : index
    %c0_36 = arith.constant 0 : index
    %55 = vector.load %arg10[%c64_35, %c0_36] : memref<144x512xbf16, #tpu.memory_space<vmem>>, vector<16x512xbf16>
    tpu.vector_store %arg10[%c64_35, %c0_36], %54 {strides = array<i32>} : memref<144x512xbf16, #tpu.memory_space<vmem>>, vector<16x512xbf16>,
    %c511_i32_37 = arith.constant 511 : i32
    %56 = tpu.dynamic_rotate %41 by %c511_i32_37 dim 1 : vector<16x512xf32>, i32 -> vector<16x512xf32>
    %57 = arith.truncf %56 : vector<16x512xf32> to vector<16x512xbf16>
    %c80_38 = arith.constant 80 : index
    %c0_39 = arith.constant 0 : index
    %58 = vector.load %arg10[%c80_38, %c0_39] : memref<144x512xbf16, #tpu.memory_space<vmem>>, vector<16x512xbf16>
    tpu.vector_store %arg10[%c80_38, %c0_39], %57 {strides = array<i32>} : memref<144x512xbf16, #tpu.memory_space<vmem>>, vector<16x512xbf16>,
    %c497_i32_40 = arith.constant 497 : i32
    %59 = tpu.dynamic_rotate %41 by %c497_i32_40 dim 1 : vector<16x512xf32>, i32 -> vector<16x512xf32>
    %60 = arith.truncf %59 : vector<16x512xf32> to vector<16x512xbf16>
    %c96_41 = arith.constant 96 : index
    %c0_42 = arith.constant 0 : index
    %61 = vector.load %arg10[%c96_41, %c0_42] : memref<144x512xbf16, #tpu.memory_space<vmem>>, vector<16x512xbf16>
    tpu.vector_store %arg10[%c96_41, %c0_42], %60 {strides = array<i32>} : memref<144x512xbf16, #tpu.memory_space<vmem>>, vector<16x512xbf16>,
    %c496_i32_43 = arith.constant 496 : i32
    %62 = tpu.dynamic_rotate %41 by %c496_i32_43 dim 1 : vector<16x512xf32>, i32 -> vector<16x512xf32>
    %63 = arith.truncf %62 : vector<16x512xf32> to vector<16x512xbf16>
    %c112_44 = arith.constant 112 : index
    %c0_45 = arith.constant 0 : index
    %64 = vector.load %arg10[%c112_44, %c0_45] : memref<144x512xbf16, #tpu.memory_space<vmem>>, vector<16x512xbf16>
    tpu.vector_store %arg10[%c112_44, %c0_45], %63 {strides = array<i32>} : memref<144x512xbf16, #tpu.memory_space<vmem>>, vector<16x512xbf16>,
    %c495_i32_46 = arith.constant 495 : i32
    %65 = tpu.dynamic_rotate %41 by %c495_i32_46 dim 1 : vector<16x512xf32>, i32 -> vector<16x512xf32>
    %66 = arith.truncf %65 : vector<16x512xf32> to vector<16x512xbf16>
    %c128_47 = arith.constant 128 : index
    %c0_48 = arith.constant 0 : index
    %67 = vector.load %arg10[%c128_47, %c0_48] : memref<144x512xbf16, #tpu.memory_space<vmem>>, vector<16x512xbf16>
    tpu.vector_store %arg10[%c128_47, %c0_48], %66 {strides = array<i32>} : memref<144x512xbf16, #tpu.memory_space<vmem>>, vector<16x512xbf16>,
    %c1 = arith.constant 1 : index
    %c0_49 = arith.constant 0 : index
    %c0_50 = arith.constant 0 : index
    %68 = vector.load %arg3[%c1, %c0_49, %c0_50] : memref<4x16x144xbf16, #tpu.memory_space<vmem>>, vector<1x16x144xbf16>
    %69 = vector.shape_cast %68 : vector<1x16x144xbf16> to vector<16x144xbf16>
    %c0_51 = arith.constant 0 : index
    %c0_52 = arith.constant 0 : index
    %70 = vector.load %arg10[%c0_51, %c0_52] : memref<144x512xbf16, #tpu.memory_space<vmem>>, vector<144x512xbf16>
    %cst_53 = arith.constant dense<0.000000e+00> : vector<16x512xf32>
    %71 = tpu.matmul %69, %70, %cst_53 {dimension_numbers = #tpu.dot_dimension_numbers<[1], [0], [0], [1], [0, 0, 1, 1], [], []>} : vector<16x144xbf16>, vector<144x512xbf16>, vector<16x512xf32> -> vector<16x512xf32>
    %c1_54 = arith.constant 1 : index
    %c0_55 = arith.constant 0 : index
    %c0_56 = arith.constant 0 : index
    %72 = vector.load %arg4[%c1_54, %c0_55, %c0_56] : memref<4x16x1xf32, #tpu.memory_space<vmem>>, vector<1x16x1xf32>
    %73 = vector.shape_cast %72 : vector<1x16x1xf32> to vector<16x1xf32>
    %74 = vector.broadcast %73 : vector<16x1xf32> to vector<16x512xf32>
    %75 = arith.addf %71, %74 : vector<16x512xf32>
    %cst_57 = arith.constant 0.000000e+00 : f32
    %76 = vector.broadcast %cst_57 : f32 to vector<16x512xf32>
    %77 = arith.maximumf %75, %76 : vector<16x512xf32>
    %78 = vector.broadcast %0 : vector<1x512xf32> to vector<16x512xf32>
    %79 = arith.mulf %77, %78 : vector<16x512xf32>
    %c17_i32_58 = arith.constant 17 : i32
    %80 = tpu.dynamic_rotate %79 by %c17_i32_58 dim 1 : vector<16x512xf32>, i32 -> vector<16x512xf32>
    %81 = arith.truncf %80 : vector<16x512xf32> to vector<16x512xbf16>
    %c0_59 = arith.constant 0 : index
    %c0_60 = arith.constant 0 : index
    %82 = vector.load %arg10[%c0_59, %c0_60] : memref<144x512xbf16, #tpu.memory_space<vmem>>, vector<16x512xbf16>
    tpu.vector_store %arg10[%c0_59, %c0_60], %81 {strides = array<i32>} : memref<144x512xbf16, #tpu.memory_space<vmem>>, vector<16x512xbf16>,
    %c16_i32_61 = arith.constant 16 : i32
    %83 = tpu.dynamic_rotate %79 by %c16_i32_61 dim 1 : vector<16x512xf32>, i32 -> vector<16x512xf32>
    %84 = arith.truncf %83 : vector<16x512xf32> to vector<16x512xbf16>
    %c16_62 = arith.constant 16 : index
    %c0_63 = arith.constant 0 : index
    %85 = vector.load %arg10[%c16_62, %c0_63] : memref<144x512xbf16, #tpu.memory_space<vmem>>, vector<16x512xbf16>
    tpu.vector_store %arg10[%c16_62, %c0_63], %84 {strides = array<i32>} : memref<144x512xbf16, #tpu.memory_space<vmem>>, vector<16x512xbf16>,
    %c15_i32_64 = arith.constant 15 : i32
    %86 = tpu.dynamic_rotate %79 by %c15_i32_64 dim 1 : vector<16x512xf32>, i32 -> vector<16x512xf32>
    %87 = arith.truncf %86 : vector<16x512xf32> to vector<16x512xbf16>
    %c32_65 = arith.constant 32 : index
    %c0_66 = arith.constant 0 : index
    %88 = vector.load %arg10[%c32_65, %c0_66] : memref<144x512xbf16, #tpu.memory_space<vmem>>, vector<16x512xbf16>
    tpu.vector_store %arg10[%c32_65, %c0_66], %87 {strides = array<i32>} : memref<144x512xbf16, #tpu.memory_space<vmem>>, vector<16x512xbf16>,
    %c1_i32_67 = arith.constant 1 : i32
    %89 = tpu.dynamic_rotate %79 by %c1_i32_67 dim 1 : vector<16x512xf32>, i32 -> vector<16x512xf32>
    %90 = arith.truncf %89 : vector<16x512xf32> to vector<16x512xbf16>
    %c48_68 = arith.constant 48 : index
    %c0_69 = arith.constant 0 : index
    %91 = vector.load %arg10[%c48_68, %c0_69] : memref<144x512xbf16, #tpu.memory_space<vmem>>, vector<16x512xbf16>
    tpu.vector_store %arg10[%c48_68, %c0_69], %90 {strides = array<i32>} : memref<144x512xbf16, #tpu.memory_space<vmem>>, vector<16x512xbf16>,
    %92 = arith.truncf %79 : vector<16x512xf32> to vector<16x512xbf16>
    %c64_70 = arith.constant 64 : index
    %c0_71 = arith.constant 0 : index
    %93 = vector.load %arg10[%c64_70, %c0_71] : memref<144x512xbf16, #tpu.memory_space<vmem>>, vector<16x512xbf16>
    tpu.vector_store %arg10[%c64_70, %c0_71], %92 {strides = array<i32>} : memref<144x512xbf16, #tpu.memory_space<vmem>>, vector<16x512xbf16>,
    %c511_i32_72 = arith.constant 511 : i32
    %94 = tpu.dynamic_rotate %79 by %c511_i32_72 dim 1 : vector<16x512xf32>, i32 -> vector<16x512xf32>
    %95 = arith.truncf %94 : vector<16x512xf32> to vector<16x512xbf16>
    %c80_73 = arith.constant 80 : index
    %c0_74 = arith.constant 0 : index
    %96 = vector.load %arg10[%c80_73, %c0_74] : memref<144x512xbf16, #tpu.memory_space<vmem>>, vector<16x512xbf16>
    tpu.vector_store %arg10[%c80_73, %c0_74], %95 {strides = array<i32>} : memref<144x512xbf16, #tpu.memory_space<vmem>>, vector<16x512xbf16>,
    %c497_i32_75 = arith.constant 497 : i32
    %97 = tpu.dynamic_rotate %79 by %c497_i32_75 dim 1 : vector<16x512xf32>, i32 -> vector<16x512xf32>
    %98 = arith.truncf %97 : vector<16x512xf32> to vector<16x512xbf16>
    %c96_76 = arith.constant 96 : index
    %c0_77 = arith.constant 0 : index
    %99 = vector.load %arg10[%c96_76, %c0_77] : memref<144x512xbf16, #tpu.memory_space<vmem>>, vector<16x512xbf16>
    tpu.vector_store %arg10[%c96_76, %c0_77], %98 {strides = array<i32>} : memref<144x512xbf16, #tpu.memory_space<vmem>>, vector<16x512xbf16>,
    %c496_i32_78 = arith.constant 496 : i32
    %100 = tpu.dynamic_rotate %79 by %c496_i32_78 dim 1 : vector<16x512xf32>, i32 -> vector<16x512xf32>
    %101 = arith.truncf %100 : vector<16x512xf32> to vector<16x512xbf16>
    %c112_79 = arith.constant 112 : index
    %c0_80 = arith.constant 0 : index
    %102 = vector.load %arg10[%c112_79, %c0_80] : memref<144x512xbf16, #tpu.memory_space<vmem>>, vector<16x512xbf16>
    tpu.vector_store %arg10[%c112_79, %c0_80], %101 {strides = array<i32>} : memref<144x512xbf16, #tpu.memory_space<vmem>>, vector<16x512xbf16>,
    %c495_i32_81 = arith.constant 495 : i32
    %103 = tpu.dynamic_rotate %79 by %c495_i32_81 dim 1 : vector<16x512xf32>, i32 -> vector<16x512xf32>
    %104 = arith.truncf %103 : vector<16x512xf32> to vector<16x512xbf16>
    %c128_82 = arith.constant 128 : index
    %c0_83 = arith.constant 0 : index
    %105 = vector.load %arg10[%c128_82, %c0_83] : memref<144x512xbf16, #tpu.memory_space<vmem>>, vector<16x512xbf16>
    tpu.vector_store %arg10[%c128_82, %c0_83], %104 {strides = array<i32>} : memref<144x512xbf16, #tpu.memory_space<vmem>>, vector<16x512xbf16>,
    %c2 = arith.constant 2 : index
    %c0_84 = arith.constant 0 : index
    %c0_85 = arith.constant 0 : index
    %106 = vector.load %arg3[%c2, %c0_84, %c0_85] : memref<4x16x144xbf16, #tpu.memory_space<vmem>>, vector<1x16x144xbf16>
    %107 = vector.shape_cast %106 : vector<1x16x144xbf16> to vector<16x144xbf16>
    %c0_86 = arith.constant 0 : index
    %c0_87 = arith.constant 0 : index
    %108 = vector.load %arg10[%c0_86, %c0_87] : memref<144x512xbf16, #tpu.memory_space<vmem>>, vector<144x512xbf16>
    %cst_88 = arith.constant dense<0.000000e+00> : vector<16x512xf32>
    %109 = tpu.matmul %107, %108, %cst_88 {dimension_numbers = #tpu.dot_dimension_numbers<[1], [0], [0], [1], [0, 0, 1, 1], [], []>} : vector<16x144xbf16>, vector<144x512xbf16>, vector<16x512xf32> -> vector<16x512xf32>
    %c2_89 = arith.constant 2 : index
    %c0_90 = arith.constant 0 : index
    %c0_91 = arith.constant 0 : index
    %110 = vector.load %arg4[%c2_89, %c0_90, %c0_91] : memref<4x16x1xf32, #tpu.memory_space<vmem>>, vector<1x16x1xf32>
    %111 = vector.shape_cast %110 : vector<1x16x1xf32> to vector<16x1xf32>
    %112 = vector.broadcast %111 : vector<16x1xf32> to vector<16x512xf32>
    %113 = arith.addf %109, %112 : vector<16x512xf32>
    %cst_92 = arith.constant 0.000000e+00 : f32
    %114 = vector.broadcast %cst_92 : f32 to vector<16x512xf32>
    %115 = arith.maximumf %113, %114 : vector<16x512xf32>
    %116 = vector.broadcast %0 : vector<1x512xf32> to vector<16x512xf32>
    %117 = arith.mulf %115, %116 : vector<16x512xf32>
    %c17_i32_93 = arith.constant 17 : i32
    %118 = tpu.dynamic_rotate %117 by %c17_i32_93 dim 1 : vector<16x512xf32>, i32 -> vector<16x512xf32>
    %119 = arith.truncf %118 : vector<16x512xf32> to vector<16x512xbf16>
    %c0_94 = arith.constant 0 : index
    %c0_95 = arith.constant 0 : index
    %120 = vector.load %arg10[%c0_94, %c0_95] : memref<144x512xbf16, #tpu.memory_space<vmem>>, vector<16x512xbf16>
    tpu.vector_store %arg10[%c0_94, %c0_95], %119 {strides = array<i32>} : memref<144x512xbf16, #tpu.memory_space<vmem>>, vector<16x512xbf16>,
    %c16_i32_96 = arith.constant 16 : i32
    %121 = tpu.dynamic_rotate %117 by %c16_i32_96 dim 1 : vector<16x512xf32>, i32 -> vector<16x512xf32>
    %122 = arith.truncf %121 : vector<16x512xf32> to vector<16x512xbf16>
    %c16_97 = arith.constant 16 : index
    %c0_98 = arith.constant 0 : index
    %123 = vector.load %arg10[%c16_97, %c0_98] : memref<144x512xbf16, #tpu.memory_space<vmem>>, vector<16x512xbf16>
    tpu.vector_store %arg10[%c16_97, %c0_98], %122 {strides = array<i32>} : memref<144x512xbf16, #tpu.memory_space<vmem>>, vector<16x512xbf16>,
    %c15_i32_99 = arith.constant 15 : i32
    %124 = tpu.dynamic_rotate %117 by %c15_i32_99 dim 1 : vector<16x512xf32>, i32 -> vector<16x512xf32>
    %125 = arith.truncf %124 : vector<16x512xf32> to vector<16x512xbf16>
    %c32_100 = arith.constant 32 : index
    %c0_101 = arith.constant 0 : index
    %126 = vector.load %arg10[%c32_100, %c0_101] : memref<144x512xbf16, #tpu.memory_space<vmem>>, vector<16x512xbf16>
    tpu.vector_store %arg10[%c32_100, %c0_101], %125 {strides = array<i32>} : memref<144x512xbf16, #tpu.memory_space<vmem>>, vector<16x512xbf16>,
    %c1_i32_102 = arith.constant 1 : i32
    %127 = tpu.dynamic_rotate %117 by %c1_i32_102 dim 1 : vector<16x512xf32>, i32 -> vector<16x512xf32>
    %128 = arith.truncf %127 : vector<16x512xf32> to vector<16x512xbf16>
    %c48_103 = arith.constant 48 : index
    %c0_104 = arith.constant 0 : index
    %129 = vector.load %arg10[%c48_103, %c0_104] : memref<144x512xbf16, #tpu.memory_space<vmem>>, vector<16x512xbf16>
    tpu.vector_store %arg10[%c48_103, %c0_104], %128 {strides = array<i32>} : memref<144x512xbf16, #tpu.memory_space<vmem>>, vector<16x512xbf16>,
    %130 = arith.truncf %117 : vector<16x512xf32> to vector<16x512xbf16>
    %c64_105 = arith.constant 64 : index
    %c0_106 = arith.constant 0 : index
    %131 = vector.load %arg10[%c64_105, %c0_106] : memref<144x512xbf16, #tpu.memory_space<vmem>>, vector<16x512xbf16>
    tpu.vector_store %arg10[%c64_105, %c0_106], %130 {strides = array<i32>} : memref<144x512xbf16, #tpu.memory_space<vmem>>, vector<16x512xbf16>,
    %c511_i32_107 = arith.constant 511 : i32
    %132 = tpu.dynamic_rotate %117 by %c511_i32_107 dim 1 : vector<16x512xf32>, i32 -> vector<16x512xf32>
    %133 = arith.truncf %132 : vector<16x512xf32> to vector<16x512xbf16>
    %c80_108 = arith.constant 80 : index
    %c0_109 = arith.constant 0 : index
    %134 = vector.load %arg10[%c80_108, %c0_109] : memref<144x512xbf16, #tpu.memory_space<vmem>>, vector<16x512xbf16>
    tpu.vector_store %arg10[%c80_108, %c0_109], %133 {strides = array<i32>} : memref<144x512xbf16, #tpu.memory_space<vmem>>, vector<16x512xbf16>,
    %c497_i32_110 = arith.constant 497 : i32
    %135 = tpu.dynamic_rotate %117 by %c497_i32_110 dim 1 : vector<16x512xf32>, i32 -> vector<16x512xf32>
    %136 = arith.truncf %135 : vector<16x512xf32> to vector<16x512xbf16>
    %c96_111 = arith.constant 96 : index
    %c0_112 = arith.constant 0 : index
    %137 = vector.load %arg10[%c96_111, %c0_112] : memref<144x512xbf16, #tpu.memory_space<vmem>>, vector<16x512xbf16>
    tpu.vector_store %arg10[%c96_111, %c0_112], %136 {strides = array<i32>} : memref<144x512xbf16, #tpu.memory_space<vmem>>, vector<16x512xbf16>,
    %c496_i32_113 = arith.constant 496 : i32
    %138 = tpu.dynamic_rotate %117 by %c496_i32_113 dim 1 : vector<16x512xf32>, i32 -> vector<16x512xf32>
    %139 = arith.truncf %138 : vector<16x512xf32> to vector<16x512xbf16>
    %c112_114 = arith.constant 112 : index
    %c0_115 = arith.constant 0 : index
    %140 = vector.load %arg10[%c112_114, %c0_115] : memref<144x512xbf16, #tpu.memory_space<vmem>>, vector<16x512xbf16>
    tpu.vector_store %arg10[%c112_114, %c0_115], %139 {strides = array<i32>} : memref<144x512xbf16, #tpu.memory_space<vmem>>, vector<16x512xbf16>,
    %c495_i32_116 = arith.constant 495 : i32
    %141 = tpu.dynamic_rotate %117 by %c495_i32_116 dim 1 : vector<16x512xf32>, i32 -> vector<16x512xf32>
    %142 = arith.truncf %141 : vector<16x512xf32> to vector<16x512xbf16>
    %c128_117 = arith.constant 128 : index
    %c0_118 = arith.constant 0 : index
    %143 = vector.load %arg10[%c128_117, %c0_118] : memref<144x512xbf16, #tpu.memory_space<vmem>>, vector<16x512xbf16>
    tpu.vector_store %arg10[%c128_117, %c0_118], %142 {strides = array<i32>} : memref<144x512xbf16, #tpu.memory_space<vmem>>, vector<16x512xbf16>,
    %c3 = arith.constant 3 : index
    %c0_119 = arith.constant 0 : index
    %c0_120 = arith.constant 0 : index
    %144 = vector.load %arg3[%c3, %c0_119, %c0_120] : memref<4x16x144xbf16, #tpu.memory_space<vmem>>, vector<1x16x144xbf16>
    %145 = vector.shape_cast %144 : vector<1x16x144xbf16> to vector<16x144xbf16>
    %c0_121 = arith.constant 0 : index
    %c0_122 = arith.constant 0 : index
    %146 = vector.load %arg10[%c0_121, %c0_122] : memref<144x512xbf16, #tpu.memory_space<vmem>>, vector<144x512xbf16>
    %cst_123 = arith.constant dense<0.000000e+00> : vector<16x512xf32>
    %147 = tpu.matmul %145, %146, %cst_123 {dimension_numbers = #tpu.dot_dimension_numbers<[1], [0], [0], [1], [0, 0, 1, 1], [], []>} : vector<16x144xbf16>, vector<144x512xbf16>, vector<16x512xf32> -> vector<16x512xf32>
    %c3_124 = arith.constant 3 : index
    %c0_125 = arith.constant 0 : index
    %c0_126 = arith.constant 0 : index
    %148 = vector.load %arg4[%c3_124, %c0_125, %c0_126] : memref<4x16x1xf32, #tpu.memory_space<vmem>>, vector<1x16x1xf32>
    %149 = vector.shape_cast %148 : vector<1x16x1xf32> to vector<16x1xf32>
    %150 = vector.broadcast %149 : vector<16x1xf32> to vector<16x512xf32>
    %151 = arith.addf %147, %150 : vector<16x512xf32>
    %cst_127 = arith.constant 0.000000e+00 : f32
    %152 = vector.broadcast %cst_127 : f32 to vector<16x512xf32>
    %153 = arith.maximumf %151, %152 : vector<16x512xf32>
    %154 = vector.broadcast %0 : vector<1x512xf32> to vector<16x512xf32>
    %155 = arith.mulf %153, %154 : vector<16x512xf32>
    %c0_128 = arith.constant 0 : index
    %c0_129 = arith.constant 0 : index
    %156 = vector.load %arg5[%c0_128, %c0_129] : memref<64x16xbf16, #tpu.memory_space<vmem>>, vector<64x16xbf16>
    %157 = arith.truncf %155 : vector<16x512xf32> to vector<16x512xbf16>
    %cst_130 = arith.constant dense<0.000000e+00> : vector<64x512xf32>
    %158 = tpu.matmul %156, %157, %cst_130 {dimension_numbers = #tpu.dot_dimension_numbers<[1], [0], [0], [1], [0, 0, 1, 1], [], []>} : vector<64x16xbf16>, vector<16x512xbf16>, vector<64x512xf32> -> vector<64x512xf32>
    %c0_131 = arith.constant 0 : index
    %c0_132 = arith.constant 0 : index
    %159 = vector.load %arg6[%c0_131, %c0_132] : memref<64x1xf32, #tpu.memory_space<vmem>>, vector<64x1xf32>
    %160 = vector.broadcast %159 : vector<64x1xf32> to vector<64x512xf32>
    %161 = arith.addf %158, %160 : vector<64x512xf32>
    %cst_133 = arith.constant 0.000000e+00 : f32
    %162 = vector.broadcast %cst_133 : f32 to vector<64x512xf32>
    %163 = arith.maximumf %161, %162 : vector<64x512xf32>
    %164 = arith.truncf %163 : vector<64x512xf32> to vector<64x512xbf16>
    %c0_134 = arith.constant 0 : index
    %c0_135 = arith.constant 0 : index
    %165 = vector.load %arg7[%c0_134, %c0_135] : memref<4x16xbf16, #tpu.memory_space<vmem>>, vector<4x16xbf16>
    %166 = vector.extract_strided_slice %164 {offsets = [0, 0], sizes = [16, 512], strides = [1, 1]} : vector<64x512xbf16> to vector<16x512xbf16>
    %cst_136 = arith.constant dense<0.000000e+00> : vector<4x512xf32>
    %167 = tpu.matmul %165, %166, %cst_136 {dimension_numbers = #tpu.dot_dimension_numbers<[1], [0], [0], [1], [0, 0, 1, 1], [], []>} : vector<4x16xbf16>, vector<16x512xbf16>, vector<4x512xf32> -> vector<4x512xf32>
    %c0_137 = arith.constant 0 : index
    %c0_138 = arith.constant 0 : index
    %168 = vector.load %arg8[%c0_137, %c0_138] : memref<4x1xf32, #tpu.memory_space<vmem>>, vector<4x1xf32>
    %169 = vector.broadcast %168 : vector<4x1xf32> to vector<4x512xf32>
    %170 = arith.addf %167, %169 : vector<4x512xf32>
    %171 = arith.truncf %170 : vector<4x512xf32> to vector<4x512xbf16>
    %c0_139 = arith.constant 0 : index
    %c0_140 = arith.constant 0 : index
    %c0_141 = arith.constant 0 : index
    %c0_142 = arith.constant 0 : index
    %172 = vector.load %arg9[%c0_139, %c0_140, %c0_141, %c0_142] : memref<1x4x4x512xbf16, #tpu.memory_space<vmem>>, vector<1x1x4x512xbf16>
    %173 = vector.shape_cast %172 : vector<1x1x4x512xbf16> to vector<4x512xbf16>
    %174 = vector.shape_cast %171 : vector<4x512xbf16> to vector<1x1x4x512xbf16>
    tpu.vector_store %arg9[%c0_139, %c0_140, %c0_141, %c0_142], %174 {strides = array<i32>} : memref<1x4x4x512xbf16, #tpu.memory_space<vmem>>, vector<1x1x4x512xbf16>,
    %c0_143 = arith.constant 0 : index
    %c0_144 = arith.constant 0 : index
    %175 = vector.load %arg7[%c0_143, %c0_144] : memref<4x16xbf16, #tpu.memory_space<vmem>>, vector<4x16xbf16>
    %176 = vector.extract_strided_slice %164 {offsets = [16, 0], sizes = [16, 512], strides = [1, 1]} : vector<64x512xbf16> to vector<16x512xbf16>
    %cst_145 = arith.constant dense<0.000000e+00> : vector<4x512xf32>
    %177 = tpu.matmul %175, %176, %cst_145 {dimension_numbers = #tpu.dot_dimension_numbers<[1], [0], [0], [1], [0, 0, 1, 1], [], []>} : vector<4x16xbf16>, vector<16x512xbf16>, vector<4x512xf32> -> vector<4x512xf32>
    %c0_146 = arith.constant 0 : index
    %c0_147 = arith.constant 0 : index
    %178 = vector.load %arg8[%c0_146, %c0_147] : memref<4x1xf32, #tpu.memory_space<vmem>>, vector<4x1xf32>
    %179 = vector.broadcast %178 : vector<4x1xf32> to vector<4x512xf32>
    %180 = arith.addf %177, %179 : vector<4x512xf32>
    %181 = arith.truncf %180 : vector<4x512xf32> to vector<4x512xbf16>
    %c0_148 = arith.constant 0 : index
    %c1_149 = arith.constant 1 : index
    %c0_150 = arith.constant 0 : index
    %c0_151 = arith.constant 0 : index
    %182 = vector.load %arg9[%c0_148, %c1_149, %c0_150, %c0_151] : memref<1x4x4x512xbf16, #tpu.memory_space<vmem>>, vector<1x1x4x512xbf16>
    %183 = vector.shape_cast %182 : vector<1x1x4x512xbf16> to vector<4x512xbf16>
    %184 = vector.shape_cast %181 : vector<4x512xbf16> to vector<1x1x4x512xbf16>
    tpu.vector_store %arg9[%c0_148, %c1_149, %c0_150, %c0_151], %184 {strides = array<i32>} : memref<1x4x4x512xbf16, #tpu.memory_space<vmem>>, vector<1x1x4x512xbf16>,
    %c0_152 = arith.constant 0 : index
    %c0_153 = arith.constant 0 : index
    %185 = vector.load %arg7[%c0_152, %c0_153] : memref<4x16xbf16, #tpu.memory_space<vmem>>, vector<4x16xbf16>
    %186 = vector.extract_strided_slice %164 {offsets = [32, 0], sizes = [16, 512], strides = [1, 1]} : vector<64x512xbf16> to vector<16x512xbf16>
    %cst_154 = arith.constant dense<0.000000e+00> : vector<4x512xf32>
    %187 = tpu.matmul %185, %186, %cst_154 {dimension_numbers = #tpu.dot_dimension_numbers<[1], [0], [0], [1], [0, 0, 1, 1], [], []>} : vector<4x16xbf16>, vector<16x512xbf16>, vector<4x512xf32> -> vector<4x512xf32>
    %c0_155 = arith.constant 0 : index
    %c0_156 = arith.constant 0 : index
    %188 = vector.load %arg8[%c0_155, %c0_156] : memref<4x1xf32, #tpu.memory_space<vmem>>, vector<4x1xf32>
    %189 = vector.broadcast %188 : vector<4x1xf32> to vector<4x512xf32>
    %190 = arith.addf %187, %189 : vector<4x512xf32>
    %191 = arith.truncf %190 : vector<4x512xf32> to vector<4x512xbf16>
    %c0_157 = arith.constant 0 : index
    %c2_158 = arith.constant 2 : index
    %c0_159 = arith.constant 0 : index
    %c0_160 = arith.constant 0 : index
    %192 = vector.load %arg9[%c0_157, %c2_158, %c0_159, %c0_160] : memref<1x4x4x512xbf16, #tpu.memory_space<vmem>>, vector<1x1x4x512xbf16>
    %193 = vector.shape_cast %192 : vector<1x1x4x512xbf16> to vector<4x512xbf16>
    %194 = vector.shape_cast %191 : vector<4x512xbf16> to vector<1x1x4x512xbf16>
    tpu.vector_store %arg9[%c0_157, %c2_158, %c0_159, %c0_160], %194 {strides = array<i32>} : memref<1x4x4x512xbf16, #tpu.memory_space<vmem>>, vector<1x1x4x512xbf16>,
    %c0_161 = arith.constant 0 : index
    %c0_162 = arith.constant 0 : index
    %195 = vector.load %arg7[%c0_161, %c0_162] : memref<4x16xbf16, #tpu.memory_space<vmem>>, vector<4x16xbf16>
    %196 = vector.extract_strided_slice %164 {offsets = [48, 0], sizes = [16, 512], strides = [1, 1]} : vector<64x512xbf16> to vector<16x512xbf16>
    %cst_163 = arith.constant dense<0.000000e+00> : vector<4x512xf32>
    %197 = tpu.matmul %195, %196, %cst_163 {dimension_numbers = #tpu.dot_dimension_numbers<[1], [0], [0], [1], [0, 0, 1, 1], [], []>} : vector<4x16xbf16>, vector<16x512xbf16>, vector<4x512xf32> -> vector<4x512xf32>
    %c0_164 = arith.constant 0 : index
    %c0_165 = arith.constant 0 : index
    %198 = vector.load %arg8[%c0_164, %c0_165] : memref<4x1xf32, #tpu.memory_space<vmem>>, vector<4x1xf32>
    %199 = vector.broadcast %198 : vector<4x1xf32> to vector<4x512xf32>
    %200 = arith.addf %197, %199 : vector<4x512xf32>
    %201 = arith.truncf %200 : vector<4x512xf32> to vector<4x512xbf16>
    %c0_166 = arith.constant 0 : index
    %c3_167 = arith.constant 3 : index
    %c0_168 = arith.constant 0 : index
    %c0_169 = arith.constant 0 : index
    %202 = vector.load %arg9[%c0_166, %c3_167, %c0_168, %c0_169] : memref<1x4x4x512xbf16, #tpu.memory_space<vmem>>, vector<1x1x4x512xbf16>
    %203 = vector.shape_cast %202 : vector<1x1x4x512xbf16> to vector<4x512xbf16>
    %204 = vector.shape_cast %201 : vector<4x512xbf16> to vector<1x1x4x512xbf16>
    tpu.vector_store %arg9[%c0_166, %c3_167, %c0_168, %c0_169], %204 {strides = array<i32>} : memref<1x4x4x512xbf16, #tpu.memory_space<vmem>>, vector<1x1x4x512xbf16>,
    return
  }
  func.func @transform_0(%arg0: i32) -> (i32, i32, i32) {
    %c0_i32 = arith.constant 0 : i32
    %c0_i32_0 = arith.constant 0 : i32
    %c0_i32_1 = arith.constant 0 : i32
    return %arg0, %c0_i32, %c0_i32_0 : i32, i32, i32
  }
  func.func @transform_1(%arg0: i32) -> (i32, i32) {
    %c0_i32 = arith.constant 0 : i32
    %c0_i32_0 = arith.constant 0 : i32
    %c0_i32_1 = arith.constant 0 : i32
    return %c0_i32, %c0_i32_0 : i32, i32
  }
  func.func @transform_2(%arg0: i32) -> (i32, i32, i32) {
    %c0_i32 = arith.constant 0 : i32
    %c0_i32_0 = arith.constant 0 : i32
    %c0_i32_1 = arith.constant 0 : i32
    %c0_i32_2 = arith.constant 0 : i32
    return %c0_i32, %c0_i32_0, %c0_i32_1 : i32, i32, i32
  }
  func.func @transform_3(%arg0: i32) -> (i32, i32, i32) {
    %c0_i32 = arith.constant 0 : i32
    %c0_i32_0 = arith.constant 0 : i32
    %c0_i32_1 = arith.constant 0 : i32
    %c0_i32_2 = arith.constant 0 : i32
    return %c0_i32, %c0_i32_0, %c0_i32_1 : i32, i32, i32
  }
  func.func @transform_4(%arg0: i32) -> (i32, i32) {
    %c0_i32 = arith.constant 0 : i32
    %c0_i32_0 = arith.constant 0 : i32
    %c0_i32_1 = arith.constant 0 : i32
    return %c0_i32, %c0_i32_0 : i32, i32
  }
  func.func @transform_5(%arg0: i32) -> (i32, i32) {
    %c0_i32 = arith.constant 0 : i32
    %c0_i32_0 = arith.constant 0 : i32
    %c0_i32_1 = arith.constant 0 : i32
    return %c0_i32, %c0_i32_0 : i32, i32
  }
  func.func @transform_6(%arg0: i32) -> (i32, i32) {
    %c0_i32 = arith.constant 0 : i32
    %c0_i32_0 = arith.constant 0 : i32
    %c0_i32_1 = arith.constant 0 : i32
    return %c0_i32, %c0_i32_0 : i32, i32
  }
  func.func @transform_7(%arg0: i32) -> (i32, i32) {
    %c0_i32 = arith.constant 0 : i32
    %c0_i32_0 = arith.constant 0 : i32
    %c0_i32_1 = arith.constant 0 : i32
    return %c0_i32, %c0_i32_0 : i32, i32
  }
  func.func @transform_8(%arg0: i32) -> (i32, i32, i32, i32) {
    %c0_i32 = arith.constant 0 : i32
    %c0_i32_0 = arith.constant 0 : i32
    %c0_i32_1 = arith.constant 0 : i32
    %c0_i32_2 = arith.constant 0 : i32
    return %arg0, %c0_i32, %c0_i32_0, %c0_i32_1 : i32, i32, i32, i32
  }
}

</mosaic_0001>

<llo_original>
// kernel: tpu_custom_call.1
$region0: #{tpu_custom_call.1}
  #allocation0 [shape = 'u32[]', space=smem, size = 0x4, offset = 0x4, fixed_abs, tag = 'smem constant byte address 0x4 - core index']
  #allocation1 [shape = 'u32[144,128]{1,0:T(1,128)}', space=vmem, size = 0x12000, scoped, tag = 'internal scratch']
  #allocation2 [shape = 'bf16[144,512]{1,0:T(16,128)(2,1)}', space=vmem, size = 0x24000, scoped, tag = 'scratch operand']
  %s0 = inlined_call_operand.vmem [shape: bf16[2,16,512], index: 0, kind: input, shape index: {}]
  %s1 = inlined_call_operand.vmem [shape: f32[1,512], index: 1, kind: input, shape index: {}]
  %s2 = inlined_call_operand.vmem [shape: bf16[4,16,144], index: 2, kind: input, shape index: {}]
  %s3 = inlined_call_operand.vmem [shape: f32[4,16,1], index: 3, kind: input, shape index: {}]
  %s4 = inlined_call_operand.vmem [shape: bf16[64,16], index: 4, kind: input, shape index: {}]
  %s5 = inlined_call_operand.vmem [shape: f32[64,1], index: 5, kind: input, shape index: {}]
  %s6 = inlined_call_operand.vmem [shape: bf16[4,16], index: 6, kind: input, shape index: {}]
  %s7 = inlined_call_operand.vmem [shape: f32[4,1], index: 7, kind: input, shape index: {}]
  %s8 = inlined_call_operand.hbm [shape: bf16[2,4,4,512], index: 8, kind: output, shape index: {}]
  %s9 = sld [smem:[#allocation0]]
  $region65: #{tpu_custom_call.1} parent=0
    _
  %s11 = ssub.s32 1, %s9
  %s12 = scalar_select 0, %s11, %s9
  $region1: #{tpu_custom_call.1} parent=0
    #allocation3 [shape = 'u8[32768]{0}', space=vmem, size = 0x8000, scoped, tag = 'output window, operand 0']
    #allocation4 [shape = 's32[2]{0}', space=sflag, size = 0x8, scoped, tag = 'scoped memory for tpu_custom_call.1']
    %13 = vsyncpa [#allocation4], 0
    %s14 = scalar_lea.sflag [#allocation4], 1
    %15 = vsyncpa %s14, 0
    loop: start=0, step=1, limit=4
    $region2: #{tpu_custom_call.1} parent=1 // loop_pre_header
      _
    $region3: #{tpu_custom_call.1} parent=1 // loop_header
      %s17 = sphi 0, %s21
      %p18 = scmp.ge.s32.totalorder %s17, 4
      %s27 = sphi 0, %s29
      %s30 = sphi 0, %s27
      %s31 = sphi 0, %s30
      %s47 = sphi 0, %s31
      %s51 = sphi 0, %s51
      %s53 = sphi 0, %s51
      %s54 = sphi 0, %s53
      %s68 = sphi 0, %s54
      %s72 = sphi 0, %s72
      %s74 = sphi 0, %s72
      %s75 = sphi 0, %s74
      %s89 = sphi 0, %s75
      %s93 = sphi 0, %s93
      %s95 = sphi 0, %s93
      %s96 = sphi 0, %s95
      %s110 = sphi 0, %s96
      %s114 = sphi 0, %s114
      %s116 = sphi 0, %s114
      %s117 = sphi 0, %s116
      %s131 = sphi 0, %s117
      %s135 = sphi 0, %s135
      %s137 = sphi 0, %s135
      %s138 = sphi 0, %s137
      %s152 = sphi 0, %s138
      %s156 = sphi 0, %s156
      %s158 = sphi 0, %s156
      %s159 = sphi 0, %s158
      %s173 = sphi 0, %s159
      %s177 = sphi 0, %s177
      %s179 = sphi 0, %s177
      %s180 = sphi 0, %s179
      %s194 = sphi 0, %s180
      %s200 = sphi 0, %s202
      %s203 = sphi 0, %s200
      %s204 = sphi 0, %s203
      %s220 = sphi 0, %s204
    $region4: #{tpu_custom_call.1} parent=1 // loop_header_branch
      %20 = sbr.rel (%p18) target = $region8
    $region5: #{tpu_custom_call.1} parent=1 // loop_body
      %s22 = ssub.s32 %s17, 1
      %s23 = ssub.s32 %s17, 2
      %s24 = sadd.s32 %s17, 1
      %s25 = ssub.s32 %s17, %s24
      %p26 = scmp.eq.s32.totalorder %s25, 0
      %s28 = sadd.s32 %s27, 1
      %s29 = scalar_select %p26, %s27, %s28
      %p32 = pneg %p26
      %p33 = scmp.eq.s32.totalorder %s17, 1
      %p34 = por %p32, %p33
      %p35 = scmp.ne.s32.totalorder %s27, %s30
      %p36 = scmp.eq.s32.totalorder %s17, 0
      %p37 = por %p35, %p36
      %p38 = scmp.ne.s32.totalorder %s27, %s30
      %p39 = scmp.eq.s32.totalorder %s22, 1
      %p40 = por %p38, %p39
      %p41 = scmp.ne.s32.totalorder %s30, %s31
      %p42 = scmp.eq.s32.totalorder %s22, 0
      %p43 = por %p41, %p42
      %p44 = scmp.ne.s32.totalorder %s30, %s31
      %p45 = scmp.eq.s32.totalorder %s23, 1
      %p46 = por %p44, %p45
      %p48 = scmp.ne.s32.totalorder %s31, %s47
      %p49 = scmp.eq.s32.totalorder %s23, 0
      %p50 = por %p48, %p49
      %s52 = sadd.s32 %s51, 1
      %p55 = scmp.eq.s32.totalorder %s17, 1
      %p56 = scmp.ne.s32.totalorder %s51, %s53
      %p57 = scmp.eq.s32.totalorder %s17, 0
      %p58 = por %p56, %p57
      %p59 = scmp.ne.s32.totalorder %s51, %s53
      %p60 = scmp.eq.s32.totalorder %s22, 1
      %p61 = por %p59, %p60
      %p62 = scmp.ne.s32.totalorder %s53, %s54
      %p63 = scmp.eq.s32.totalorder %s22, 0
      %p64 = por %p62, %p63
      %p65 = scmp.ne.s32.totalorder %s53, %s54
      %p66 = scmp.eq.s32.totalorder %s23, 1
      %p67 = por %p65, %p66
      %p69 = scmp.ne.s32.totalorder %s54, %s68
      %p70 = scmp.eq.s32.totalorder %s23, 0
      %p71 = por %p69, %p70
      %s73 = sadd.s32 %s72, 1
      %p76 = scmp.eq.s32.totalorder %s17, 1
      %p77 = scmp.ne.s32.totalorder %s72, %s74
      %p78 = scmp.eq.s32.totalorder %s17, 0
      %p79 = por %p77, %p78
      %p80 = scmp.ne.s32.totalorder %s72, %s74
      %p81 = scmp.eq.s32.totalorder %s22, 1
      %p82 = por %p80, %p81
      %p83 = scmp.ne.s32.totalorder %s74, %s75
      %p84 = scmp.eq.s32.totalorder %s22, 0
      %p85 = por %p83, %p84
      %p86 = scmp.ne.s32.totalorder %s74, %s75
      %p87 = scmp.eq.s32.totalorder %s23, 1
      %p88 = por %p86, %p87
      %p90 = scmp.ne.s32.totalorder %s75, %s89
      %p91 = scmp.eq.s32.totalorder %s23, 0
      %p92 = por %p90, %p91
      %s94 = sadd.s32 %s93, 1
      %p97 = scmp.eq.s32.totalorder %s17, 1
      %p98 = scmp.ne.s32.totalorder %s93, %s95
      %p99 = scmp.eq.s32.totalorder %s17, 0
      %p100 = por %p98, %p99
      %p101 = scmp.ne.s32.totalorder %s93, %s95
      %p102 = scmp.eq.s32.totalorder %s22, 1
      %p103 = por %p101, %p102
      %p104 = scmp.ne.s32.totalorder %s95, %s96
      %p105 = scmp.eq.s32.totalorder %s22, 0
      %p106 = por %p104, %p105
      %p107 = scmp.ne.s32.totalorder %s95, %s96
      %p108 = scmp.eq.s32.totalorder %s23, 1
      %p109 = por %p107, %p108
      %p111 = scmp.ne.s32.totalorder %s96, %s110
      %p112 = scmp.eq.s32.totalorder %s23, 0
      %p113 = por %p111, %p112
      %s115 = sadd.s32 %s114, 1
      %p118 = scmp.eq.s32.totalorder %s17, 1
      %p119 = scmp.ne.s32.totalorder %s114, %s116
      %p120 = scmp.eq.s32.totalorder %s17, 0
      %p121 = por %p119, %p120
      %p122 = scmp.ne.s32.totalorder %s114, %s116
      %p123 = scmp.eq.s32.totalorder %s22, 1
      %p124 = por %p122, %p123
      %p125 = scmp.ne.s32.totalorder %s116, %s117
      %p126 = scmp.eq.s32.totalorder %s22, 0
      %p127 = por %p125, %p126
      %p128 = scmp.ne.s32.totalorder %s116, %s117
      %p129 = scmp.eq.s32.totalorder %s23, 1
      %p130 = por %p128, %p129
      %p132 = scmp.ne.s32.totalorder %s117, %s131
      %p133 = scmp.eq.s32.totalorder %s23, 0
      %p134 = por %p132, %p133
      %s136 = sadd.s32 %s135, 1
      %p139 = scmp.eq.s32.totalorder %s17, 1
      %p140 = scmp.ne.s32.totalorder %s135, %s137
      %p141 = scmp.eq.s32.totalorder %s17, 0
      %p142 = por %p140, %p141
      %p143 = scmp.ne.s32.totalorder %s135, %s137
      %p144 = scmp.eq.s32.totalorder %s22, 1
      %p145 = por %p143, %p144
      %p146 = scmp.ne.s32.totalorder %s137, %s138
      %p147 = scmp.eq.s32.totalorder %s22, 0
      %p148 = por %p146, %p147
      %p149 = scmp.ne.s32.totalorder %s137, %s138
      %p150 = scmp.eq.s32.totalorder %s23, 1
      %p151 = por %p149, %p150
      %p153 = scmp.ne.s32.totalorder %s138, %s152
      %p154 = scmp.eq.s32.totalorder %s23, 0
      %p155 = por %p153, %p154
      %s157 = sadd.s32 %s156, 1
      %p160 = scmp.eq.s32.totalorder %s17, 1
      %p161 = scmp.ne.s32.totalorder %s156, %s158
      %p162 = scmp.eq.s32.totalorder %s17, 0
      %p163 = por %p161, %p162
      %p164 = scmp.ne.s32.totalorder %s156, %s158
      %p165 = scmp.eq.s32.totalorder %s22, 1
      %p166 = por %p164, %p165
      %p167 = scmp.ne.s32.totalorder %s158, %s159
      %p168 = scmp.eq.s32.totalorder %s22, 0
      %p169 = por %p167, %p168
      %p170 = scmp.ne.s32.totalorder %s158, %s159
      %p171 = scmp.eq.s32.totalorder %s23, 1
      %p172 = por %p170, %p171
      %p174 = scmp.ne.s32.totalorder %s159, %s173
      %p175 = scmp.eq.s32.totalorder %s23, 0
      %p176 = por %p174, %p175
      %s178 = sadd.s32 %s177, 1
      %p181 = scmp.eq.s32.totalorder %s17, 1
      %p182 = scmp.ne.s32.totalorder %s177, %s179
      %p183 = scmp.eq.s32.totalorder %s17, 0
      %p184 = por %p182, %p183
      %p185 = scmp.ne.s32.totalorder %s177, %s179
      %p186 = scmp.eq.s32.totalorder %s22, 1
      %p187 = por %p185, %p186
      %p188 = scmp.ne.s32.totalorder %s179, %s180
      %p189 = scmp.eq.s32.totalorder %s22, 0
      %p190 = por %p188, %p189
      %p191 = scmp.ne.s32.totalorder %s179, %s180
      %p192 = scmp.eq.s32.totalorder %s23, 1
      %p193 = por %p191, %p192
      %p195 = scmp.ne.s32.totalorder %s180, %s194
      %p196 = scmp.eq.s32.totalorder %s23, 0
      %p197 = por %p195, %p196
      %s198 = ssub.s32 %s17, %s24
      %p199 = scmp.eq.s32.totalorder %s198, 0
      %s201 = sadd.s32 %s200, 1
      %s202 = scalar_select %p199, %s200, %s201
      %p205 = pneg %p199
      %p206 = scmp.eq.s32.totalorder %s17, 1
      %p207 = por %p205, %p206
      %p208 = scmp.ne.s32.totalorder %s200, %s203
      %p209 = scmp.eq.s32.totalorder %s17, 0
      %p210 = por %p208, %p209
      %p211 = scmp.ne.s32.totalorder %s200, %s203
      %p212 = scmp.eq.s32.totalorder %s22, 1
      %p213 = por %p211, %p212
      %p214 = scmp.ne.s32.totalorder %s203, %s204
      %p215 = scmp.eq.s32.totalorder %s22, 0
      %p216 = por %p214, %p215
      %p217 = scmp.ne.s32.totalorder %s203, %s204
      %p218 = scmp.eq.s32.totalorder %s23, 1
      %p219 = por %p217, %p218
      %p221 = scmp.ne.s32.totalorder %s204, %s220
      %p222 = scmp.eq.s32.totalorder %s23, 0
      %p223 = por %p221, %p222
      %p224 = scmp.le.s32.totalorder 1, %s17
      %p225 = scmp.lt.s32.totalorder %s17, 3
      %p226 = pnand %p224, %p225
      %p227 = pneg %p226
      // Predicated region
      $region9: #{tpu_custom_call.1} parent=5 // pred_check
        _
      $region10: #{tpu_custom_call.1} parent=5 // pred_check_branch
        %229 = sbr.rel (%p226) target = $region12
      $region11: #{tpu_custom_call.1} parent=5 // pred_region
        %s230 = ssub.s32 %s17, 1
        // Predicated region
        $region13: #{tpu_custom_call.1} parent=11 // pred_check
          %p231 = pneg %p64
        $region14: #{tpu_custom_call.1} parent=11 // pred_check_branch
          %233 = sbr.rel (%p231) target = $region16
        $region15: #{tpu_custom_call.1} parent=11 // pred_region
          _
        $region16: #{tpu_custom_call.1} parent=11 // pred_fallthru
          _
        // Predicated region
        $region17: #{tpu_custom_call.1} parent=11 // pred_check
          %p234 = pneg %p85
        $region18: #{tpu_custom_call.1} parent=11 // pred_check_branch
          %236 = sbr.rel (%p234) target = $region20
        $region19: #{tpu_custom_call.1} parent=11 // pred_region
          _
        $region20: #{tpu_custom_call.1} parent=11 // pred_fallthru
          _
        // Predicated region
        $region21: #{tpu_custom_call.1} parent=11 // pred_check
          %p237 = pneg %p106
        $region22: #{tpu_custom_call.1} parent=11 // pred_check_branch
          %239 = sbr.rel (%p237) target = $region24
        $region23: #{tpu_custom_call.1} parent=11 // pred_region
          _
        $region24: #{tpu_custom_call.1} parent=11 // pred_fallthru
          _
        // Predicated region
        $region25: #{tpu_custom_call.1} parent=11 // pred_check
          %p240 = pneg %p127
        $region26: #{tpu_custom_call.1} parent=11 // pred_check_branch
          %242 = sbr.rel (%p240) target = $region28
        $region27: #{tpu_custom_call.1} parent=11 // pred_region
          _
        $region28: #{tpu_custom_call.1} parent=11 // pred_fallthru
          _
        // Predicated region
        $region29: #{tpu_custom_call.1} parent=11 // pred_check
          %p243 = pneg %p148
        $region30: #{tpu_custom_call.1} parent=11 // pred_check_branch
          %245 = sbr.rel (%p243) target = $region32
        $region31: #{tpu_custom_call.1} parent=11 // pred_region
          _
        $region32: #{tpu_custom_call.1} parent=11 // pred_fallthru
          _
        // Predicated region
        $region33: #{tpu_custom_call.1} parent=11 // pred_check
          %p246 = pneg %p169
        $region34: #{tpu_custom_call.1} parent=11 // pred_check_branch
          %248 = sbr.rel (%p246) target = $region36
        $region35: #{tpu_custom_call.1} parent=11 // pred_region
          _
        $region36: #{tpu_custom_call.1} parent=11 // pred_fallthru
          _
        // Predicated region
        $region37: #{tpu_custom_call.1} parent=11 // pred_check
          %p249 = pneg %p190
        $region38: #{tpu_custom_call.1} parent=11 // pred_check_branch
          %251 = sbr.rel (%p249) target = $region40
        $region39: #{tpu_custom_call.1} parent=11 // pred_region
          _
        $region40: #{tpu_custom_call.1} parent=11 // pred_fallthru
          _
      $region12: #{tpu_custom_call.1} parent=5 // pred_fallthru
        _
      %p252 = scmp.lt.s32.totalorder %s17, 2
      // Predicated region
      $region41: #{tpu_custom_call.1} parent=5 // pred_check
        %p253 = pneg %p252
      $region42: #{tpu_custom_call.1} parent=5 // pred_check_branch
        %255 = sbr.rel (%p253) target = $region44
      $region43: #{tpu_custom_call.1} parent=5 // pred_region
        // Predicated region
        $region45: #{tpu_custom_call.1} parent=43 // pred_check
          %p256 = pneg %p37
        $region46: #{tpu_custom_call.1} parent=43 // pred_check_branch
          %258 = sbr.rel (%p256) target = $region48
        $region47: #{tpu_custom_call.1} parent=43 // pred_region
          %p259 = scmp.lt.s32.totalorder %s17, 1
          %s260 = scalar_select %p259, %s17, 1
          %s261 = smul.addr %s260, 8
          %s262 = smul.addr %s261, 4
          %s263 = scalar_lea.vmem %s0, %s262
        $region48: #{tpu_custom_call.1} parent=43 // pred_fallthru
          _
      $region44: #{tpu_custom_call.1} parent=5 // pred_fallthru
        _
      %p264 = scmp.le.s32.totalorder 1, %s17
      %p265 = scmp.lt.s32.totalorder %s17, 3
      %p266 = pnand %p264, %p265
      %p267 = pneg %p266
      // Predicated region
      $region49: #{tpu_custom_call.1} parent=5 // pred_check
        _
      $region50: #{tpu_custom_call.1} parent=5 // pred_check_branch
        %269 = sbr.rel (%p266) target = $region52
      $region51: #{tpu_custom_call.1} parent=5 // pred_region
        %s270 = ssub.s32 %s17, 1
        %p271 = scmp.lt.s32.totalorder %s22, 1
        %s272 = scalar_select %p271, %s22, 1
        %s273 = smul.addr %s272, 8
        %s274 = smul.addr %s273, 4
        %s275 = scalar_lea.vmem %s0, %s274
        %p276 = pneg %p43
        %p277 = pneg %p40
        %p278 = pneg %p64
        %p279 = pneg %p61
        %p280 = pneg %p85
        %p281 = pneg %p82
        %p282 = pneg %p106
        %p283 = pneg %p103
        %p284 = pneg %p127
        %p285 = pneg %p124
        %p286 = pneg %p148
        %p287 = pneg %p145
        %p288 = pneg %p169
        %p289 = pneg %p166
        %p290 = pneg %p190
        %p291 = pneg %p187
        %p292 = pneg %p216
        %p293 = pneg %p213
        %s294 = sand.u32 %s203, 1
        %s295 = scalar_lea.sflag [#allocation4], %s294
        %s296 = sand.u32 %s203, 1
        %s297 = smul.addr %s296, 32
        %s298 = scalar_lea.vmem [#allocation3], %s297
        %p299 = scmp.lt.s32.totalorder %s22, 1
        %s300 = scalar_select %p299, %s22, 1
        %s301 = smul.addr %s300, 8
        %s302 = smul.addr %s301, 4
        %s303 = scalar_lea.vmem %s0, %s302
        %v305 = vld [vmem:[%s1] sm:$0xf]
        %v306 = vld [vmem:[%s303] sm:$0xff]
        %v307 = vld [vmem:[%s303 + $0x8] sm:$0xff]
        %v308 = vld [vmem:[%s303 + $0x10] sm:$0xff]
        %v309 = vld [vmem:[%s303 + $0x18] sm:$0xff]
        %v310 = vunpack.c.l.bf16 %v306
        %v311 = vunpack.c.h.bf16 %v306
        %v312 = vunpack.c.l.bf16 %v307
        %v313 = vunpack.c.h.bf16 %v307
        %v314 = vunpack.c.l.bf16 %v308
        %v315 = vunpack.c.h.bf16 %v308
        %v316 = vunpack.c.l.bf16 %v309
        %v317 = vunpack.c.h.bf16 %v309
        %318 = vrot.lane.b32.xlu0 %v310, 17
        %v319 = vpop.permute.xlu0 %318
        %320 = vrot.lane.b32.xlu0 %v314, 17
        %v321 = vpop.permute.xlu0 %320
        %322 = vrot.lane.b32.xlu0 %v311, 17
        %v323 = vpop.permute.xlu0 %322
        %324 = vrot.lane.b32.xlu0 %v315, 17
        %v325 = vpop.permute.xlu0 %324
        %326 = vrot.lane.b32.xlu0 %v312, 17
        %v327 = vpop.permute.xlu0 %326
        %328 = vrot.lane.b32.xlu0 %v316, 17
        %v329 = vpop.permute.xlu0 %328
        %330 = vrot.lane.b32.xlu0 %v313, 17
        %v331 = vpop.permute.xlu0 %330
        %332 = vrot.lane.b32.xlu0 %v317, 17
        %v333 = vpop.permute.xlu0 %332
        %v334 = vlaneseq
        %v335 = vand.u32 %v334, 127
        %vm336 = vcmp.lt.s32.totalorder %v335, 17
        %v337 = vsel %vm336, %v327, %v331
        %v338 = vsel %vm336, %v329, %v333
        %v339 = vsel %vm336, %v323, %v327
        %v340 = vsel %vm336, %v325, %v329
        %v341 = vsel %vm336, %v319, %v323
        %v342 = vsel %vm336, %v321, %v325
        %v343 = vsel %vm336, %v331, %v319
        %v344 = vsel %vm336, %v333, %v321
        %v345 = vpack.c.bf16 %v344, %v343
        %v346 = vpack.c.bf16 %v342, %v341
        %v347 = vpack.c.bf16 %v340, %v339
        %v348 = vpack.c.bf16 %v338, %v337
        %349 = vst [vmem:[#allocation2] sm:$0xff] %v345
        %350 = vst [vmem:[#allocation2 + $0x8] sm:$0xff] %v346
        %351 = vst [vmem:[#allocation2 + $0x10] sm:$0xff] %v347
        %352 = vst [vmem:[#allocation2 + $0x18] sm:$0xff] %v348
        %353 = vrot.lane.b32.xlu0 %v310, 16
        %v354 = vpop.permute.xlu0 %353
        %355 = vrot.lane.b32.xlu0 %v314, 16
        %v356 = vpop.permute.xlu0 %355
        %357 = vrot.lane.b32.xlu0 %v311, 16
        %v358 = vpop.permute.xlu0 %357
        %359 = vrot.lane.b32.xlu0 %v315, 16
        %v360 = vpop.permute.xlu0 %359
        %361 = vrot.lane.b32.xlu0 %v312, 16
        %v362 = vpop.permute.xlu0 %361
        %363 = vrot.lane.b32.xlu0 %v316, 16
        %v364 = vpop.permute.xlu0 %363
        %365 = vrot.lane.b32.xlu0 %v313, 16
        %v366 = vpop.permute.xlu0 %365
        %367 = vrot.lane.b32.xlu0 %v317, 16
        %v368 = vpop.permute.xlu0 %367
        %vm369 = vcmp.lt.s32.totalorder %v335, 16
        %v370 = vsel %vm369, %v362, %v366
        %v371 = vsel %vm369, %v364, %v368
        %v372 = vsel %vm369, %v358, %v362
        %v373 = vsel %vm369, %v360, %v364
        %v374 = vsel %vm369, %v354, %v358
        %v375 = vsel %vm369, %v356, %v360
        %v376 = vsel %vm369, %v366, %v354
        %v377 = vsel %vm369, %v368, %v356
        %v378 = vpack.c.bf16 %v377, %v376
        %v379 = vpack.c.bf16 %v375, %v374
        %v380 = vpack.c.bf16 %v373, %v372
        %v381 = vpack.c.bf16 %v371, %v370
        %382 = vst [vmem:[#allocation2 + $0x20] sm:$0xff] %v378
        %383 = vst [vmem:[#allocation2 + $0x28] sm:$0xff] %v379
        %384 = vst [vmem:[#allocation2 + $0x30] sm:$0xff] %v380
        %385 = vst [vmem:[#allocation2 + $0x38] sm:$0xff] %v381
        %386 = vrot.lane.b32.xlu0 %v310, 15
        %v387 = vpop.permute.xlu0 %386
        %388 = vrot.lane.b32.xlu0 %v314, 15
        %v389 = vpop.permute.xlu0 %388
        %390 = vrot.lane.b32.xlu0 %v311, 15
        %v391 = vpop.permute.xlu0 %390
        %392 = vrot.lane.b32.xlu0 %v315, 15
        %v393 = vpop.permute.xlu0 %392
        %394 = vrot.lane.b32.xlu0 %v312, 15
        %v395 = vpop.permute.xlu0 %394
        %396 = vrot.lane.b32.xlu0 %v316, 15
        %v397 = vpop.permute.xlu0 %396
        %398 = vrot.lane.b32.xlu0 %v313, 15
        %v399 = vpop.permute.xlu0 %398
        %400 = vrot.lane.b32.xlu0 %v317, 15
        %v401 = vpop.permute.xlu0 %400
        %vm402 = vcmp.lt.s32.totalorder %v335, 15
        %v403 = vsel %vm402, %v395, %v399
        %v404 = vsel %vm402, %v397, %v401
        %v405 = vsel %vm402, %v391, %v395
        %v406 = vsel %vm402, %v393, %v397
        %v407 = vsel %vm402, %v387, %v391
        %v408 = vsel %vm402, %v389, %v393
        %v409 = vsel %vm402, %v399, %v387
        %v410 = vsel %vm402, %v401, %v389
        %v411 = vpack.c.bf16 %v410, %v409
        %v412 = vpack.c.bf16 %v408, %v407
        %v413 = vpack.c.bf16 %v406, %v405
        %v414 = vpack.c.bf16 %v404, %v403
        %415 = vst [vmem:[#allocation2 + $0x40] sm:$0xff] %v411
        %416 = vst [vmem:[#allocation2 + $0x48] sm:$0xff] %v412
        %417 = vst [vmem:[#allocation2 + $0x50] sm:$0xff] %v413
        %418 = vst [vmem:[#allocation2 + $0x58] sm:$0xff] %v414
        %419 = vrot.lane.b32.xlu0 %v310, 1
        %v420 = vpop.permute.xlu0 %419
        %421 = vrot.lane.b32.xlu0 %v314, 1
        %v422 = vpop.permute.xlu0 %421
        %423 = vrot.lane.b32.xlu0 %v311, 1
        %v424 = vpop.permute.xlu0 %423
        %425 = vrot.lane.b32.xlu0 %v315, 1
        %v426 = vpop.permute.xlu0 %425
        %427 = vrot.lane.b32.xlu0 %v312, 1
        %v428 = vpop.permute.xlu0 %427
        %429 = vrot.lane.b32.xlu0 %v316, 1
        %v430 = vpop.permute.xlu0 %429
        %431 = vrot.lane.b32.xlu0 %v313, 1
        %v432 = vpop.permute.xlu0 %431
        %433 = vrot.lane.b32.xlu0 %v317, 1
        %v434 = vpop.permute.xlu0 %433
        %vm435 = vcmp.lt.s32.totalorder %v335, 1
        %v436 = vsel %vm435, %v428, %v432
        %v437 = vsel %vm435, %v430, %v434
        %v438 = vsel %vm435, %v424, %v428
        %v439 = vsel %vm435, %v426, %v430
        %v440 = vsel %vm435, %v420, %v424
        %v441 = vsel %vm435, %v422, %v426
        %v442 = vsel %vm435, %v432, %v420
        %v443 = vsel %vm435, %v434, %v422
        %v444 = vpack.c.bf16 %v443, %v442
        %v445 = vpack.c.bf16 %v441, %v440
        %v446 = vpack.c.bf16 %v439, %v438
        %v447 = vpack.c.bf16 %v437, %v436
        %448 = vst [vmem:[#allocation2 + $0x60] sm:$0xff] %v444
        %449 = vst [vmem:[#allocation2 + $0x68] sm:$0xff] %v445
        %450 = vst [vmem:[#allocation2 + $0x70] sm:$0xff] %v446
        %451 = vst [vmem:[#allocation2 + $0x78] sm:$0xff] %v447
        %v456 = vunpack.c.l.b16 %v306
        %v457 = vunpack.c.h.b16 %v306
        %v458 = vunpack.c.l.b16 %v307
        %v459 = vunpack.c.h.b16 %v307
        %v460 = vunpack.c.l.b16 %v308
        %v461 = vunpack.c.h.b16 %v308
        %v462 = vunpack.c.l.b16 %v309
        %v463 = vunpack.c.h.b16 %v309
        %v464 = vpack.c.b16 %v460, %v456
        %v465 = vpack.c.b16 %v461, %v457
        %v466 = vpack.c.b16 %v462, %v458
        %v467 = vpack.c.b16 %v463, %v459
        %472 = vst [vmem:[#allocation2 + $0x80] sm:$0xff] %v464
        %473 = vst [vmem:[#allocation2 + $0x88] sm:$0xff] %v465
        %474 = vst [vmem:[#allocation2 + $0x90] sm:$0xff] %v466
        %475 = vst [vmem:[#allocation2 + $0x98] sm:$0xff] %v467
        %476 = vrot.lane.b32.xlu0 %v310, 127
        %v477 = vpop.permute.xlu0 %476
        %478 = vrot.lane.b32.xlu0 %v314, 127
        %v479 = vpop.permute.xlu0 %478
        %480 = vrot.lane.b32.xlu0 %v311, 127
        %v481 = vpop.permute.xlu0 %480
        %482 = vrot.lane.b32.xlu0 %v315, 127
        %v483 = vpop.permute.xlu0 %482
        %484 = vrot.lane.b32.xlu0 %v312, 127
        %v485 = vpop.permute.xlu0 %484
        %486 = vrot.lane.b32.xlu0 %v316, 127
        %v487 = vpop.permute.xlu0 %486
        %488 = vrot.lane.b32.xlu0 %v313, 127
        %v489 = vpop.permute.xlu0 %488
        %490 = vrot.lane.b32.xlu0 %v317, 127
        %v491 = vpop.permute.xlu0 %490
        %vm492 = vcmp.lt.s32.totalorder %v335, 127
        %v493 = vsel %vm492, %v485, %v489
        %v494 = vsel %vm492, %v487, %v491
        %v495 = vsel %vm492, %v481, %v485
        %v496 = vsel %vm492, %v483, %v487
        %v497 = vsel %vm492, %v477, %v481
        %v498 = vsel %vm492, %v479, %v483
        %v499 = vsel %vm492, %v489, %v477
        %v500 = vsel %vm492, %v491, %v479
        %v501 = vpack.c.bf16 %v498, %v497
        %v502 = vpack.c.bf16 %v496, %v495
        %v503 = vpack.c.bf16 %v494, %v493
        %v504 = vpack.c.bf16 %v500, %v499
        %505 = vst [vmem:[#allocation2 + $0xa0] sm:$0xff] %v501
        %506 = vst [vmem:[#allocation2 + $0xa8] sm:$0xff] %v502
        %507 = vst [vmem:[#allocation2 + $0xb0] sm:$0xff] %v503
        %508 = vst [vmem:[#allocation2 + $0xb8] sm:$0xff] %v504
        %509 = vrot.lane.b32.xlu0 %v310, 113
        %v510 = vpop.permute.xlu0 %509
        %511 = vrot.lane.b32.xlu0 %v314, 113
        %v512 = vpop.permute.xlu0 %511
        %513 = vrot.lane.b32.xlu0 %v311, 113
        %v514 = vpop.permute.xlu0 %513
        %515 = vrot.lane.b32.xlu0 %v315, 113
        %v516 = vpop.permute.xlu0 %515
        %517 = vrot.lane.b32.xlu0 %v312, 113
        %v518 = vpop.permute.xlu0 %517
        %519 = vrot.lane.b32.xlu0 %v316, 113
        %v520 = vpop.permute.xlu0 %519
        %521 = vrot.lane.b32.xlu0 %v313, 113
        %v522 = vpop.permute.xlu0 %521
        %523 = vrot.lane.b32.xlu0 %v317, 113
        %v524 = vpop.permute.xlu0 %523
        %vm525 = vcmp.lt.s32.totalorder %v335, 113
        %v526 = vsel %vm525, %v518, %v522
        %v527 = vsel %vm525, %v520, %v524
        %v528 = vsel %vm525, %v514, %v518
        %v529 = vsel %vm525, %v516, %v520
        %v530 = vsel %vm525, %v510, %v514
        %v531 = vsel %vm525, %v512, %v516
        %v532 = vsel %vm525, %v522, %v510
        %v533 = vsel %vm525, %v524, %v512
        %v534 = vpack.c.bf16 %v531, %v530
        %v535 = vpack.c.bf16 %v529, %v528
        %v536 = vpack.c.bf16 %v527, %v526
        %v537 = vpack.c.bf16 %v533, %v532
        %538 = vst [vmem:[#allocation2 + $0xc0] sm:$0xff] %v534
        %539 = vst [vmem:[#allocation2 + $0xc8] sm:$0xff] %v535
        %540 = vst [vmem:[#allocation2 + $0xd0] sm:$0xff] %v536
        %541 = vst [vmem:[#allocation2 + $0xd8] sm:$0xff] %v537
        %542 = vrot.lane.b32.xlu0 %v310, 112
        %v543 = vpop.permute.xlu0 %542
        %544 = vrot.lane.b32.xlu0 %v314, 112
        %v545 = vpop.permute.xlu0 %544
        %546 = vrot.lane.b32.xlu0 %v311, 112
        %v547 = vpop.permute.xlu0 %546
        %548 = vrot.lane.b32.xlu0 %v315, 112
        %v549 = vpop.permute.xlu0 %548
        %550 = vrot.lane.b32.xlu0 %v312, 112
        %v551 = vpop.permute.xlu0 %550
        %552 = vrot.lane.b32.xlu0 %v316, 112
        %v553 = vpop.permute.xlu0 %552
        %554 = vrot.lane.b32.xlu0 %v313, 112
        %v555 = vpop.permute.xlu0 %554
        %556 = vrot.lane.b32.xlu0 %v317, 112
        %v557 = vpop.permute.xlu0 %556
        %vm558 = vcmp.lt.s32.totalorder %v335, 112
        %v559 = vsel %vm558, %v551, %v555
        %v560 = vsel %vm558, %v553, %v557
        %v561 = vsel %vm558, %v547, %v551
        %v562 = vsel %vm558, %v549, %v553
        %v563 = vsel %vm558, %v543, %v547
        %v564 = vsel %vm558, %v545, %v549
        %v565 = vsel %vm558, %v555, %v543
        %v566 = vsel %vm558, %v557, %v545
        %v567 = vpack.c.bf16 %v564, %v563
        %v568 = vpack.c.bf16 %v562, %v561
        %v569 = vpack.c.bf16 %v560, %v559
        %v570 = vpack.c.bf16 %v566, %v565
        %571 = vst [vmem:[#allocation2 + $0xe0] sm:$0xff] %v567
        %572 = vst [vmem:[#allocation2 + $0xe8] sm:$0xff] %v568
        %573 = vst [vmem:[#allocation2 + $0xf0] sm:$0xff] %v569
        %574 = vst [vmem:[#allocation2 + $0xf8] sm:$0xff] %v570
        %575 = vrot.lane.b32.xlu0 %v310, 111
        %v576 = vpop.permute.xlu0 %575
        %577 = vrot.lane.b32.xlu0 %v314, 111
        %v578 = vpop.permute.xlu0 %577
        %579 = vrot.lane.b32.xlu0 %v311, 111
        %v580 = vpop.permute.xlu0 %579
        %581 = vrot.lane.b32.xlu0 %v315, 111
        %v582 = vpop.permute.xlu0 %581
        %583 = vrot.lane.b32.xlu0 %v312, 111
        %v584 = vpop.permute.xlu0 %583
        %585 = vrot.lane.b32.xlu0 %v316, 111
        %v586 = vpop.permute.xlu0 %585
        %587 = vrot.lane.b32.xlu0 %v313, 111
        %v588 = vpop.permute.xlu0 %587
        %589 = vrot.lane.b32.xlu0 %v317, 111
        %v590 = vpop.permute.xlu0 %589
        %vm591 = vcmp.lt.s32.totalorder %v335, 111
        %v592 = vsel %vm591, %v584, %v588
        %v593 = vsel %vm591, %v586, %v590
        %v594 = vsel %vm591, %v580, %v584
        %v595 = vsel %vm591, %v582, %v586
        %v596 = vsel %vm591, %v576, %v580
        %v597 = vsel %vm591, %v578, %v582
        %v598 = vsel %vm591, %v588, %v576
        %v599 = vsel %vm591, %v590, %v578
        %v600 = vpack.c.bf16 %v597, %v596
        %v601 = vpack.c.bf16 %v595, %v594
        %v602 = vpack.c.bf16 %v593, %v592
        %v603 = vpack.c.bf16 %v599, %v598
        %604 = vst [vmem:[#allocation2 + $0x100] sm:$0xff] %v600
        %605 = vst [vmem:[#allocation2 + $0x108] sm:$0xff] %v601
        %606 = vst [vmem:[#allocation2 + $0x110] sm:$0xff] %v602
        %607 = vst [vmem:[#allocation2 + $0x118] sm:$0xff] %v603
        %v608 = vld [vmem:[%s2] sm:$0xff]
        %v609 = vld [vmem:[%s2 + $0x8] sm:$0xff]
        %v610 = vld [vmem:[#allocation2] sm:$0xff]
        %v611 = vld [vmem:[#allocation2 + $0x8] sm:$0xff]
        %v612 = vld [vmem:[#allocation2 + $0x10] sm:$0xff]
        %v613 = vld [vmem:[#allocation2 + $0x18] sm:$0xff]
        %v614 = vld [vmem:[#allocation2 + $0x20] sm:$0xff]
        %v615 = vld [vmem:[#allocation2 + $0x28] sm:$0xff]
        %v616 = vld [vmem:[#allocation2 + $0x30] sm:$0xff]
        %v617 = vld [vmem:[#allocation2 + $0x38] sm:$0xff]
        %v618 = vld [vmem:[#allocation2 + $0x40] sm:$0xff]
        %v619 = vld [vmem:[#allocation2 + $0x48] sm:$0xff]
        %v620 = vld [vmem:[#allocation2 + $0x50] sm:$0xff]
        %v621 = vld [vmem:[#allocation2 + $0x58] sm:$0xff]
        %v622 = vld [vmem:[#allocation2 + $0x60] sm:$0xff]
        %v623 = vld [vmem:[#allocation2 + $0x68] sm:$0xff]
        %v624 = vld [vmem:[#allocation2 + $0x70] sm:$0xff]
        %v625 = vld [vmem:[#allocation2 + $0x78] sm:$0xff]
        %v626 = vld [vmem:[#allocation2 + $0x80] sm:$0xff]
        %v627 = vld [vmem:[#allocation2 + $0x88] sm:$0xff]
        %v628 = vld [vmem:[#allocation2 + $0x90] sm:$0xff]
        %v629 = vld [vmem:[#allocation2 + $0x98] sm:$0xff]
        %v630 = vld [vmem:[#allocation2 + $0xa0] sm:$0xff]
        %v631 = vld [vmem:[#allocation2 + $0xa8] sm:$0xff]
        %v632 = vld [vmem:[#allocation2 + $0xb0] sm:$0xff]
        %v633 = vld [vmem:[#allocation2 + $0xb8] sm:$0xff]
        %v634 = vld [vmem:[#allocation2 + $0xc0] sm:$0xff]
        %v635 = vld [vmem:[#allocation2 + $0xc8] sm:$0xff]
        %v636 = vld [vmem:[#allocation2 + $0xd0] sm:$0xff]
        %v637 = vld [vmem:[#allocation2 + $0xd8] sm:$0xff]
        %v638 = vld [vmem:[#allocation2 + $0xe0] sm:$0xff]
        %v639 = vld [vmem:[#allocation2 + $0xe8] sm:$0xff]
        %v640 = vld [vmem:[#allocation2 + $0xf0] sm:$0xff]
        %v641 = vld [vmem:[#allocation2 + $0xf8] sm:$0xff]
        %v642 = vld [vmem:[#allocation2 + $0x100] sm:$0xff]
        %v643 = vld [vmem:[#allocation2 + $0x108] sm:$0xff]
        %v644 = vld [vmem:[#allocation2 + $0x110] sm:$0xff]
        %v645 = vld [vmem:[#allocation2 + $0x118] sm:$0xff]
        %v646 = vld [vmem:[%s3] sm:$0xff]
        %v647 = vld [vmem:[%s3 + $0x8] sm:$0xff]
        %649 = vset.pattern.permute.xlu0 0
        %650 = vperm.xlu0 %649, %v646
        %v651 = vpop.permute.xlu0 %650
        %654 = vset.pattern.permute.xlu0 0
        %655 = vperm.xlu0 %654, %v647
        %v656 = vpop.permute.xlu0 %655
        %v660 = vunpack.c.l.b16 %v608
        %v661 = vunpack.c.h.b16 %v608
        %v662 = vunpack.c.l.b16 %v609
        %v663 = vunpack.c.h.b16 %v609
        %v664 = vpack.c.b16 %v662, %v660
        %v665 = vpack.c.b16 %v663, %v661
        %vm667 = vcmask 130048
        %v669 = vsel %vm667, %v665, 0
        %671 = vmatprep.subr.bf16.mxu0 %v611
        %672 = vmatpush1.bf16.msra.mxu0 %v610
        %673 = vmatprep.subr.bf16.mxu0 %v615
        %674 = vmatpush1.bf16.msra.mxu0 %v614
        %675 = vmatprep.subr.bf16.mxu0 %v619
        %676 = vmatpush1.bf16.msra.mxu0 %v618
        %677 = vmatprep.subr.bf16.mxu0 %v623
        %678 = vmatpush1.bf16.msra.mxu0 %v622
        %679 = vmatprep.subr.bf16.mxu0 %v627
        %680 = vmatpush1.bf16.msra.mxu0 %v626
        %681 = vmatprep.subr.bf16.mxu0 %v631
        %682 = vmatpush1.bf16.msra.mxu0 %v630
        %683 = vmatprep.subr.bf16.mxu0 %v635
        %684 = vmatpush1.bf16.msra.mxu0 %v634
        %685 = vmatprep.subr.bf16.mxu0 %v639
        %686 = vmatpush1.bf16.msra.mxu0 %v638
        %687 = vmatprep.subr.bf16.mxu0 %v643
        %688 = vmatpush1.bf16.msra.mxu0 %v642
        %689 = vmatprep.subr.bf16.mxu0 0
        %690 = vmatpush1.bf16.msra.mxu0 0
        %691 = vmatprep.subr.bf16.mxu0 0
        %692 = vmatpush1.bf16.msra.mxu0 0
        %693 = vmatprep.subr.bf16.mxu0 0
        %694 = vmatpush1.bf16.msra.mxu0 0
        %695 = vmatprep.subr.bf16.mxu0 0
        %696 = vmatpush1.bf16.msra.mxu0 0
        %697 = vmatprep.subr.bf16.mxu0 0
        %698 = vmatpush1.bf16.msra.mxu0 0
        %699 = vmatprep.subr.bf16.mxu0 0
        %700 = vmatpush1.bf16.msra.mxu0 0
        %701 = vmatprep.subr.bf16.mxu0 0
        %702 = vmatpush1.bf16.msra.mxu0 0
        %703 = vmatprep.mubr.bf16.mxu0 %v669
        %704 = vmatmul.mubr.bf16.gmra.mrb[0].mxu0 %v664
        %v705 = vpop.f32.mrb[0].mxu0
        %v706 = vadd.f32 %v651, %v705
        %v707 = vpop.f32.mrb[0].mxu0
        %v708 = vadd.f32 %v651, %v707
        %v709 = vpop.f32.mrb[0].mxu0
        %v710 = vadd.f32 %v656, %v709
        %v711 = vpop.f32.mrb[0].mxu0
        %v712 = vadd.f32 %v656, %v711
        %713 = vdwg.mxu0
        %714 = vmatprep.subr.bf16.mxu0 %v613
        %715 = vmatpush1.bf16.msra.mxu0 %v612
        %716 = vmatprep.subr.bf16.mxu0 %v617
        %717 = vmatpush1.bf16.msra.mxu0 %v616
        %718 = vmatprep.subr.bf16.mxu0 %v621
        %719 = vmatpush1.bf16.msra.mxu0 %v620
        %720 = vmatprep.subr.bf16.mxu0 %v625
        %721 = vmatpush1.bf16.msra.mxu0 %v624
        %722 = vmatprep.subr.bf16.mxu0 %v629
        %723 = vmatpush1.bf16.msra.mxu0 %v628
        %724 = vmatprep.subr.bf16.mxu0 %v633
        %725 = vmatpush1.bf16.msra.mxu0 %v632
        %726 = vmatprep.subr.bf16.mxu0 %v637
        %727 = vmatpush1.bf16.msra.mxu0 %v636
        %728 = vmatprep.subr.bf16.mxu0 %v641
        %729 = vmatpush1.bf16.msra.mxu0 %v640
        %730 = vmatprep.subr.bf16.mxu0 %v645
        %731 = vmatpush1.bf16.msra.mxu0 %v644
        %732 = vmatprep.subr.bf16.mxu0 0
        %733 = vmatpush1.bf16.msra.mxu0 0
        %734 = vmatprep.subr.bf16.mxu0 0
        %735 = vmatpush1.bf16.msra.mxu0 0
        %736 = vmatprep.subr.bf16.mxu0 0
        %737 = vmatpush1.bf16.msra.mxu0 0
        %738 = vmatprep.subr.bf16.mxu0 0
        %739 = vmatpush1.bf16.msra.mxu0 0
        %740 = vmatprep.subr.bf16.mxu0 0
        %741 = vmatpush1.bf16.msra.mxu0 0
        %742 = vmatprep.subr.bf16.mxu0 0
        %743 = vmatpush1.bf16.msra.mxu0 0
        %744 = vmatprep.subr.bf16.mxu0 0
        %745 = vmatpush1.bf16.msra.mxu0 0
        %746 = vmatprep.mubr.bf16.mxu0 %v669
        %747 = vmatmul.mubr.bf16.gmra.mrb[0].mxu0 %v664
        %v748 = vpop.f32.mrb[0].mxu0
        %v749 = vadd.f32 %v651, %v748
        %v750 = vpop.f32.mrb[0].mxu0
        %v751 = vadd.f32 %v651, %v750
        %v752 = vpop.f32.mrb[0].mxu0
        %v753 = vadd.f32 %v656, %v752
        %v754 = vpop.f32.mrb[0].mxu0
        %v755 = vadd.f32 %v656, %v754
        %756 = vdwg.mxu0
        %v757 = vmax.f32 %v706, 0.0
        %v758 = vmax.f32 %v708, 0.0
        %v759 = vmax.f32 %v749, 0.0
        %v760 = vmax.f32 %v751, 0.0
        %v761 = vmax.f32 %v710, 0.0
        %v762 = vmax.f32 %v712, 0.0
        %v763 = vmax.f32 %v753, 0.0
        %v764 = vmax.f32 %v755, 0.0
        %v766 = vlaneseq
        %v767 = vshrl.u32 %v766, 7
        %v768 = vsub.s32 0, %v767
        %v769 = vrot.slane %v305, %v768
        %v770 = vlaneseq
        %v771 = vshrl.u32 %v770, 7
        %v772 = vsub.s32 1, %v771
        %v773 = vrot.slane %v305, %v772
        %v774 = vlaneseq
        %v775 = vshrl.u32 %v774, 7
        %v776 = vsub.s32 2, %v775
        %v777 = vrot.slane %v305, %v776
        %v778 = vlaneseq
        %v779 = vshrl.u32 %v778, 7
        %v780 = vsub.s32 3, %v779
        %v781 = vrot.slane %v305, %v780
        %v786 = vmul.f32 %v757, %v769
        %v787 = vmul.f32 %v758, %v773
        %v788 = vmul.f32 %v759, %v777
        %v789 = vmul.f32 %v760, %v781
        %v790 = vmul.f32 %v761, %v769
        %v791 = vmul.f32 %v762, %v773
        %v792 = vmul.f32 %v763, %v777
        %v793 = vmul.f32 %v764, %v781
        %794 = vrot.lane.b32.xlu0 %v786, 17
        %v795 = vpop.permute.xlu0 %794
        %796 = vrot.lane.b32.xlu0 %v790, 17
        %v797 = vpop.permute.xlu0 %796
        %798 = vrot.lane.b32.xlu0 %v787, 17
        %v799 = vpop.permute.xlu0 %798
        %800 = vrot.lane.b32.xlu0 %v791, 17
        %v801 = vpop.permute.xlu0 %800
        %802 = vrot.lane.b32.xlu0 %v788, 17
        %v803 = vpop.permute.xlu0 %802
        %804 = vrot.lane.b32.xlu0 %v792, 17
        %v805 = vpop.permute.xlu0 %804
        %806 = vrot.lane.b32.xlu0 %v789, 17
        %v807 = vpop.permute.xlu0 %806
        %808 = vrot.lane.b32.xlu0 %v793, 17
        %v809 = vpop.permute.xlu0 %808
        %v810 = vsel %vm336, %v803, %v807
        %v811 = vsel %vm336, %v805, %v809
        %v812 = vsel %vm336, %v799, %v803
        %v813 = vsel %vm336, %v801, %v805
        %v814 = vsel %vm336, %v795, %v799
        %v815 = vsel %vm336, %v797, %v801
        %v816 = vsel %vm336, %v807, %v795
        %v817 = vsel %vm336, %v809, %v797
        %v818 = vpack.c.bf16 %v817, %v816
        %v819 = vpack.c.bf16 %v815, %v814
        %v820 = vpack.c.bf16 %v813, %v812
        %v821 = vpack.c.bf16 %v811, %v810
        %822 = vst [vmem:[#allocation2] sm:$0xff] %v818
        %823 = vst [vmem:[#allocation2 + $0x8] sm:$0xff] %v819
        %824 = vst [vmem:[#allocation2 + $0x10] sm:$0xff] %v820
        %825 = vst [vmem:[#allocation2 + $0x18] sm:$0xff] %v821
        %826 = vrot.lane.b32.xlu0 %v786, 16
        %v827 = vpop.permute.xlu0 %826
        %828 = vrot.lane.b32.xlu0 %v790, 16
        %v829 = vpop.permute.xlu0 %828
        %830 = vrot.lane.b32.xlu0 %v787, 16
        %v831 = vpop.permute.xlu0 %830
        %832 = vrot.lane.b32.xlu0 %v791, 16
        %v833 = vpop.permute.xlu0 %832
        %834 = vrot.lane.b32.xlu0 %v788, 16
        %v835 = vpop.permute.xlu0 %834
        %836 = vrot.lane.b32.xlu0 %v792, 16
        %v837 = vpop.permute.xlu0 %836
        %838 = vrot.lane.b32.xlu0 %v789, 16
        %v839 = vpop.permute.xlu0 %838
        %840 = vrot.lane.b32.xlu0 %v793, 16
        %v841 = vpop.permute.xlu0 %840
        %v842 = vsel %vm369, %v835, %v839
        %v843 = vsel %vm369, %v837, %v841
        %v844 = vsel %vm369, %v831, %v835
        %v845 = vsel %vm369, %v833, %v837
        %v846 = vsel %vm369, %v827, %v831
        %v847 = vsel %vm369, %v829, %v833
        %v848 = vsel %vm369, %v839, %v827
        %v849 = vsel %vm369, %v841, %v829
        %v850 = vpack.c.bf16 %v849, %v848
        %v851 = vpack.c.bf16 %v847, %v846
        %v852 = vpack.c.bf16 %v845, %v844
        %v853 = vpack.c.bf16 %v843, %v842
        %854 = vst [vmem:[#allocation2 + $0x20] sm:$0xff] %v850
        %855 = vst [vmem:[#allocation2 + $0x28] sm:$0xff] %v851
        %856 = vst [vmem:[#allocation2 + $0x30] sm:$0xff] %v852
        %857 = vst [vmem:[#allocation2 + $0x38] sm:$0xff] %v853
        %858 = vrot.lane.b32.xlu0 %v786, 15
        %v859 = vpop.permute.xlu0 %858
        %860 = vrot.lane.b32.xlu0 %v790, 15
        %v861 = vpop.permute.xlu0 %860
        %862 = vrot.lane.b32.xlu0 %v787, 15
        %v863 = vpop.permute.xlu0 %862
        %864 = vrot.lane.b32.xlu0 %v791, 15
        %v865 = vpop.permute.xlu0 %864
        %866 = vrot.lane.b32.xlu0 %v788, 15
        %v867 = vpop.permute.xlu0 %866
        %868 = vrot.lane.b32.xlu0 %v792, 15
        %v869 = vpop.permute.xlu0 %868
        %870 = vrot.lane.b32.xlu0 %v789, 15
        %v871 = vpop.permute.xlu0 %870
        %872 = vrot.lane.b32.xlu0 %v793, 15
        %v873 = vpop.permute.xlu0 %872
        %v874 = vsel %vm402, %v867, %v871
        %v875 = vsel %vm402, %v869, %v873
        %v876 = vsel %vm402, %v863, %v867
        %v877 = vsel %vm402, %v865, %v869
        %v878 = vsel %vm402, %v859, %v863
        %v879 = vsel %vm402, %v861, %v865
        %v880 = vsel %vm402, %v871, %v859
        %v881 = vsel %vm402, %v873, %v861
        %v882 = vpack.c.bf16 %v881, %v880
        %v883 = vpack.c.bf16 %v879, %v878
        %v884 = vpack.c.bf16 %v877, %v876
        %v885 = vpack.c.bf16 %v875, %v874
        %886 = vst [vmem:[#allocation2 + $0x40] sm:$0xff] %v882
        %887 = vst [vmem:[#allocation2 + $0x48] sm:$0xff] %v883
        %888 = vst [vmem:[#allocation2 + $0x50] sm:$0xff] %v884
        %889 = vst [vmem:[#allocation2 + $0x58] sm:$0xff] %v885
        %890 = vrot.lane.b32.xlu0 %v786, 1
        %v891 = vpop.permute.xlu0 %890
        %892 = vrot.lane.b32.xlu0 %v790, 1
        %v893 = vpop.permute.xlu0 %892
        %894 = vrot.lane.b32.xlu0 %v787, 1
        %v895 = vpop.permute.xlu0 %894
        %896 = vrot.lane.b32.xlu0 %v791, 1
        %v897 = vpop.permute.xlu0 %896
        %898 = vrot.lane.b32.xlu0 %v788, 1
        %v899 = vpop.permute.xlu0 %898
        %900 = vrot.lane.b32.xlu0 %v792, 1
        %v901 = vpop.permute.xlu0 %900
        %902 = vrot.lane.b32.xlu0 %v789, 1
        %v903 = vpop.permute.xlu0 %902
        %904 = vrot.lane.b32.xlu0 %v793, 1
        %v905 = vpop.permute.xlu0 %904
        %v906 = vsel %vm435, %v899, %v903
        %v907 = vsel %vm435, %v901, %v905
        %v908 = vsel %vm435, %v895, %v899
        %v909 = vsel %vm435, %v897, %v901
        %v910 = vsel %vm435, %v891, %v895
        %v911 = vsel %vm435, %v893, %v897
        %v912 = vsel %vm435, %v903, %v891
        %v913 = vsel %vm435, %v905, %v893
        %v914 = vpack.c.bf16 %v913, %v912
        %v915 = vpack.c.bf16 %v911, %v910
        %v916 = vpack.c.bf16 %v909, %v908
        %v917 = vpack.c.bf16 %v907, %v906
        %918 = vst [vmem:[#allocation2 + $0x60] sm:$0xff] %v914
        %919 = vst [vmem:[#allocation2 + $0x68] sm:$0xff] %v915
        %920 = vst [vmem:[#allocation2 + $0x70] sm:$0xff] %v916
        %921 = vst [vmem:[#allocation2 + $0x78] sm:$0xff] %v917
        %v922 = vpack.c.bf16 %v790, %v786
        %v923 = vpack.c.bf16 %v791, %v787
        %v924 = vpack.c.bf16 %v792, %v788
        %v925 = vpack.c.bf16 %v793, %v789
        %926 = vst [vmem:[#allocation2 + $0x80] sm:$0xff] %v922
        %927 = vst [vmem:[#allocation2 + $0x88] sm:$0xff] %v923
        %928 = vst [vmem:[#allocation2 + $0x90] sm:$0xff] %v924
        %929 = vst [vmem:[#allocation2 + $0x98] sm:$0xff] %v925
        %930 = vrot.lane.b32.xlu0 %v786, 127
        %v931 = vpop.permute.xlu0 %930
        %932 = vrot.lane.b32.xlu0 %v790, 127
        %v933 = vpop.permute.xlu0 %932
        %934 = vrot.lane.b32.xlu0 %v787, 127
        %v935 = vpop.permute.xlu0 %934
        %936 = vrot.lane.b32.xlu0 %v791, 127
        %v937 = vpop.permute.xlu0 %936
        %938 = vrot.lane.b32.xlu0 %v788, 127
        %v939 = vpop.permute.xlu0 %938
        %940 = vrot.lane.b32.xlu0 %v792, 127
        %v941 = vpop.permute.xlu0 %940
        %942 = vrot.lane.b32.xlu0 %v789, 127
        %v943 = vpop.permute.xlu0 %942
        %944 = vrot.lane.b32.xlu0 %v793, 127
        %v945 = vpop.permute.xlu0 %944
        %v946 = vsel %vm492, %v939, %v943
        %v947 = vsel %vm492, %v941, %v945
        %v948 = vsel %vm492, %v935, %v939
        %v949 = vsel %vm492, %v937, %v941
        %v950 = vsel %vm492, %v931, %v935
        %v951 = vsel %vm492, %v933, %v937
        %v952 = vsel %vm492, %v943, %v931
        %v953 = vsel %vm492, %v945, %v933
        %v954 = vpack.c.bf16 %v951, %v950
        %v955 = vpack.c.bf16 %v949, %v948
        %v956 = vpack.c.bf16 %v947, %v946
        %v957 = vpack.c.bf16 %v953, %v952
        %958 = vst [vmem:[#allocation2 + $0xa0] sm:$0xff] %v954
        %959 = vst [vmem:[#allocation2 + $0xa8] sm:$0xff] %v955
        %960 = vst [vmem:[#allocation2 + $0xb0] sm:$0xff] %v956
        %961 = vst [vmem:[#allocation2 + $0xb8] sm:$0xff] %v957
        %962 = vrot.lane.b32.xlu0 %v786, 113
        %v963 = vpop.permute.xlu0 %962
        %964 = vrot.lane.b32.xlu0 %v790, 113
        %v965 = vpop.permute.xlu0 %964
        %966 = vrot.lane.b32.xlu0 %v787, 113
        %v967 = vpop.permute.xlu0 %966
        %968 = vrot.lane.b32.xlu0 %v791, 113
        %v969 = vpop.permute.xlu0 %968
        %970 = vrot.lane.b32.xlu0 %v788, 113
        %v971 = vpop.permute.xlu0 %970
        %972 = vrot.lane.b32.xlu0 %v792, 113
        %v973 = vpop.permute.xlu0 %972
        %974 = vrot.lane.b32.xlu0 %v789, 113
        %v975 = vpop.permute.xlu0 %974
        %976 = vrot.lane.b32.xlu0 %v793, 113
        %v977 = vpop.permute.xlu0 %976
        %v978 = vsel %vm525, %v971, %v975
        %v979 = vsel %vm525, %v973, %v977
        %v980 = vsel %vm525, %v967, %v971
        %v981 = vsel %vm525, %v969, %v973
        %v982 = vsel %vm525, %v963, %v967
        %v983 = vsel %vm525, %v965, %v969
        %v984 = vsel %vm525, %v975, %v963
        %v985 = vsel %vm525, %v977, %v965
        %v986 = vpack.c.bf16 %v983, %v982
        %v987 = vpack.c.bf16 %v981, %v980
        %v988 = vpack.c.bf16 %v979, %v978
        %v989 = vpack.c.bf16 %v985, %v984
        %990 = vst [vmem:[#allocation2 + $0xc0] sm:$0xff] %v986
        %991 = vst [vmem:[#allocation2 + $0xc8] sm:$0xff] %v987
        %992 = vst [vmem:[#allocation2 + $0xd0] sm:$0xff] %v988
        %993 = vst [vmem:[#allocation2 + $0xd8] sm:$0xff] %v989
        %994 = vrot.lane.b32.xlu0 %v786, 112
        %v995 = vpop.permute.xlu0 %994
        %996 = vrot.lane.b32.xlu0 %v790, 112
        %v997 = vpop.permute.xlu0 %996
        %998 = vrot.lane.b32.xlu0 %v787, 112
        %v999 = vpop.permute.xlu0 %998
        %1000 = vrot.lane.b32.xlu0 %v791, 112
        %v1001 = vpop.permute.xlu0 %1000
        %1002 = vrot.lane.b32.xlu0 %v788, 112
        %v1003 = vpop.permute.xlu0 %1002
        %1004 = vrot.lane.b32.xlu0 %v792, 112
        %v1005 = vpop.permute.xlu0 %1004
        %1006 = vrot.lane.b32.xlu0 %v789, 112
        %v1007 = vpop.permute.xlu0 %1006
        %1008 = vrot.lane.b32.xlu0 %v793, 112
        %v1009 = vpop.permute.xlu0 %1008
        %v1010 = vsel %vm558, %v1003, %v1007
        %v1011 = vsel %vm558, %v1005, %v1009
        %v1012 = vsel %vm558, %v999, %v1003
        %v1013 = vsel %vm558, %v1001, %v1005
        %v1014 = vsel %vm558, %v995, %v999
        %v1015 = vsel %vm558, %v997, %v1001
        %v1016 = vsel %vm558, %v1007, %v995
        %v1017 = vsel %vm558, %v1009, %v997
        %v1018 = vpack.c.bf16 %v1015, %v1014
        %v1019 = vpack.c.bf16 %v1013, %v1012
        %v1020 = vpack.c.bf16 %v1011, %v1010
        %v1021 = vpack.c.bf16 %v1017, %v1016
        %1022 = vst [vmem:[#allocation2 + $0xe0] sm:$0xff] %v1018
        %1023 = vst [vmem:[#allocation2 + $0xe8] sm:$0xff] %v1019
        %1024 = vst [vmem:[#allocation2 + $0xf0] sm:$0xff] %v1020
        %1025 = vst [vmem:[#allocation2 + $0xf8] sm:$0xff] %v1021
        %1026 = vrot.lane.b32.xlu0 %v786, 111
        %v1027 = vpop.permute.xlu0 %1026
        %1028 = vrot.lane.b32.xlu0 %v790, 111
        %v1029 = vpop.permute.xlu0 %1028
        %1030 = vrot.lane.b32.xlu0 %v787, 111
        %v1031 = vpop.permute.xlu0 %1030
        %1032 = vrot.lane.b32.xlu0 %v791, 111
        %v1033 = vpop.permute.xlu0 %1032
        %1034 = vrot.lane.b32.xlu0 %v788, 111
        %v1035 = vpop.permute.xlu0 %1034
        %1036 = vrot.lane.b32.xlu0 %v792, 111
        %v1037 = vpop.permute.xlu0 %1036
        %1038 = vrot.lane.b32.xlu0 %v789, 111
        %v1039 = vpop.permute.xlu0 %1038
        %1040 = vrot.lane.b32.xlu0 %v793, 111
        %v1041 = vpop.permute.xlu0 %1040
        %v1042 = vsel %vm591, %v1035, %v1039
        %v1043 = vsel %vm591, %v1037, %v1041
        %v1044 = vsel %vm591, %v1031, %v1035
        %v1045 = vsel %vm591, %v1033, %v1037
        %v1046 = vsel %vm591, %v1027, %v1031
        %v1047 = vsel %vm591, %v1029, %v1033
        %v1048 = vsel %vm591, %v1039, %v1027
        %v1049 = vsel %vm591, %v1041, %v1029
        %v1050 = vpack.c.bf16 %v1047, %v1046
        %v1051 = vpack.c.bf16 %v1045, %v1044
        %v1052 = vpack.c.bf16 %v1043, %v1042
        %v1053 = vpack.c.bf16 %v1049, %v1048
        %1054 = vst [vmem:[#allocation2 + $0x100] sm:$0xff] %v1050
        %1055 = vst [vmem:[#allocation2 + $0x108] sm:$0xff] %v1051
        %1056 = vst [vmem:[#allocation2 + $0x110] sm:$0xff] %v1052
        %1057 = vst [vmem:[#allocation2 + $0x118] sm:$0xff] %v1053
        %s1058 = scalar_lea.vmem %s2, 16
        %v1059 = vld [vmem:[%s1058] sm:$0xff]
        %v1060 = vld [vmem:[%s1058 + $0x8] sm:$0xff]
        %v1061 = vld [vmem:[#allocation2] sm:$0xff]
        %v1062 = vld [vmem:[#allocation2 + $0x8] sm:$0xff]
        %v1063 = vld [vmem:[#allocation2 + $0x10] sm:$0xff]
        %v1064 = vld [vmem:[#allocation2 + $0x18] sm:$0xff]
        %v1065 = vld [vmem:[#allocation2 + $0x20] sm:$0xff]
        %v1066 = vld [vmem:[#allocation2 + $0x28] sm:$0xff]
        %v1067 = vld [vmem:[#allocation2 + $0x30] sm:$0xff]
        %v1068 = vld [vmem:[#allocation2 + $0x38] sm:$0xff]
        %v1069 = vld [vmem:[#allocation2 + $0x40] sm:$0xff]
        %v1070 = vld [vmem:[#allocation2 + $0x48] sm:$0xff]
        %v1071 = vld [vmem:[#allocation2 + $0x50] sm:$0xff]
        %v1072 = vld [vmem:[#allocation2 + $0x58] sm:$0xff]
        %v1073 = vld [vmem:[#allocation2 + $0x60] sm:$0xff]
        %v1074 = vld [vmem:[#allocation2 + $0x68] sm:$0xff]
        %v1075 = vld [vmem:[#allocation2 + $0x70] sm:$0xff]
        %v1076 = vld [vmem:[#allocation2 + $0x78] sm:$0xff]
        %v1077 = vld [vmem:[#allocation2 + $0x80] sm:$0xff]
        %v1078 = vld [vmem:[#allocation2 + $0x88] sm:$0xff]
        %v1079 = vld [vmem:[#allocation2 + $0x90] sm:$0xff]
        %v1080 = vld [vmem:[#allocation2 + $0x98] sm:$0xff]
        %v1081 = vld [vmem:[#allocation2 + $0xa0] sm:$0xff]
        %v1082 = vld [vmem:[#allocation2 + $0xa8] sm:$0xff]
        %v1083 = vld [vmem:[#allocation2 + $0xb0] sm:$0xff]
        %v1084 = vld [vmem:[#allocation2 + $0xb8] sm:$0xff]
        %v1085 = vld [vmem:[#allocation2 + $0xc0] sm:$0xff]
        %v1086 = vld [vmem:[#allocation2 + $0xc8] sm:$0xff]
        %v1087 = vld [vmem:[#allocation2 + $0xd0] sm:$0xff]
        %v1088 = vld [vmem:[#allocation2 + $0xd8] sm:$0xff]
        %v1089 = vld [vmem:[#allocation2 + $0xe0] sm:$0xff]
        %v1090 = vld [vmem:[#allocation2 + $0xe8] sm:$0xff]
        %v1091 = vld [vmem:[#allocation2 + $0xf0] sm:$0xff]
        %v1092 = vld [vmem:[#allocation2 + $0xf8] sm:$0xff]
        %v1093 = vld [vmem:[#allocation2 + $0x100] sm:$0xff]
        %v1094 = vld [vmem:[#allocation2 + $0x108] sm:$0xff]
        %v1095 = vld [vmem:[#allocation2 + $0x110] sm:$0xff]
        %v1096 = vld [vmem:[#allocation2 + $0x118] sm:$0xff]
        %s1097 = scalar_lea.vmem %s3, 16
        %v1098 = vld [vmem:[%s1097] sm:$0xff]
        %v1099 = vld [vmem:[%s1097 + $0x8] sm:$0xff]
        %1101 = vset.pattern.permute.xlu0 0
        %1102 = vperm.xlu0 %1101, %v1098
        %v1103 = vpop.permute.xlu0 %1102
        %1106 = vset.pattern.permute.xlu0 0
        %1107 = vperm.xlu0 %1106, %v1099
        %v1108 = vpop.permute.xlu0 %1107
        %v1112 = vunpack.c.l.b16 %v1059
        %v1113 = vunpack.c.h.b16 %v1059
        %v1114 = vunpack.c.l.b16 %v1060
        %v1115 = vunpack.c.h.b16 %v1060
        %v1116 = vpack.c.b16 %v1114, %v1112
        %v1117 = vpack.c.b16 %v1115, %v1113
        %v1120 = vsel %vm667, %v1117, 0
        %1122 = vmatprep.subr.bf16.mxu0 %v1062
        %1123 = vmatpush1.bf16.msra.mxu0 %v1061
        %1124 = vmatprep.subr.bf16.mxu0 %v1066
        %1125 = vmatpush1.bf16.msra.mxu0 %v1065
        %1126 = vmatprep.subr.bf16.mxu0 %v1070
        %1127 = vmatpush1.bf16.msra.mxu0 %v1069
        %1128 = vmatprep.subr.bf16.mxu0 %v1074
        %1129 = vmatpush1.bf16.msra.mxu0 %v1073
        %1130 = vmatprep.subr.bf16.mxu0 %v1078
        %1131 = vmatpush1.bf16.msra.mxu0 %v1077
        %1132 = vmatprep.subr.bf16.mxu0 %v1082
        %1133 = vmatpush1.bf16.msra.mxu0 %v1081
        %1134 = vmatprep.subr.bf16.mxu0 %v1086
        %1135 = vmatpush1.bf16.msra.mxu0 %v1085
        %1136 = vmatprep.subr.bf16.mxu0 %v1090
        %1137 = vmatpush1.bf16.msra.mxu0 %v1089
        %1138 = vmatprep.subr.bf16.mxu0 %v1094
        %1139 = vmatpush1.bf16.msra.mxu0 %v1093
        %1140 = vmatprep.subr.bf16.mxu0 0
        %1141 = vmatpush1.bf16.msra.mxu0 0
        %1142 = vmatprep.subr.bf16.mxu0 0
        %1143 = vmatpush1.bf16.msra.mxu0 0
        %1144 = vmatprep.subr.bf16.mxu0 0
        %1145 = vmatpush1.bf16.msra.mxu0 0
        %1146 = vmatprep.subr.bf16.mxu0 0
        %1147 = vmatpush1.bf16.msra.mxu0 0
        %1148 = vmatprep.subr.bf16.mxu0 0
        %1149 = vmatpush1.bf16.msra.mxu0 0
        %1150 = vmatprep.subr.bf16.mxu0 0
        %1151 = vmatpush1.bf16.msra.mxu0 0
        %1152 = vmatprep.subr.bf16.mxu0 0
        %1153 = vmatpush1.bf16.msra.mxu0 0
        %1154 = vmatprep.mubr.bf16.mxu0 %v1120
        %1155 = vmatmul.mubr.bf16.gmra.mrb[0].mxu0 %v1116
        %v1156 = vpop.f32.mrb[0].mxu0
        %v1157 = vadd.f32 %v1103, %v1156
        %v1158 = vpop.f32.mrb[0].mxu0
        %v1159 = vadd.f32 %v1103, %v1158
        %v1160 = vpop.f32.mrb[0].mxu0
        %v1161 = vadd.f32 %v1108, %v1160
        %v1162 = vpop.f32.mrb[0].mxu0
        %v1163 = vadd.f32 %v1108, %v1162
        %1164 = vdwg.mxu0
        %1165 = vmatprep.subr.bf16.mxu0 %v1064
        %1166 = vmatpush1.bf16.msra.mxu0 %v1063
        %1167 = vmatprep.subr.bf16.mxu0 %v1068
        %1168 = vmatpush1.bf16.msra.mxu0 %v1067
        %1169 = vmatprep.subr.bf16.mxu0 %v1072
        %1170 = vmatpush1.bf16.msra.mxu0 %v1071
        %1171 = vmatprep.subr.bf16.mxu0 %v1076
        %1172 = vmatpush1.bf16.msra.mxu0 %v1075
        %1173 = vmatprep.subr.bf16.mxu0 %v1080
        %1174 = vmatpush1.bf16.msra.mxu0 %v1079
        %1175 = vmatprep.subr.bf16.mxu0 %v1084
        %1176 = vmatpush1.bf16.msra.mxu0 %v1083
        %1177 = vmatprep.subr.bf16.mxu0 %v1088
        %1178 = vmatpush1.bf16.msra.mxu0 %v1087
        %1179 = vmatprep.subr.bf16.mxu0 %v1092
        %1180 = vmatpush1.bf16.msra.mxu0 %v1091
        %1181 = vmatprep.subr.bf16.mxu0 %v1096
        %1182 = vmatpush1.bf16.msra.mxu0 %v1095
        %1183 = vmatprep.subr.bf16.mxu0 0
        %1184 = vmatpush1.bf16.msra.mxu0 0
        %1185 = vmatprep.subr.bf16.mxu0 0
        %1186 = vmatpush1.bf16.msra.mxu0 0
        %1187 = vmatprep.subr.bf16.mxu0 0
        %1188 = vmatpush1.bf16.msra.mxu0 0
        %1189 = vmatprep.subr.bf16.mxu0 0
        %1190 = vmatpush1.bf16.msra.mxu0 0
        %1191 = vmatprep.subr.bf16.mxu0 0
        %1192 = vmatpush1.bf16.msra.mxu0 0
        %1193 = vmatprep.subr.bf16.mxu0 0
        %1194 = vmatpush1.bf16.msra.mxu0 0
        %1195 = vmatprep.subr.bf16.mxu0 0
        %1196 = vmatpush1.bf16.msra.mxu0 0
        %1197 = vmatprep.mubr.bf16.mxu0 %v1120
        %1198 = vmatmul.mubr.bf16.gmra.mrb[0].mxu0 %v1116
        %v1199 = vpop.f32.mrb[0].mxu0
        %v1200 = vadd.f32 %v1103, %v1199
        %v1201 = vpop.f32.mrb[0].mxu0
        %v1202 = vadd.f32 %v1103, %v1201
        %v1203 = vpop.f32.mrb[0].mxu0
        %v1204 = vadd.f32 %v1108, %v1203
        %v1205 = vpop.f32.mrb[0].mxu0
        %v1206 = vadd.f32 %v1108, %v1205
        %1207 = vdwg.mxu0
        %v1208 = vmax.f32 %v1157, 0.0
        %v1209 = vmax.f32 %v1159, 0.0
        %v1210 = vmax.f32 %v1200, 0.0
        %v1211 = vmax.f32 %v1202, 0.0
        %v1212 = vmax.f32 %v1161, 0.0
        %v1213 = vmax.f32 %v1163, 0.0
        %v1214 = vmax.f32 %v1204, 0.0
        %v1215 = vmax.f32 %v1206, 0.0
        %v1216 = vmul.f32 %v1208, %v769
        %v1217 = vmul.f32 %v1209, %v773
        %v1218 = vmul.f32 %v1210, %v777
        %v1219 = vmul.f32 %v1211, %v781
        %v1220 = vmul.f32 %v1212, %v769
        %v1221 = vmul.f32 %v1213, %v773
        %v1222 = vmul.f32 %v1214, %v777
        %v1223 = vmul.f32 %v1215, %v781
        %1224 = vrot.lane.b32.xlu0 %v1216, 17
        %v1225 = vpop.permute.xlu0 %1224
        %1226 = vrot.lane.b32.xlu0 %v1220, 17
        %v1227 = vpop.permute.xlu0 %1226
        %1228 = vrot.lane.b32.xlu0 %v1217, 17
        %v1229 = vpop.permute.xlu0 %1228
        %1230 = vrot.lane.b32.xlu0 %v1221, 17
        %v1231 = vpop.permute.xlu0 %1230
        %1232 = vrot.lane.b32.xlu0 %v1218, 17
        %v1233 = vpop.permute.xlu0 %1232
        %1234 = vrot.lane.b32.xlu0 %v1222, 17
        %v1235 = vpop.permute.xlu0 %1234
        %1236 = vrot.lane.b32.xlu0 %v1219, 17
        %v1237 = vpop.permute.xlu0 %1236
        %1238 = vrot.lane.b32.xlu0 %v1223, 17
        %v1239 = vpop.permute.xlu0 %1238
        %v1240 = vsel %vm336, %v1233, %v1237
        %v1241 = vsel %vm336, %v1235, %v1239
        %v1242 = vsel %vm336, %v1229, %v1233
        %v1243 = vsel %vm336, %v1231, %v1235
        %v1244 = vsel %vm336, %v1225, %v1229
        %v1245 = vsel %vm336, %v1227, %v1231
        %v1246 = vsel %vm336, %v1237, %v1225
        %v1247 = vsel %vm336, %v1239, %v1227
        %v1248 = vpack.c.bf16 %v1247, %v1246
        %v1249 = vpack.c.bf16 %v1245, %v1244
        %v1250 = vpack.c.bf16 %v1243, %v1242
        %v1251 = vpack.c.bf16 %v1241, %v1240
        %1252 = vst [vmem:[#allocation2] sm:$0xff] %v1248
        %1253 = vst [vmem:[#allocation2 + $0x8] sm:$0xff] %v1249
        %1254 = vst [vmem:[#allocation2 + $0x10] sm:$0xff] %v1250
        %1255 = vst [vmem:[#allocation2 + $0x18] sm:$0xff] %v1251
        %1256 = vrot.lane.b32.xlu0 %v1216, 16
        %v1257 = vpop.permute.xlu0 %1256
        %1258 = vrot.lane.b32.xlu0 %v1220, 16
        %v1259 = vpop.permute.xlu0 %1258
        %1260 = vrot.lane.b32.xlu0 %v1217, 16
        %v1261 = vpop.permute.xlu0 %1260
        %1262 = vrot.lane.b32.xlu0 %v1221, 16
        %v1263 = vpop.permute.xlu0 %1262
        %1264 = vrot.lane.b32.xlu0 %v1218, 16
        %v1265 = vpop.permute.xlu0 %1264
        %1266 = vrot.lane.b32.xlu0 %v1222, 16
        %v1267 = vpop.permute.xlu0 %1266
        %1268 = vrot.lane.b32.xlu0 %v1219, 16
        %v1269 = vpop.permute.xlu0 %1268
        %1270 = vrot.lane.b32.xlu0 %v1223, 16
        %v1271 = vpop.permute.xlu0 %1270
        %v1272 = vsel %vm369, %v1265, %v1269
        %v1273 = vsel %vm369, %v1267, %v1271
        %v1274 = vsel %vm369, %v1261, %v1265
        %v1275 = vsel %vm369, %v1263, %v1267
        %v1276 = vsel %vm369, %v1257, %v1261
        %v1277 = vsel %vm369, %v1259, %v1263
        %v1278 = vsel %vm369, %v1269, %v1257
        %v1279 = vsel %vm369, %v1271, %v1259
        %v1280 = vpack.c.bf16 %v1279, %v1278
        %v1281 = vpack.c.bf16 %v1277, %v1276
        %v1282 = vpack.c.bf16 %v1275, %v1274
        %v1283 = vpack.c.bf16 %v1273, %v1272
        %1284 = vst [vmem:[#allocation2 + $0x20] sm:$0xff] %v1280
        %1285 = vst [vmem:[#allocation2 + $0x28] sm:$0xff] %v1281
        %1286 = vst [vmem:[#allocation2 + $0x30] sm:$0xff] %v1282
        %1287 = vst [vmem:[#allocation2 + $0x38] sm:$0xff] %v1283
        %1288 = vrot.lane.b32.xlu0 %v1216, 15
        %v1289 = vpop.permute.xlu0 %1288
        %1290 = vrot.lane.b32.xlu0 %v1220, 15
        %v1291 = vpop.permute.xlu0 %1290
        %1292 = vrot.lane.b32.xlu0 %v1217, 15
        %v1293 = vpop.permute.xlu0 %1292
        %1294 = vrot.lane.b32.xlu0 %v1221, 15
        %v1295 = vpop.permute.xlu0 %1294
        %1296 = vrot.lane.b32.xlu0 %v1218, 15
        %v1297 = vpop.permute.xlu0 %1296
        %1298 = vrot.lane.b32.xlu0 %v1222, 15
        %v1299 = vpop.permute.xlu0 %1298
        %1300 = vrot.lane.b32.xlu0 %v1219, 15
        %v1301 = vpop.permute.xlu0 %1300
        %1302 = vrot.lane.b32.xlu0 %v1223, 15
        %v1303 = vpop.permute.xlu0 %1302
        %v1304 = vsel %vm402, %v1297, %v1301
        %v1305 = vsel %vm402, %v1299, %v1303
        %v1306 = vsel %vm402, %v1293, %v1297
        %v1307 = vsel %vm402, %v1295, %v1299
        %v1308 = vsel %vm402, %v1289, %v1293
        %v1309 = vsel %vm402, %v1291, %v1295
        %v1310 = vsel %vm402, %v1301, %v1289
        %v1311 = vsel %vm402, %v1303, %v1291
        %v1312 = vpack.c.bf16 %v1311, %v1310
        %v1313 = vpack.c.bf16 %v1309, %v1308
        %v1314 = vpack.c.bf16 %v1307, %v1306
        %v1315 = vpack.c.bf16 %v1305, %v1304
        %1316 = vst [vmem:[#allocation2 + $0x40] sm:$0xff] %v1312
        %1317 = vst [vmem:[#allocation2 + $0x48] sm:$0xff] %v1313
        %1318 = vst [vmem:[#allocation2 + $0x50] sm:$0xff] %v1314
        %1319 = vst [vmem:[#allocation2 + $0x58] sm:$0xff] %v1315
        %1320 = vrot.lane.b32.xlu0 %v1216, 1
        %v1321 = vpop.permute.xlu0 %1320
        %1322 = vrot.lane.b32.xlu0 %v1220, 1
        %v1323 = vpop.permute.xlu0 %1322
        %1324 = vrot.lane.b32.xlu0 %v1217, 1
        %v1325 = vpop.permute.xlu0 %1324
        %1326 = vrot.lane.b32.xlu0 %v1221, 1
        %v1327 = vpop.permute.xlu0 %1326
        %1328 = vrot.lane.b32.xlu0 %v1218, 1
        %v1329 = vpop.permute.xlu0 %1328
        %1330 = vrot.lane.b32.xlu0 %v1222, 1
        %v1331 = vpop.permute.xlu0 %1330
        %1332 = vrot.lane.b32.xlu0 %v1219, 1
        %v1333 = vpop.permute.xlu0 %1332
        %1334 = vrot.lane.b32.xlu0 %v1223, 1
        %v1335 = vpop.permute.xlu0 %1334
        %v1336 = vsel %vm435, %v1329, %v1333
        %v1337 = vsel %vm435, %v1331, %v1335
        %v1338 = vsel %vm435, %v1325, %v1329
        %v1339 = vsel %vm435, %v1327, %v1331
        %v1340 = vsel %vm435, %v1321, %v1325
        %v1341 = vsel %vm435, %v1323, %v1327
        %v1342 = vsel %vm435, %v1333, %v1321
        %v1343 = vsel %vm435, %v1335, %v1323
        %v1344 = vpack.c.bf16 %v1343, %v1342
        %v1345 = vpack.c.bf16 %v1341, %v1340
        %v1346 = vpack.c.bf16 %v1339, %v1338
        %v1347 = vpack.c.bf16 %v1337, %v1336
        %1348 = vst [vmem:[#allocation2 + $0x60] sm:$0xff] %v1344
        %1349 = vst [vmem:[#allocation2 + $0x68] sm:$0xff] %v1345
        %1350 = vst [vmem:[#allocation2 + $0x70] sm:$0xff] %v1346
        %1351 = vst [vmem:[#allocation2 + $0x78] sm:$0xff] %v1347
        %v1352 = vpack.c.bf16 %v1220, %v1216
        %v1353 = vpack.c.bf16 %v1221, %v1217
        %v1354 = vpack.c.bf16 %v1222, %v1218
        %v1355 = vpack.c.bf16 %v1223, %v1219
        %1356 = vst [vmem:[#allocation2 + $0x80] sm:$0xff] %v1352
        %1357 = vst [vmem:[#allocation2 + $0x88] sm:$0xff] %v1353
        %1358 = vst [vmem:[#allocation2 + $0x90] sm:$0xff] %v1354
        %1359 = vst [vmem:[#allocation2 + $0x98] sm:$0xff] %v1355
        %1360 = vrot.lane.b32.xlu0 %v1216, 127
        %v1361 = vpop.permute.xlu0 %1360
        %1362 = vrot.lane.b32.xlu0 %v1220, 127
        %v1363 = vpop.permute.xlu0 %1362
        %1364 = vrot.lane.b32.xlu0 %v1217, 127
        %v1365 = vpop.permute.xlu0 %1364
        %1366 = vrot.lane.b32.xlu0 %v1221, 127
        %v1367 = vpop.permute.xlu0 %1366
        %1368 = vrot.lane.b32.xlu0 %v1218, 127
        %v1369 = vpop.permute.xlu0 %1368
        %1370 = vrot.lane.b32.xlu0 %v1222, 127
        %v1371 = vpop.permute.xlu0 %1370
        %1372 = vrot.lane.b32.xlu0 %v1219, 127
        %v1373 = vpop.permute.xlu0 %1372
        %1374 = vrot.lane.b32.xlu0 %v1223, 127
        %v1375 = vpop.permute.xlu0 %1374
        %v1376 = vsel %vm492, %v1369, %v1373
        %v1377 = vsel %vm492, %v1371, %v1375
        %v1378 = vsel %vm492, %v1365, %v1369
        %v1379 = vsel %vm492, %v1367, %v1371
        %v1380 = vsel %vm492, %v1361, %v1365
        %v1381 = vsel %vm492, %v1363, %v1367
        %v1382 = vsel %vm492, %v1373, %v1361
        %v1383 = vsel %vm492, %v1375, %v1363
        %v1384 = vpack.c.bf16 %v1381, %v1380
        %v1385 = vpack.c.bf16 %v1379, %v1378
        %v1386 = vpack.c.bf16 %v1377, %v1376
        %v1387 = vpack.c.bf16 %v1383, %v1382
        %1388 = vst [vmem:[#allocation2 + $0xa0] sm:$0xff] %v1384
        %1389 = vst [vmem:[#allocation2 + $0xa8] sm:$0xff] %v1385
        %1390 = vst [vmem:[#allocation2 + $0xb0] sm:$0xff] %v1386
        %1391 = vst [vmem:[#allocation2 + $0xb8] sm:$0xff] %v1387
        %1392 = vrot.lane.b32.xlu0 %v1216, 113
        %v1393 = vpop.permute.xlu0 %1392
        %1394 = vrot.lane.b32.xlu0 %v1220, 113
        %v1395 = vpop.permute.xlu0 %1394
        %1396 = vrot.lane.b32.xlu0 %v1217, 113
        %v1397 = vpop.permute.xlu0 %1396
        %1398 = vrot.lane.b32.xlu0 %v1221, 113
        %v1399 = vpop.permute.xlu0 %1398
        %1400 = vrot.lane.b32.xlu0 %v1218, 113
        %v1401 = vpop.permute.xlu0 %1400
        %1402 = vrot.lane.b32.xlu0 %v1222, 113
        %v1403 = vpop.permute.xlu0 %1402
        %1404 = vrot.lane.b32.xlu0 %v1219, 113
        %v1405 = vpop.permute.xlu0 %1404
        %1406 = vrot.lane.b32.xlu0 %v1223, 113
        %v1407 = vpop.permute.xlu0 %1406
        %v1408 = vsel %vm525, %v1401, %v1405
        %v1409 = vsel %vm525, %v1403, %v1407
        %v1410 = vsel %vm525, %v1397, %v1401
        %v1411 = vsel %vm525, %v1399, %v1403
        %v1412 = vsel %vm525, %v1393, %v1397
        %v1413 = vsel %vm525, %v1395, %v1399
        %v1414 = vsel %vm525, %v1405, %v1393
        %v1415 = vsel %vm525, %v1407, %v1395
        %v1416 = vpack.c.bf16 %v1413, %v1412
        %v1417 = vpack.c.bf16 %v1411, %v1410
        %v1418 = vpack.c.bf16 %v1409, %v1408
        %v1419 = vpack.c.bf16 %v1415, %v1414
        %1420 = vst [vmem:[#allocation2 + $0xc0] sm:$0xff] %v1416
        %1421 = vst [vmem:[#allocation2 + $0xc8] sm:$0xff] %v1417
        %1422 = vst [vmem:[#allocation2 + $0xd0] sm:$0xff] %v1418
        %1423 = vst [vmem:[#allocation2 + $0xd8] sm:$0xff] %v1419
        %1424 = vrot.lane.b32.xlu0 %v1216, 112
        %v1425 = vpop.permute.xlu0 %1424
        %1426 = vrot.lane.b32.xlu0 %v1220, 112
        %v1427 = vpop.permute.xlu0 %1426
        %1428 = vrot.lane.b32.xlu0 %v1217, 112
        %v1429 = vpop.permute.xlu0 %1428
        %1430 = vrot.lane.b32.xlu0 %v1221, 112
        %v1431 = vpop.permute.xlu0 %1430
        %1432 = vrot.lane.b32.xlu0 %v1218, 112
        %v1433 = vpop.permute.xlu0 %1432
        %1434 = vrot.lane.b32.xlu0 %v1222, 112
        %v1435 = vpop.permute.xlu0 %1434
        %1436 = vrot.lane.b32.xlu0 %v1219, 112
        %v1437 = vpop.permute.xlu0 %1436
        %1438 = vrot.lane.b32.xlu0 %v1223, 112
        %v1439 = vpop.permute.xlu0 %1438
        %v1440 = vsel %vm558, %v1433, %v1437
        %v1441 = vsel %vm558, %v1435, %v1439
        %v1442 = vsel %vm558, %v1429, %v1433
        %v1443 = vsel %vm558, %v1431, %v1435
        %v1444 = vsel %vm558, %v1425, %v1429
        %v1445 = vsel %vm558, %v1427, %v1431
        %v1446 = vsel %vm558, %v1437, %v1425
        %v1447 = vsel %vm558, %v1439, %v1427
        %v1448 = vpack.c.bf16 %v1445, %v1444
        %v1449 = vpack.c.bf16 %v1443, %v1442
        %v1450 = vpack.c.bf16 %v1441, %v1440
        %v1451 = vpack.c.bf16 %v1447, %v1446
        %1452 = vst [vmem:[#allocation2 + $0xe0] sm:$0xff] %v1448
        %1453 = vst [vmem:[#allocation2 + $0xe8] sm:$0xff] %v1449
        %1454 = vst [vmem:[#allocation2 + $0xf0] sm:$0xff] %v1450
        %1455 = vst [vmem:[#allocation2 + $0xf8] sm:$0xff] %v1451
        %1456 = vrot.lane.b32.xlu0 %v1216, 111
        %v1457 = vpop.permute.xlu0 %1456
        %1458 = vrot.lane.b32.xlu0 %v1220, 111
        %v1459 = vpop.permute.xlu0 %1458
        %1460 = vrot.lane.b32.xlu0 %v1217, 111
        %v1461 = vpop.permute.xlu0 %1460
        %1462 = vrot.lane.b32.xlu0 %v1221, 111
        %v1463 = vpop.permute.xlu0 %1462
        %1464 = vrot.lane.b32.xlu0 %v1218, 111
        %v1465 = vpop.permute.xlu0 %1464
        %1466 = vrot.lane.b32.xlu0 %v1222, 111
        %v1467 = vpop.permute.xlu0 %1466
        %1468 = vrot.lane.b32.xlu0 %v1219, 111
        %v1469 = vpop.permute.xlu0 %1468
        %1470 = vrot.lane.b32.xlu0 %v1223, 111
        %v1471 = vpop.permute.xlu0 %1470
        %v1472 = vsel %vm591, %v1465, %v1469
        %v1473 = vsel %vm591, %v1467, %v1471
        %v1474 = vsel %vm591, %v1461, %v1465
        %v1475 = vsel %vm591, %v1463, %v1467
        %v1476 = vsel %vm591, %v1457, %v1461
        %v1477 = vsel %vm591, %v1459, %v1463
        %v1478 = vsel %vm591, %v1469, %v1457
        %v1479 = vsel %vm591, %v1471, %v1459
        %v1480 = vpack.c.bf16 %v1477, %v1476
        %v1481 = vpack.c.bf16 %v1475, %v1474
        %v1482 = vpack.c.bf16 %v1473, %v1472
        %v1483 = vpack.c.bf16 %v1479, %v1478
        %1484 = vst [vmem:[#allocation2 + $0x100] sm:$0xff] %v1480
        %1485 = vst [vmem:[#allocation2 + $0x108] sm:$0xff] %v1481
        %1486 = vst [vmem:[#allocation2 + $0x110] sm:$0xff] %v1482
        %1487 = vst [vmem:[#allocation2 + $0x118] sm:$0xff] %v1483
        %s1488 = scalar_lea.vmem %s2, 32
        %v1489 = vld [vmem:[%s1488] sm:$0xff]
        %v1490 = vld [vmem:[%s1488 + $0x8] sm:$0xff]
        %v1491 = vld [vmem:[#allocation2] sm:$0xff]
        %v1492 = vld [vmem:[#allocation2 + $0x8] sm:$0xff]
        %v1493 = vld [vmem:[#allocation2 + $0x10] sm:$0xff]
        %v1494 = vld [vmem:[#allocation2 + $0x18] sm:$0xff]
        %v1495 = vld [vmem:[#allocation2 + $0x20] sm:$0xff]
        %v1496 = vld [vmem:[#allocation2 + $0x28] sm:$0xff]
        %v1497 = vld [vmem:[#allocation2 + $0x30] sm:$0xff]
        %v1498 = vld [vmem:[#allocation2 + $0x38] sm:$0xff]
        %v1499 = vld [vmem:[#allocation2 + $0x40] sm:$0xff]
        %v1500 = vld [vmem:[#allocation2 + $0x48] sm:$0xff]
        %v1501 = vld [vmem:[#allocation2 + $0x50] sm:$0xff]
        %v1502 = vld [vmem:[#allocation2 + $0x58] sm:$0xff]
        %v1503 = vld [vmem:[#allocation2 + $0x60] sm:$0xff]
        %v1504 = vld [vmem:[#allocation2 + $0x68] sm:$0xff]
        %v1505 = vld [vmem:[#allocation2 + $0x70] sm:$0xff]
        %v1506 = vld [vmem:[#allocation2 + $0x78] sm:$0xff]
        %v1507 = vld [vmem:[#allocation2 + $0x80] sm:$0xff]
        %v1508 = vld [vmem:[#allocation2 + $0x88] sm:$0xff]
        %v1509 = vld [vmem:[#allocation2 + $0x90] sm:$0xff]
        %v1510 = vld [vmem:[#allocation2 + $0x98] sm:$0xff]
        %v1511 = vld [vmem:[#allocation2 + $0xa0] sm:$0xff]
        %v1512 = vld [vmem:[#allocation2 + $0xa8] sm:$0xff]
        %v1513 = vld [vmem:[#allocation2 + $0xb0] sm:$0xff]
        %v1514 = vld [vmem:[#allocation2 + $0xb8] sm:$0xff]
        %v1515 = vld [vmem:[#allocation2 + $0xc0] sm:$0xff]
        %v1516 = vld [vmem:[#allocation2 + $0xc8] sm:$0xff]
        %v1517 = vld [vmem:[#allocation2 + $0xd0] sm:$0xff]
        %v1518 = vld [vmem:[#allocation2 + $0xd8] sm:$0xff]
        %v1519 = vld [vmem:[#allocation2 + $0xe0] sm:$0xff]
        %v1520 = vld [vmem:[#allocation2 + $0xe8] sm:$0xff]
        %v1521 = vld [vmem:[#allocation2 + $0xf0] sm:$0xff]
        %v1522 = vld [vmem:[#allocation2 + $0xf8] sm:$0xff]
        %v1523 = vld [vmem:[#allocation2 + $0x100] sm:$0xff]
        %v1524 = vld [vmem:[#allocation2 + $0x108] sm:$0xff]
        %v1525 = vld [vmem:[#allocation2 + $0x110] sm:$0xff]
        %v1526 = vld [vmem:[#allocation2 + $0x118] sm:$0xff]
        %s1527 = scalar_lea.vmem %s3, 32
        %v1528 = vld [vmem:[%s1527] sm:$0xff]
        %v1529 = vld [vmem:[%s1527 + $0x8] sm:$0xff]
        %1531 = vset.pattern.permute.xlu0 0
        %1532 = vperm.xlu0 %1531, %v1528
        %v1533 = vpop.permute.xlu0 %1532
        %1536 = vset.pattern.permute.xlu0 0
        %1537 = vperm.xlu0 %1536, %v1529
        %v1538 = vpop.permute.xlu0 %1537
        %v1542 = vunpack.c.l.b16 %v1489
        %v1543 = vunpack.c.h.b16 %v1489
        %v1544 = vunpack.c.l.b16 %v1490
        %v1545 = vunpack.c.h.b16 %v1490
        %v1546 = vpack.c.b16 %v1544, %v1542
        %v1547 = vpack.c.b16 %v1545, %v1543
        %v1550 = vsel %vm667, %v1547, 0
        %1552 = vmatprep.subr.bf16.mxu0 %v1492
        %1553 = vmatpush1.bf16.msra.mxu0 %v1491
        %1554 = vmatprep.subr.bf16.mxu0 %v1496
        %1555 = vmatpush1.bf16.msra.mxu0 %v1495
        %1556 = vmatprep.subr.bf16.mxu0 %v1500
        %1557 = vmatpush1.bf16.msra.mxu0 %v1499
        %1558 = vmatprep.subr.bf16.mxu0 %v1504
        %1559 = vmatpush1.bf16.msra.mxu0 %v1503
        %1560 = vmatprep.subr.bf16.mxu0 %v1508
        %1561 = vmatpush1.bf16.msra.mxu0 %v1507
        %1562 = vmatprep.subr.bf16.mxu0 %v1512
        %1563 = vmatpush1.bf16.msra.mxu0 %v1511
        %1564 = vmatprep.subr.bf16.mxu0 %v1516
        %1565 = vmatpush1.bf16.msra.mxu0 %v1515
        %1566 = vmatprep.subr.bf16.mxu0 %v1520
        %1567 = vmatpush1.bf16.msra.mxu0 %v1519
        %1568 = vmatprep.subr.bf16.mxu0 %v1524
        %1569 = vmatpush1.bf16.msra.mxu0 %v1523
        %1570 = vmatprep.subr.bf16.mxu0 0
        %1571 = vmatpush1.bf16.msra.mxu0 0
        %1572 = vmatprep.subr.bf16.mxu0 0
        %1573 = vmatpush1.bf16.msra.mxu0 0
        %1574 = vmatprep.subr.bf16.mxu0 0
        %1575 = vmatpush1.bf16.msra.mxu0 0
        %1576 = vmatprep.subr.bf16.mxu0 0
        %1577 = vmatpush1.bf16.msra.mxu0 0
        %1578 = vmatprep.subr.bf16.mxu0 0
        %1579 = vmatpush1.bf16.msra.mxu0 0
        %1580 = vmatprep.subr.bf16.mxu0 0
        %1581 = vmatpush1.bf16.msra.mxu0 0
        %1582 = vmatprep.subr.bf16.mxu0 0
        %1583 = vmatpush1.bf16.msra.mxu0 0
        %1584 = vmatprep.mubr.bf16.mxu0 %v1550
        %1585 = vmatmul.mubr.bf16.gmra.mrb[0].mxu0 %v1546
        %v1586 = vpop.f32.mrb[0].mxu0
        %v1587 = vadd.f32 %v1533, %v1586
        %v1588 = vpop.f32.mrb[0].mxu0
        %v1589 = vadd.f32 %v1533, %v1588
        %v1590 = vpop.f32.mrb[0].mxu0
        %v1591 = vadd.f32 %v1538, %v1590
        %v1592 = vpop.f32.mrb[0].mxu0
        %v1593 = vadd.f32 %v1538, %v1592
        %1594 = vdwg.mxu0
        %1595 = vmatprep.subr.bf16.mxu0 %v1494
        %1596 = vmatpush1.bf16.msra.mxu0 %v1493
        %1597 = vmatprep.subr.bf16.mxu0 %v1498
        %1598 = vmatpush1.bf16.msra.mxu0 %v1497
        %1599 = vmatprep.subr.bf16.mxu0 %v1502
        %1600 = vmatpush1.bf16.msra.mxu0 %v1501
        %1601 = vmatprep.subr.bf16.mxu0 %v1506
        %1602 = vmatpush1.bf16.msra.mxu0 %v1505
        %1603 = vmatprep.subr.bf16.mxu0 %v1510
        %1604 = vmatpush1.bf16.msra.mxu0 %v1509
        %1605 = vmatprep.subr.bf16.mxu0 %v1514
        %1606 = vmatpush1.bf16.msra.mxu0 %v1513
        %1607 = vmatprep.subr.bf16.mxu0 %v1518
        %1608 = vmatpush1.bf16.msra.mxu0 %v1517
        %1609 = vmatprep.subr.bf16.mxu0 %v1522
        %1610 = vmatpush1.bf16.msra.mxu0 %v1521
        %1611 = vmatprep.subr.bf16.mxu0 %v1526
        %1612 = vmatpush1.bf16.msra.mxu0 %v1525
        %1613 = vmatprep.subr.bf16.mxu0 0
        %1614 = vmatpush1.bf16.msra.mxu0 0
        %1615 = vmatprep.subr.bf16.mxu0 0
        %1616 = vmatpush1.bf16.msra.mxu0 0
        %1617 = vmatprep.subr.bf16.mxu0 0
        %1618 = vmatpush1.bf16.msra.mxu0 0
        %1619 = vmatprep.subr.bf16.mxu0 0
        %1620 = vmatpush1.bf16.msra.mxu0 0
        %1621 = vmatprep.subr.bf16.mxu0 0
        %1622 = vmatpush1.bf16.msra.mxu0 0
        %1623 = vmatprep.subr.bf16.mxu0 0
        %1624 = vmatpush1.bf16.msra.mxu0 0
        %1625 = vmatprep.subr.bf16.mxu0 0
        %1626 = vmatpush1.bf16.msra.mxu0 0
        %1627 = vmatprep.mubr.bf16.mxu0 %v1550
        %1628 = vmatmul.mubr.bf16.gmra.mrb[0].mxu0 %v1546
        %v1629 = vpop.f32.mrb[0].mxu0
        %v1630 = vadd.f32 %v1533, %v1629
        %v1631 = vpop.f32.mrb[0].mxu0
        %v1632 = vadd.f32 %v1533, %v1631
        %v1633 = vpop.f32.mrb[0].mxu0
        %v1634 = vadd.f32 %v1538, %v1633
        %v1635 = vpop.f32.mrb[0].mxu0
        %v1636 = vadd.f32 %v1538, %v1635
        %1637 = vdwg.mxu0
        %v1638 = vmax.f32 %v1587, 0.0
        %v1639 = vmax.f32 %v1589, 0.0
        %v1640 = vmax.f32 %v1630, 0.0
        %v1641 = vmax.f32 %v1632, 0.0
        %v1642 = vmax.f32 %v1591, 0.0
        %v1643 = vmax.f32 %v1593, 0.0
        %v1644 = vmax.f32 %v1634, 0.0
        %v1645 = vmax.f32 %v1636, 0.0
        %v1646 = vmul.f32 %v1638, %v769
        %v1647 = vmul.f32 %v1639, %v773
        %v1648 = vmul.f32 %v1640, %v777
        %v1649 = vmul.f32 %v1641, %v781
        %v1650 = vmul.f32 %v1642, %v769
        %v1651 = vmul.f32 %v1643, %v773
        %v1652 = vmul.f32 %v1644, %v777
        %v1653 = vmul.f32 %v1645, %v781
        %1654 = vrot.lane.b32.xlu0 %v1646, 17
        %v1655 = vpop.permute.xlu0 %1654
        %1656 = vrot.lane.b32.xlu0 %v1650, 17
        %v1657 = vpop.permute.xlu0 %1656
        %1658 = vrot.lane.b32.xlu0 %v1647, 17
        %v1659 = vpop.permute.xlu0 %1658
        %1660 = vrot.lane.b32.xlu0 %v1651, 17
        %v1661 = vpop.permute.xlu0 %1660
        %1662 = vrot.lane.b32.xlu0 %v1648, 17
        %v1663 = vpop.permute.xlu0 %1662
        %1664 = vrot.lane.b32.xlu0 %v1652, 17
        %v1665 = vpop.permute.xlu0 %1664
        %1666 = vrot.lane.b32.xlu0 %v1649, 17
        %v1667 = vpop.permute.xlu0 %1666
        %1668 = vrot.lane.b32.xlu0 %v1653, 17
        %v1669 = vpop.permute.xlu0 %1668
        %v1670 = vsel %vm336, %v1663, %v1667
        %v1671 = vsel %vm336, %v1665, %v1669
        %v1672 = vsel %vm336, %v1659, %v1663
        %v1673 = vsel %vm336, %v1661, %v1665
        %v1674 = vsel %vm336, %v1655, %v1659
        %v1675 = vsel %vm336, %v1657, %v1661
        %v1676 = vsel %vm336, %v1667, %v1655
        %v1677 = vsel %vm336, %v1669, %v1657
        %v1678 = vpack.c.bf16 %v1677, %v1676
        %v1679 = vpack.c.bf16 %v1675, %v1674
        %v1680 = vpack.c.bf16 %v1673, %v1672
        %v1681 = vpack.c.bf16 %v1671, %v1670
        %1682 = vst [vmem:[#allocation2] sm:$0xff] %v1678
        %1683 = vst [vmem:[#allocation2 + $0x8] sm:$0xff] %v1679
        %1684 = vst [vmem:[#allocation2 + $0x10] sm:$0xff] %v1680
        %1685 = vst [vmem:[#allocation2 + $0x18] sm:$0xff] %v1681
        %1686 = vrot.lane.b32.xlu0 %v1646, 16
        %v1687 = vpop.permute.xlu0 %1686
        %1688 = vrot.lane.b32.xlu0 %v1650, 16
        %v1689 = vpop.permute.xlu0 %1688
        %1690 = vrot.lane.b32.xlu0 %v1647, 16
        %v1691 = vpop.permute.xlu0 %1690
        %1692 = vrot.lane.b32.xlu0 %v1651, 16
        %v1693 = vpop.permute.xlu0 %1692
        %1694 = vrot.lane.b32.xlu0 %v1648, 16
        %v1695 = vpop.permute.xlu0 %1694
        %1696 = vrot.lane.b32.xlu0 %v1652, 16
        %v1697 = vpop.permute.xlu0 %1696
        %1698 = vrot.lane.b32.xlu0 %v1649, 16
        %v1699 = vpop.permute.xlu0 %1698
        %1700 = vrot.lane.b32.xlu0 %v1653, 16
        %v1701 = vpop.permute.xlu0 %1700
        %v1702 = vsel %vm369, %v1695, %v1699
        %v1703 = vsel %vm369, %v1697, %v1701
        %v1704 = vsel %vm369, %v1691, %v1695
        %v1705 = vsel %vm369, %v1693, %v1697
        %v1706 = vsel %vm369, %v1687, %v1691
        %v1707 = vsel %vm369, %v1689, %v1693
        %v1708 = vsel %vm369, %v1699, %v1687
        %v1709 = vsel %vm369, %v1701, %v1689
        %v1710 = vpack.c.bf16 %v1709, %v1708
        %v1711 = vpack.c.bf16 %v1707, %v1706
        %v1712 = vpack.c.bf16 %v1705, %v1704
        %v1713 = vpack.c.bf16 %v1703, %v1702
        %1714 = vst [vmem:[#allocation2 + $0x20] sm:$0xff] %v1710
        %1715 = vst [vmem:[#allocation2 + $0x28] sm:$0xff] %v1711
        %1716 = vst [vmem:[#allocation2 + $0x30] sm:$0xff] %v1712
        %1717 = vst [vmem:[#allocation2 + $0x38] sm:$0xff] %v1713
        %1718 = vrot.lane.b32.xlu0 %v1646, 15
        %v1719 = vpop.permute.xlu0 %1718
        %1720 = vrot.lane.b32.xlu0 %v1650, 15
        %v1721 = vpop.permute.xlu0 %1720
        %1722 = vrot.lane.b32.xlu0 %v1647, 15
        %v1723 = vpop.permute.xlu0 %1722
        %1724 = vrot.lane.b32.xlu0 %v1651, 15
        %v1725 = vpop.permute.xlu0 %1724
        %1726 = vrot.lane.b32.xlu0 %v1648, 15
        %v1727 = vpop.permute.xlu0 %1726
        %1728 = vrot.lane.b32.xlu0 %v1652, 15
        %v1729 = vpop.permute.xlu0 %1728
        %1730 = vrot.lane.b32.xlu0 %v1649, 15
        %v1731 = vpop.permute.xlu0 %1730
        %1732 = vrot.lane.b32.xlu0 %v1653, 15
        %v1733 = vpop.permute.xlu0 %1732
        %v1734 = vsel %vm402, %v1727, %v1731
        %v1735 = vsel %vm402, %v1729, %v1733
        %v1736 = vsel %vm402, %v1723, %v1727
        %v1737 = vsel %vm402, %v1725, %v1729
        %v1738 = vsel %vm402, %v1719, %v1723
        %v1739 = vsel %vm402, %v1721, %v1725
        %v1740 = vsel %vm402, %v1731, %v1719
        %v1741 = vsel %vm402, %v1733, %v1721
        %v1742 = vpack.c.bf16 %v1741, %v1740
        %v1743 = vpack.c.bf16 %v1739, %v1738
        %v1744 = vpack.c.bf16 %v1737, %v1736
        %v1745 = vpack.c.bf16 %v1735, %v1734
        %1746 = vst [vmem:[#allocation2 + $0x40] sm:$0xff] %v1742
        %1747 = vst [vmem:[#allocation2 + $0x48] sm:$0xff] %v1743
        %1748 = vst [vmem:[#allocation2 + $0x50] sm:$0xff] %v1744
        %1749 = vst [vmem:[#allocation2 + $0x58] sm:$0xff] %v1745
        %1750 = vrot.lane.b32.xlu0 %v1646, 1
        %v1751 = vpop.permute.xlu0 %1750
        %1752 = vrot.lane.b32.xlu0 %v1650, 1
        %v1753 = vpop.permute.xlu0 %1752
        %1754 = vrot.lane.b32.xlu0 %v1647, 1
        %v1755 = vpop.permute.xlu0 %1754
        %1756 = vrot.lane.b32.xlu0 %v1651, 1
        %v1757 = vpop.permute.xlu0 %1756
        %1758 = vrot.lane.b32.xlu0 %v1648, 1
        %v1759 = vpop.permute.xlu0 %1758
        %1760 = vrot.lane.b32.xlu0 %v1652, 1
        %v1761 = vpop.permute.xlu0 %1760
        %1762 = vrot.lane.b32.xlu0 %v1649, 1
        %v1763 = vpop.permute.xlu0 %1762
        %1764 = vrot.lane.b32.xlu0 %v1653, 1
        %v1765 = vpop.permute.xlu0 %1764
        %v1766 = vsel %vm435, %v1759, %v1763
        %v1767 = vsel %vm435, %v1761, %v1765
        %v1768 = vsel %vm435, %v1755, %v1759
        %v1769 = vsel %vm435, %v1757, %v1761
        %v1770 = vsel %vm435, %v1751, %v1755
        %v1771 = vsel %vm435, %v1753, %v1757
        %v1772 = vsel %vm435, %v1763, %v1751
        %v1773 = vsel %vm435, %v1765, %v1753
        %v1774 = vpack.c.bf16 %v1773, %v1772
        %v1775 = vpack.c.bf16 %v1771, %v1770
        %v1776 = vpack.c.bf16 %v1769, %v1768
        %v1777 = vpack.c.bf16 %v1767, %v1766
        %1778 = vst [vmem:[#allocation2 + $0x60] sm:$0xff] %v1774
        %1779 = vst [vmem:[#allocation2 + $0x68] sm:$0xff] %v1775
        %1780 = vst [vmem:[#allocation2 + $0x70] sm:$0xff] %v1776
        %1781 = vst [vmem:[#allocation2 + $0x78] sm:$0xff] %v1777
        %v1782 = vpack.c.bf16 %v1650, %v1646
        %v1783 = vpack.c.bf16 %v1651, %v1647
        %v1784 = vpack.c.bf16 %v1652, %v1648
        %v1785 = vpack.c.bf16 %v1653, %v1649
        %1786 = vst [vmem:[#allocation2 + $0x80] sm:$0xff] %v1782
        %1787 = vst [vmem:[#allocation2 + $0x88] sm:$0xff] %v1783
        %1788 = vst [vmem:[#allocation2 + $0x90] sm:$0xff] %v1784
        %1789 = vst [vmem:[#allocation2 + $0x98] sm:$0xff] %v1785
        %1790 = vrot.lane.b32.xlu0 %v1646, 127
        %v1791 = vpop.permute.xlu0 %1790
        %1792 = vrot.lane.b32.xlu0 %v1650, 127
        %v1793 = vpop.permute.xlu0 %1792
        %1794 = vrot.lane.b32.xlu0 %v1647, 127
        %v1795 = vpop.permute.xlu0 %1794
        %1796 = vrot.lane.b32.xlu0 %v1651, 127
        %v1797 = vpop.permute.xlu0 %1796
        %1798 = vrot.lane.b32.xlu0 %v1648, 127
        %v1799 = vpop.permute.xlu0 %1798
        %1800 = vrot.lane.b32.xlu0 %v1652, 127
        %v1801 = vpop.permute.xlu0 %1800
        %1802 = vrot.lane.b32.xlu0 %v1649, 127
        %v1803 = vpop.permute.xlu0 %1802
        %1804 = vrot.lane.b32.xlu0 %v1653, 127
        %v1805 = vpop.permute.xlu0 %1804
        %v1806 = vsel %vm492, %v1799, %v1803
        %v1807 = vsel %vm492, %v1801, %v1805
        %v1808 = vsel %vm492, %v1795, %v1799
        %v1809 = vsel %vm492, %v1797, %v1801
        %v1810 = vsel %vm492, %v1791, %v1795
        %v1811 = vsel %vm492, %v1793, %v1797
        %v1812 = vsel %vm492, %v1803, %v1791
        %v1813 = vsel %vm492, %v1805, %v1793
        %v1814 = vpack.c.bf16 %v1811, %v1810
        %v1815 = vpack.c.bf16 %v1809, %v1808
        %v1816 = vpack.c.bf16 %v1807, %v1806
        %v1817 = vpack.c.bf16 %v1813, %v1812
        %1818 = vst [vmem:[#allocation2 + $0xa0] sm:$0xff] %v1814
        %1819 = vst [vmem:[#allocation2 + $0xa8] sm:$0xff] %v1815
        %1820 = vst [vmem:[#allocation2 + $0xb0] sm:$0xff] %v1816
        %1821 = vst [vmem:[#allocation2 + $0xb8] sm:$0xff] %v1817
        %1822 = vrot.lane.b32.xlu0 %v1646, 113
        %v1823 = vpop.permute.xlu0 %1822
        %1824 = vrot.lane.b32.xlu0 %v1650, 113
        %v1825 = vpop.permute.xlu0 %1824
        %1826 = vrot.lane.b32.xlu0 %v1647, 113
        %v1827 = vpop.permute.xlu0 %1826
        %1828 = vrot.lane.b32.xlu0 %v1651, 113
        %v1829 = vpop.permute.xlu0 %1828
        %1830 = vrot.lane.b32.xlu0 %v1648, 113
        %v1831 = vpop.permute.xlu0 %1830
        %1832 = vrot.lane.b32.xlu0 %v1652, 113
        %v1833 = vpop.permute.xlu0 %1832
        %1834 = vrot.lane.b32.xlu0 %v1649, 113
        %v1835 = vpop.permute.xlu0 %1834
        %1836 = vrot.lane.b32.xlu0 %v1653, 113
        %v1837 = vpop.permute.xlu0 %1836
        %v1838 = vsel %vm525, %v1831, %v1835
        %v1839 = vsel %vm525, %v1833, %v1837
        %v1840 = vsel %vm525, %v1827, %v1831
        %v1841 = vsel %vm525, %v1829, %v1833
        %v1842 = vsel %vm525, %v1823, %v1827
        %v1843 = vsel %vm525, %v1825, %v1829
        %v1844 = vsel %vm525, %v1835, %v1823
        %v1845 = vsel %vm525, %v1837, %v1825
        %v1846 = vpack.c.bf16 %v1843, %v1842
        %v1847 = vpack.c.bf16 %v1841, %v1840
        %v1848 = vpack.c.bf16 %v1839, %v1838
        %v1849 = vpack.c.bf16 %v1845, %v1844
        %1850 = vst [vmem:[#allocation2 + $0xc0] sm:$0xff] %v1846
        %1851 = vst [vmem:[#allocation2 + $0xc8] sm:$0xff] %v1847
        %1852 = vst [vmem:[#allocation2 + $0xd0] sm:$0xff] %v1848
        %1853 = vst [vmem:[#allocation2 + $0xd8] sm:$0xff] %v1849
        %1854 = vrot.lane.b32.xlu0 %v1646, 112
        %v1855 = vpop.permute.xlu0 %1854
        %1856 = vrot.lane.b32.xlu0 %v1650, 112
        %v1857 = vpop.permute.xlu0 %1856
        %1858 = vrot.lane.b32.xlu0 %v1647, 112
        %v1859 = vpop.permute.xlu0 %1858
        %1860 = vrot.lane.b32.xlu0 %v1651, 112
        %v1861 = vpop.permute.xlu0 %1860
        %1862 = vrot.lane.b32.xlu0 %v1648, 112
        %v1863 = vpop.permute.xlu0 %1862
        %1864 = vrot.lane.b32.xlu0 %v1652, 112
        %v1865 = vpop.permute.xlu0 %1864
        %1866 = vrot.lane.b32.xlu0 %v1649, 112
        %v1867 = vpop.permute.xlu0 %1866
        %1868 = vrot.lane.b32.xlu0 %v1653, 112
        %v1869 = vpop.permute.xlu0 %1868
        %v1870 = vsel %vm558, %v1863, %v1867
        %v1871 = vsel %vm558, %v1865, %v1869
        %v1872 = vsel %vm558, %v1859, %v1863
        %v1873 = vsel %vm558, %v1861, %v1865
        %v1874 = vsel %vm558, %v1855, %v1859
        %v1875 = vsel %vm558, %v1857, %v1861
        %v1876 = vsel %vm558, %v1867, %v1855
        %v1877 = vsel %vm558, %v1869, %v1857
        %v1878 = vpack.c.bf16 %v1875, %v1874
        %v1879 = vpack.c.bf16 %v1873, %v1872
        %v1880 = vpack.c.bf16 %v1871, %v1870
        %v1881 = vpack.c.bf16 %v1877, %v1876
        %1882 = vst [vmem:[#allocation2 + $0xe0] sm:$0xff] %v1878
        %1883 = vst [vmem:[#allocation2 + $0xe8] sm:$0xff] %v1879
        %1884 = vst [vmem:[#allocation2 + $0xf0] sm:$0xff] %v1880
        %1885 = vst [vmem:[#allocation2 + $0xf8] sm:$0xff] %v1881
        %1886 = vrot.lane.b32.xlu0 %v1646, 111
        %v1887 = vpop.permute.xlu0 %1886
        %1888 = vrot.lane.b32.xlu0 %v1650, 111
        %v1889 = vpop.permute.xlu0 %1888
        %1890 = vrot.lane.b32.xlu0 %v1647, 111
        %v1891 = vpop.permute.xlu0 %1890
        %1892 = vrot.lane.b32.xlu0 %v1651, 111
        %v1893 = vpop.permute.xlu0 %1892
        %1894 = vrot.lane.b32.xlu0 %v1648, 111
        %v1895 = vpop.permute.xlu0 %1894
        %1896 = vrot.lane.b32.xlu0 %v1652, 111
        %v1897 = vpop.permute.xlu0 %1896
        %1898 = vrot.lane.b32.xlu0 %v1649, 111
        %v1899 = vpop.permute.xlu0 %1898
        %1900 = vrot.lane.b32.xlu0 %v1653, 111
        %v1901 = vpop.permute.xlu0 %1900
        %v1902 = vsel %vm591, %v1895, %v1899
        %v1903 = vsel %vm591, %v1897, %v1901
        %v1904 = vsel %vm591, %v1891, %v1895
        %v1905 = vsel %vm591, %v1893, %v1897
        %v1906 = vsel %vm591, %v1887, %v1891
        %v1907 = vsel %vm591, %v1889, %v1893
        %v1908 = vsel %vm591, %v1899, %v1887
        %v1909 = vsel %vm591, %v1901, %v1889
        %v1910 = vpack.c.bf16 %v1907, %v1906
        %v1911 = vpack.c.bf16 %v1905, %v1904
        %v1912 = vpack.c.bf16 %v1903, %v1902
        %v1913 = vpack.c.bf16 %v1909, %v1908
        %1914 = vst [vmem:[#allocation2 + $0x100] sm:$0xff] %v1910
        %1915 = vst [vmem:[#allocation2 + $0x108] sm:$0xff] %v1911
        %1916 = vst [vmem:[#allocation2 + $0x110] sm:$0xff] %v1912
        %1917 = vst [vmem:[#allocation2 + $0x118] sm:$0xff] %v1913
        %s1918 = scalar_lea.vmem %s2, 48
        %v1919 = vld [vmem:[%s1918] sm:$0xff]
        %v1920 = vld [vmem:[%s1918 + $0x8] sm:$0xff]
        %v1921 = vld [vmem:[#allocation2] sm:$0xff]
        %v1922 = vld [vmem:[#allocation2 + $0x8] sm:$0xff]
        %v1923 = vld [vmem:[#allocation2 + $0x10] sm:$0xff]
        %v1924 = vld [vmem:[#allocation2 + $0x18] sm:$0xff]
        %v1925 = vld [vmem:[#allocation2 + $0x20] sm:$0xff]
        %v1926 = vld [vmem:[#allocation2 + $0x28] sm:$0xff]
        %v1927 = vld [vmem:[#allocation2 + $0x30] sm:$0xff]
        %v1928 = vld [vmem:[#allocation2 + $0x38] sm:$0xff]
        %v1929 = vld [vmem:[#allocation2 + $0x40] sm:$0xff]
        %v1930 = vld [vmem:[#allocation2 + $0x48] sm:$0xff]
        %v1931 = vld [vmem:[#allocation2 + $0x50] sm:$0xff]
        %v1932 = vld [vmem:[#allocation2 + $0x58] sm:$0xff]
        %v1933 = vld [vmem:[#allocation2 + $0x60] sm:$0xff]
        %v1934 = vld [vmem:[#allocation2 + $0x68] sm:$0xff]
        %v1935 = vld [vmem:[#allocation2 + $0x70] sm:$0xff]
        %v1936 = vld [vmem:[#allocation2 + $0x78] sm:$0xff]
        %v1937 = vld [vmem:[#allocation2 + $0x80] sm:$0xff]
        %v1938 = vld [vmem:[#allocation2 + $0x88] sm:$0xff]
        %v1939 = vld [vmem:[#allocation2 + $0x90] sm:$0xff]
        %v1940 = vld [vmem:[#allocation2 + $0x98] sm:$0xff]
        %v1941 = vld [vmem:[#allocation2 + $0xa0] sm:$0xff]
        %v1942 = vld [vmem:[#allocation2 + $0xa8] sm:$0xff]
        %v1943 = vld [vmem:[#allocation2 + $0xb0] sm:$0xff]
        %v1944 = vld [vmem:[#allocation2 + $0xb8] sm:$0xff]
        %v1945 = vld [vmem:[#allocation2 + $0xc0] sm:$0xff]
        %v1946 = vld [vmem:[#allocation2 + $0xc8] sm:$0xff]
        %v1947 = vld [vmem:[#allocation2 + $0xd0] sm:$0xff]
        %v1948 = vld [vmem:[#allocation2 + $0xd8] sm:$0xff]
        %v1949 = vld [vmem:[#allocation2 + $0xe0] sm:$0xff]
        %v1950 = vld [vmem:[#allocation2 + $0xe8] sm:$0xff]
        %v1951 = vld [vmem:[#allocation2 + $0xf0] sm:$0xff]
        %v1952 = vld [vmem:[#allocation2 + $0xf8] sm:$0xff]
        %v1953 = vld [vmem:[#allocation2 + $0x100] sm:$0xff]
        %v1954 = vld [vmem:[#allocation2 + $0x108] sm:$0xff]
        %v1955 = vld [vmem:[#allocation2 + $0x110] sm:$0xff]
        %v1956 = vld [vmem:[#allocation2 + $0x118] sm:$0xff]
        %s1957 = scalar_lea.vmem %s3, 48
        %v1958 = vld [vmem:[%s1957] sm:$0xff]
        %v1959 = vld [vmem:[%s1957 + $0x8] sm:$0xff]
        %1961 = vset.pattern.permute.xlu0 0
        %1962 = vperm.xlu0 %1961, %v1958
        %v1963 = vpop.permute.xlu0 %1962
        %1966 = vset.pattern.permute.xlu0 0
        %1967 = vperm.xlu0 %1966, %v1959
        %v1968 = vpop.permute.xlu0 %1967
        %v1972 = vunpack.c.l.b16 %v1919
        %v1973 = vunpack.c.h.b16 %v1919
        %v1974 = vunpack.c.l.b16 %v1920
        %v1975 = vunpack.c.h.b16 %v1920
        %v1976 = vpack.c.b16 %v1974, %v1972
        %v1977 = vpack.c.b16 %v1975, %v1973
        %v1980 = vsel %vm667, %v1977, 0
        %1982 = vmatprep.subr.bf16.mxu0 %v1922
        %1983 = vmatpush1.bf16.msra.mxu0 %v1921
        %1984 = vmatprep.subr.bf16.mxu0 %v1926
        %1985 = vmatpush1.bf16.msra.mxu0 %v1925
        %1986 = vmatprep.subr.bf16.mxu0 %v1930
        %1987 = vmatpush1.bf16.msra.mxu0 %v1929
        %1988 = vmatprep.subr.bf16.mxu0 %v1934
        %1989 = vmatpush1.bf16.msra.mxu0 %v1933
        %1990 = vmatprep.subr.bf16.mxu0 %v1938
        %1991 = vmatpush1.bf16.msra.mxu0 %v1937
        %1992 = vmatprep.subr.bf16.mxu0 %v1942
        %1993 = vmatpush1.bf16.msra.mxu0 %v1941
        %1994 = vmatprep.subr.bf16.mxu0 %v1946
        %1995 = vmatpush1.bf16.msra.mxu0 %v1945
        %1996 = vmatprep.subr.bf16.mxu0 %v1950
        %1997 = vmatpush1.bf16.msra.mxu0 %v1949
        %1998 = vmatprep.subr.bf16.mxu0 %v1954
        %1999 = vmatpush1.bf16.msra.mxu0 %v1953
        %2000 = vmatprep.subr.bf16.mxu0 0
        %2001 = vmatpush1.bf16.msra.mxu0 0
        %2002 = vmatprep.subr.bf16.mxu0 0
        %2003 = vmatpush1.bf16.msra.mxu0 0
        %2004 = vmatprep.subr.bf16.mxu0 0
        %2005 = vmatpush1.bf16.msra.mxu0 0
        %2006 = vmatprep.subr.bf16.mxu0 0
        %2007 = vmatpush1.bf16.msra.mxu0 0
        %2008 = vmatprep.subr.bf16.mxu0 0
        %2009 = vmatpush1.bf16.msra.mxu0 0
        %2010 = vmatprep.subr.bf16.mxu0 0
        %2011 = vmatpush1.bf16.msra.mxu0 0
        %2012 = vmatprep.subr.bf16.mxu0 0
        %2013 = vmatpush1.bf16.msra.mxu0 0
        %2014 = vmatprep.mubr.bf16.mxu0 %v1980
        %2015 = vmatmul.mubr.bf16.gmra.mrb[0].mxu0 %v1976
        %v2016 = vpop.f32.mrb[0].mxu0
        %v2017 = vadd.f32 %v1963, %v2016
        %v2018 = vpop.f32.mrb[0].mxu0
        %v2019 = vadd.f32 %v1963, %v2018
        %v2020 = vpop.f32.mrb[0].mxu0
        %v2021 = vadd.f32 %v1968, %v2020
        %v2022 = vpop.f32.mrb[0].mxu0
        %v2023 = vadd.f32 %v1968, %v2022
        %2024 = vdwg.mxu0
        %2025 = vmatprep.subr.bf16.mxu0 %v1924
        %2026 = vmatpush1.bf16.msra.mxu0 %v1923
        %2027 = vmatprep.subr.bf16.mxu0 %v1928
        %2028 = vmatpush1.bf16.msra.mxu0 %v1927
        %2029 = vmatprep.subr.bf16.mxu0 %v1932
        %2030 = vmatpush1.bf16.msra.mxu0 %v1931
        %2031 = vmatprep.subr.bf16.mxu0 %v1936
        %2032 = vmatpush1.bf16.msra.mxu0 %v1935
        %2033 = vmatprep.subr.bf16.mxu0 %v1940
        %2034 = vmatpush1.bf16.msra.mxu0 %v1939
        %2035 = vmatprep.subr.bf16.mxu0 %v1944
        %2036 = vmatpush1.bf16.msra.mxu0 %v1943
        %2037 = vmatprep.subr.bf16.mxu0 %v1948
        %2038 = vmatpush1.bf16.msra.mxu0 %v1947
        %2039 = vmatprep.subr.bf16.mxu0 %v1952
        %2040 = vmatpush1.bf16.msra.mxu0 %v1951
        %2041 = vmatprep.subr.bf16.mxu0 %v1956
        %2042 = vmatpush1.bf16.msra.mxu0 %v1955
        %2043 = vmatprep.subr.bf16.mxu0 0
        %2044 = vmatpush1.bf16.msra.mxu0 0
        %2045 = vmatprep.subr.bf16.mxu0 0
        %2046 = vmatpush1.bf16.msra.mxu0 0
        %2047 = vmatprep.subr.bf16.mxu0 0
        %2048 = vmatpush1.bf16.msra.mxu0 0
        %2049 = vmatprep.subr.bf16.mxu0 0
        %2050 = vmatpush1.bf16.msra.mxu0 0
        %2051 = vmatprep.subr.bf16.mxu0 0
        %2052 = vmatpush1.bf16.msra.mxu0 0
        %2053 = vmatprep.subr.bf16.mxu0 0
        %2054 = vmatpush1.bf16.msra.mxu0 0
        %2055 = vmatprep.subr.bf16.mxu0 0
        %2056 = vmatpush1.bf16.msra.mxu0 0
        %2057 = vmatprep.mubr.bf16.mxu0 %v1980
        %2058 = vmatmul.mubr.bf16.gmra.mrb[0].mxu0 %v1976
        %v2059 = vpop.f32.mrb[0].mxu0
        %v2060 = vadd.f32 %v1963, %v2059
        %v2061 = vpop.f32.mrb[0].mxu0
        %v2062 = vadd.f32 %v1963, %v2061
        %v2063 = vpop.f32.mrb[0].mxu0
        %v2064 = vadd.f32 %v1968, %v2063
        %v2065 = vpop.f32.mrb[0].mxu0
        %v2066 = vadd.f32 %v1968, %v2065
        %2067 = vdwg.mxu0
        %v2068 = vmax.f32 %v2017, 0.0
        %v2069 = vmax.f32 %v2019, 0.0
        %v2070 = vmax.f32 %v2060, 0.0
        %v2071 = vmax.f32 %v2062, 0.0
        %v2072 = vmax.f32 %v2021, 0.0
        %v2073 = vmax.f32 %v2023, 0.0
        %v2074 = vmax.f32 %v2064, 0.0
        %v2075 = vmax.f32 %v2066, 0.0
        %v2076 = vmul.f32 %v2068, %v769
        %v2077 = vmul.f32 %v2069, %v773
        %v2078 = vmul.f32 %v2070, %v777
        %v2079 = vmul.f32 %v2071, %v781
        %v2080 = vmul.f32 %v2072, %v769
        %v2081 = vmul.f32 %v2073, %v773
        %v2082 = vmul.f32 %v2074, %v777
        %v2083 = vmul.f32 %v2075, %v781
        %v2084 = vld [vmem:[%s4] sm:$0xf]
        %v2085 = vld [vmem:[%s4 + $0x4] sm:$0xf]
        %v2086 = vld [vmem:[%s4 + $0x8] sm:$0xf]
        %v2087 = vld [vmem:[%s4 + $0xc] sm:$0xf]
        %v2088 = vld [vmem:[%s4 + $0x10] sm:$0xf]
        %v2089 = vld [vmem:[%s4 + $0x14] sm:$0xf]
        %v2090 = vld [vmem:[%s4 + $0x18] sm:$0xf]
        %v2091 = vld [vmem:[%s4 + $0x1c] sm:$0xf]
        %v2092 = vpack.c.bf16 %v2080, %v2076
        %v2093 = vpack.c.bf16 %v2081, %v2077
        %v2094 = vpack.c.bf16 %v2082, %v2078
        %v2095 = vpack.c.bf16 %v2083, %v2079
        %v2096 = vld [vmem:[%s5] sm:$0xff]
        %v2097 = vld [vmem:[%s5 + $0x8] sm:$0xff]
        %v2098 = vld [vmem:[%s5 + $0x10] sm:$0xff]
        %v2099 = vld [vmem:[%s5 + $0x18] sm:$0xff]
        %v2100 = vld [vmem:[%s5 + $0x20] sm:$0xff]
        %v2101 = vld [vmem:[%s5 + $0x28] sm:$0xff]
        %v2102 = vld [vmem:[%s5 + $0x30] sm:$0xff]
        %v2103 = vld [vmem:[%s5 + $0x38] sm:$0xff]
        %2105 = vset.pattern.permute.xlu0 0
        %2106 = vperm.xlu0 %2105, %v2096
        %v2107 = vpop.permute.xlu0 %2106
        %2110 = vset.pattern.permute.xlu0 0
        %2111 = vperm.xlu0 %2110, %v2097
        %v2112 = vpop.permute.xlu0 %2111
        %2115 = vset.pattern.permute.xlu0 0
        %2116 = vperm.xlu0 %2115, %v2098
        %v2117 = vpop.permute.xlu0 %2116
        %2120 = vset.pattern.permute.xlu0 0
        %2121 = vperm.xlu0 %2120, %v2099
        %v2122 = vpop.permute.xlu0 %2121
        %2125 = vset.pattern.permute.xlu0 0
        %2126 = vperm.xlu0 %2125, %v2100
        %v2127 = vpop.permute.xlu0 %2126
        %2130 = vset.pattern.permute.xlu0 0
        %2131 = vperm.xlu0 %2130, %v2101
        %v2132 = vpop.permute.xlu0 %2131
        %2135 = vset.pattern.permute.xlu0 0
        %2136 = vperm.xlu0 %2135, %v2102
        %v2137 = vpop.permute.xlu0 %2136
        %2140 = vset.pattern.permute.xlu0 0
        %2141 = vperm.xlu0 %2140, %v2103
        %v2142 = vpop.permute.xlu0 %2141
        %v2152 = vunpack.c.l.b16 %v2084
        %v2153 = vunpack.c.l.b16 %v2085
        %v2154 = vunpack.c.l.b16 %v2086
        %v2155 = vunpack.c.l.b16 %v2087
        %v2156 = vunpack.c.l.b16 %v2088
        %v2157 = vunpack.c.l.b16 %v2089
        %v2158 = vunpack.c.l.b16 %v2090
        %v2159 = vunpack.c.l.b16 %v2091
        %v2160 = vpack.c.b16 %v2153, %v2152
        %v2161 = vpack.c.b16 %v2155, %v2154
        %v2162 = vpack.c.b16 %v2157, %v2156
        %v2163 = vpack.c.b16 %v2159, %v2158
        %v2165 = vsel %vm667, %v2160, 0
        %v2168 = vsel %vm667, %v2161, 0
        %v2171 = vsel %vm667, %v2162, 0
        %v2174 = vsel %vm667, %v2163, 0
        %2176 = vmatprep.subr.bf16.mxu0 %v2093
        %2177 = vmatpush1.bf16.msra.mxu0 %v2092
        %2178 = vmatprep.subr.bf16.mxu0 0
        %2179 = vmatpush1.bf16.msra.mxu0 0
        %2180 = vmatprep.subr.bf16.mxu0 0
        %2181 = vmatpush1.bf16.msra.mxu0 0
        %2182 = vmatprep.subr.bf16.mxu0 0
        %2183 = vmatpush1.bf16.msra.mxu0 0
        %2184 = vmatprep.subr.bf16.mxu0 0
        %2185 = vmatpush1.bf16.msra.mxu0 0
        %2186 = vmatprep.subr.bf16.mxu0 0
        %2187 = vmatpush1.bf16.msra.mxu0 0
        %2188 = vmatprep.subr.bf16.mxu0 0
        %2189 = vmatpush1.bf16.msra.mxu0 0
        %2190 = vmatprep.subr.bf16.mxu0 0
        %2191 = vmatpush1.bf16.msra.mxu0 0
        %2192 = vmatprep.subr.bf16.mxu0 0
        %2193 = vmatpush1.bf16.msra.mxu0 0
        %2194 = vmatprep.subr.bf16.mxu0 0
        %2195 = vmatpush1.bf16.msra.mxu0 0
        %2196 = vmatprep.subr.bf16.mxu0 0
        %2197 = vmatpush1.bf16.msra.mxu0 0
        %2198 = vmatprep.subr.bf16.mxu0 0
        %2199 = vmatpush1.bf16.msra.mxu0 0
        %2200 = vmatprep.subr.bf16.mxu0 0
        %2201 = vmatpush1.bf16.msra.mxu0 0
        %2202 = vmatprep.subr.bf16.mxu0 0
        %2203 = vmatpush1.bf16.msra.mxu0 0
        %2204 = vmatprep.subr.bf16.mxu0 0
        %2205 = vmatpush1.bf16.msra.mxu0 0
        %2206 = vmatprep.subr.bf16.mxu0 0
        %2207 = vmatpush1.bf16.msra.mxu0 0
        %2208 = vmatprep.mubr.bf16.mxu0 0
        %2209 = vmatmul.mubr.bf16.gmra.mrb[0].mxu0 %v2165
        %v2210 = vpop.f32.mrb[0].mxu0
        %v2211 = vadd.f32 %v2107, %v2210
        %v2212 = vpop.f32.mrb[0].mxu0
        %v2213 = vadd.f32 %v2107, %v2212
        %v2214 = vpop.f32.mrb[0].mxu0
        %v2215 = vadd.f32 %v2112, %v2214
        %v2216 = vpop.f32.mrb[0].mxu0
        %v2217 = vadd.f32 %v2112, %v2216
        %2218 = vmatprep.mubr.bf16.mxu0 0
        %2219 = vmatmul.mubr.bf16.gmra.mrb[0].mxu0 %v2168
        %v2220 = vpop.f32.mrb[0].mxu0
        %v2221 = vadd.f32 %v2117, %v2220
        %v2222 = vpop.f32.mrb[0].mxu0
        %v2223 = vadd.f32 %v2117, %v2222
        %v2224 = vpop.f32.mrb[0].mxu0
        %v2225 = vadd.f32 %v2122, %v2224
        %v2226 = vpop.f32.mrb[0].mxu0
        %v2227 = vadd.f32 %v2122, %v2226
        %2228 = vmatprep.mubr.bf16.mxu0 0
        %2229 = vmatmul.mubr.bf16.gmra.mrb[0].mxu0 %v2171
        %v2230 = vpop.f32.mrb[0].mxu0
        %v2231 = vadd.f32 %v2127, %v2230
        %v2232 = vpop.f32.mrb[0].mxu0
        %v2233 = vadd.f32 %v2127, %v2232
        %v2234 = vpop.f32.mrb[0].mxu0
        %v2235 = vadd.f32 %v2132, %v2234
        %v2236 = vpop.f32.mrb[0].mxu0
        %v2237 = vadd.f32 %v2132, %v2236
        %2238 = vmatprep.mubr.bf16.mxu0 0
        %2239 = vmatmul.mubr.bf16.gmra.mrb[0].mxu0 %v2174
        %v2240 = vpop.f32.mrb[0].mxu0
        %v2241 = vadd.f32 %v2137, %v2240
        %v2242 = vpop.f32.mrb[0].mxu0
        %v2243 = vadd.f32 %v2137, %v2242
        %v2244 = vpop.f32.mrb[0].mxu0
        %v2245 = vadd.f32 %v2142, %v2244
        %v2246 = vpop.f32.mrb[0].mxu0
        %v2247 = vadd.f32 %v2142, %v2246
        %2248 = vdwg.mxu0
        %2249 = vmatprep.subr.bf16.mxu0 %v2095
        %2250 = vmatpush1.bf16.msra.mxu0 %v2094
        %2251 = vmatprep.subr.bf16.mxu0 0
        %2252 = vmatpush1.bf16.msra.mxu0 0
        %2253 = vmatprep.subr.bf16.mxu0 0
        %2254 = vmatpush1.bf16.msra.mxu0 0
        %2255 = vmatprep.subr.bf16.mxu0 0
        %2256 = vmatpush1.bf16.msra.mxu0 0
        %2257 = vmatprep.subr.bf16.mxu0 0
        %2258 = vmatpush1.bf16.msra.mxu0 0
        %2259 = vmatprep.subr.bf16.mxu0 0
        %2260 = vmatpush1.bf16.msra.mxu0 0
        %2261 = vmatprep.subr.bf16.mxu0 0
        %2262 = vmatpush1.bf16.msra.mxu0 0
        %2263 = vmatprep.subr.bf16.mxu0 0
        %2264 = vmatpush1.bf16.msra.mxu0 0
        %2265 = vmatprep.subr.bf16.mxu0 0
        %2266 = vmatpush1.bf16.msra.mxu0 0
        %2267 = vmatprep.subr.bf16.mxu0 0
        %2268 = vmatpush1.bf16.msra.mxu0 0
        %2269 = vmatprep.subr.bf16.mxu0 0
        %2270 = vmatpush1.bf16.msra.mxu0 0
        %2271 = vmatprep.subr.bf16.mxu0 0
        %2272 = vmatpush1.bf16.msra.mxu0 0
        %2273 = vmatprep.subr.bf16.mxu0 0
        %2274 = vmatpush1.bf16.msra.mxu0 0
        %2275 = vmatprep.subr.bf16.mxu0 0
        %2276 = vmatpush1.bf16.msra.mxu0 0
        %2277 = vmatprep.subr.bf16.mxu0 0
        %2278 = vmatpush1.bf16.msra.mxu0 0
        %2279 = vmatprep.subr.bf16.mxu0 0
        %2280 = vmatpush1.bf16.msra.mxu0 0
        %2281 = vmatprep.mubr.bf16.mxu0 0
        %2282 = vmatmul.mubr.bf16.gmra.mrb[0].mxu0 %v2165
        %v2283 = vpop.f32.mrb[0].mxu0
        %v2284 = vadd.f32 %v2107, %v2283
        %v2285 = vpop.f32.mrb[0].mxu0
        %v2286 = vadd.f32 %v2107, %v2285
        %v2287 = vpop.f32.mrb[0].mxu0
        %v2288 = vadd.f32 %v2112, %v2287
        %v2289 = vpop.f32.mrb[0].mxu0
        %v2290 = vadd.f32 %v2112, %v2289
        %2291 = vmatprep.mubr.bf16.mxu0 0
        %2292 = vmatmul.mubr.bf16.gmra.mrb[0].mxu0 %v2168
        %v2293 = vpop.f32.mrb[0].mxu0
        %v2294 = vadd.f32 %v2117, %v2293
        %v2295 = vpop.f32.mrb[0].mxu0
        %v2296 = vadd.f32 %v2117, %v2295
        %v2297 = vpop.f32.mrb[0].mxu0
        %v2298 = vadd.f32 %v2122, %v2297
        %v2299 = vpop.f32.mrb[0].mxu0
        %v2300 = vadd.f32 %v2122, %v2299
        %2301 = vmatprep.mubr.bf16.mxu0 0
        %2302 = vmatmul.mubr.bf16.gmra.mrb[0].mxu0 %v2171
        %v2303 = vpop.f32.mrb[0].mxu0
        %v2304 = vadd.f32 %v2127, %v2303
        %v2305 = vpop.f32.mrb[0].mxu0
        %v2306 = vadd.f32 %v2127, %v2305
        %v2307 = vpop.f32.mrb[0].mxu0
        %v2308 = vadd.f32 %v2132, %v2307
        %v2309 = vpop.f32.mrb[0].mxu0
        %v2310 = vadd.f32 %v2132, %v2309
        %2311 = vmatprep.mubr.bf16.mxu0 0
        %2312 = vmatmul.mubr.bf16.gmra.mrb[0].mxu0 %v2174
        %v2313 = vpop.f32.mrb[0].mxu0
        %v2314 = vadd.f32 %v2137, %v2313
        %v2315 = vpop.f32.mrb[0].mxu0
        %v2316 = vadd.f32 %v2137, %v2315
        %v2317 = vpop.f32.mrb[0].mxu0
        %v2318 = vadd.f32 %v2142, %v2317
        %v2319 = vpop.f32.mrb[0].mxu0
        %v2320 = vadd.f32 %v2142, %v2319
        %2321 = vdwg.mxu0
        %v2322 = vmax.f32 %v2211, 0.0
        %v2323 = vmax.f32 %v2213, 0.0
        %v2324 = vmax.f32 %v2284, 0.0
        %v2325 = vmax.f32 %v2286, 0.0
        %v2326 = vmax.f32 %v2215, 0.0
        %v2327 = vmax.f32 %v2217, 0.0
        %v2328 = vmax.f32 %v2288, 0.0
        %v2329 = vmax.f32 %v2290, 0.0
        %v2330 = vmax.f32 %v2221, 0.0
        %v2331 = vmax.f32 %v2223, 0.0
        %v2332 = vmax.f32 %v2294, 0.0
        %v2333 = vmax.f32 %v2296, 0.0
        %v2334 = vmax.f32 %v2225, 0.0
        %v2335 = vmax.f32 %v2227, 0.0
        %v2336 = vmax.f32 %v2298, 0.0
        %v2337 = vmax.f32 %v2300, 0.0
        %v2338 = vmax.f32 %v2231, 0.0
        %v2339 = vmax.f32 %v2233, 0.0
        %v2340 = vmax.f32 %v2304, 0.0
        %v2341 = vmax.f32 %v2306, 0.0
        %v2342 = vmax.f32 %v2235, 0.0
        %v2343 = vmax.f32 %v2237, 0.0
        %v2344 = vmax.f32 %v2308, 0.0
        %v2345 = vmax.f32 %v2310, 0.0
        %v2346 = vmax.f32 %v2241, 0.0
        %v2347 = vmax.f32 %v2243, 0.0
        %v2348 = vmax.f32 %v2314, 0.0
        %v2349 = vmax.f32 %v2316, 0.0
        %v2350 = vmax.f32 %v2245, 0.0
        %v2351 = vmax.f32 %v2247, 0.0
        %v2352 = vmax.f32 %v2318, 0.0
        %v2353 = vmax.f32 %v2320, 0.0
        %v2354 = vpack.c.bf16 %v2326, %v2322
        %v2355 = vpack.c.bf16 %v2327, %v2323
        %v2356 = vpack.c.bf16 %v2328, %v2324
        %v2357 = vpack.c.bf16 %v2329, %v2325
        %v2358 = vpack.c.bf16 %v2334, %v2330
        %v2359 = vpack.c.bf16 %v2335, %v2331
        %v2360 = vpack.c.bf16 %v2336, %v2332
        %v2361 = vpack.c.bf16 %v2337, %v2333
        %v2362 = vpack.c.bf16 %v2342, %v2338
        %v2363 = vpack.c.bf16 %v2343, %v2339
        %v2364 = vpack.c.bf16 %v2344, %v2340
        %v2365 = vpack.c.bf16 %v2345, %v2341
        %v2366 = vpack.c.bf16 %v2350, %v2346
        %v2367 = vpack.c.bf16 %v2351, %v2347
        %v2368 = vpack.c.bf16 %v2352, %v2348
        %v2369 = vpack.c.bf16 %v2353, %v2349
        %v2370 = vld [vmem:[%s6] sm:$0x3]
        %v2371 = vld [vmem:[%s7] sm:$0xf]
        %2373 = vset.pattern.permute.xlu0 0
        %2374 = vperm.xlu0 %2373, %v2371
        %v2375 = vpop.permute.xlu0 %2374
        %v2378 = vsel %vm667, %v2370, 0
        %2380 = vmatprep.subr.bf16.mxu0 %v2355
        %2381 = vmatpush1.bf16.msra.mxu0 %v2354
        %2382 = vmatprep.subr.bf16.mxu0 0
        %2383 = vmatpush1.bf16.msra.mxu0 0
        %2384 = vmatprep.subr.bf16.mxu0 0
        %2385 = vmatpush1.bf16.msra.mxu0 0
        %2386 = vmatprep.subr.bf16.mxu0 0
        %2387 = vmatpush1.bf16.msra.mxu0 0
        %2388 = vmatprep.subr.bf16.mxu0 0
        %2389 = vmatpush1.bf16.msra.mxu0 0
        %2390 = vmatprep.subr.bf16.mxu0 0
        %2391 = vmatpush1.bf16.msra.mxu0 0
        %2392 = vmatprep.subr.bf16.mxu0 0
        %2393 = vmatpush1.bf16.msra.mxu0 0
        %2394 = vmatprep.subr.bf16.mxu0 0
        %2395 = vmatpush1.bf16.msra.mxu0 0
        %2396 = vmatprep.subr.bf16.mxu0 0
        %2397 = vmatpush1.bf16.msra.mxu0 0
        %2398 = vmatprep.subr.bf16.mxu0 0
        %2399 = vmatpush1.bf16.msra.mxu0 0
        %2400 = vmatprep.subr.bf16.mxu0 0
        %2401 = vmatpush1.bf16.msra.mxu0 0
        %2402 = vmatprep.subr.bf16.mxu0 0
        %2403 = vmatpush1.bf16.msra.mxu0 0
        %2404 = vmatprep.subr.bf16.mxu0 0
        %2405 = vmatpush1.bf16.msra.mxu0 0
        %2406 = vmatprep.subr.bf16.mxu0 0
        %2407 = vmatpush1.bf16.msra.mxu0 0
        %2408 = vmatprep.subr.bf16.mxu0 0
        %2409 = vmatpush1.bf16.msra.mxu0 0
        %2410 = vmatprep.subr.bf16.mxu0 0
        %2411 = vmatpush1.bf16.msra.mxu0 0
        %2412 = vmatprep.mubr.bf16.mxu0 0
        %2413 = vmatmul.mubr.bf16.gmra.mrb[0].mxu0 %v2378
        %v2414 = vpop.f32.mrb[0].mxu0
        %v2415 = vadd.f32 %v2375, %v2414
        %v2416 = vpop.f32.mrb[0].mxu0
        %v2417 = vadd.f32 %v2375, %v2416
        %v2418 = vpop.f32.mrb[0].mxu0
        %v2419 = vpop.f32.mrb[0].mxu0
        %2420 = vdwg.mxu0
        %2421 = vmatprep.subr.bf16.mxu0 %v2357
        %2422 = vmatpush1.bf16.msra.mxu0 %v2356
        %2423 = vmatprep.subr.bf16.mxu0 0
        %2424 = vmatpush1.bf16.msra.mxu0 0
        %2425 = vmatprep.subr.bf16.mxu0 0
        %2426 = vmatpush1.bf16.msra.mxu0 0
        %2427 = vmatprep.subr.bf16.mxu0 0
        %2428 = vmatpush1.bf16.msra.mxu0 0
        %2429 = vmatprep.subr.bf16.mxu0 0
        %2430 = vmatpush1.bf16.msra.mxu0 0
        %2431 = vmatprep.subr.bf16.mxu0 0
        %2432 = vmatpush1.bf16.msra.mxu0 0
        %2433 = vmatprep.subr.bf16.mxu0 0
        %2434 = vmatpush1.bf16.msra.mxu0 0
        %2435 = vmatprep.subr.bf16.mxu0 0
        %2436 = vmatpush1.bf16.msra.mxu0 0
        %2437 = vmatprep.subr.bf16.mxu0 0
        %2438 = vmatpush1.bf16.msra.mxu0 0
        %2439 = vmatprep.subr.bf16.mxu0 0
        %2440 = vmatpush1.bf16.msra.mxu0 0
        %2441 = vmatprep.subr.bf16.mxu0 0
        %2442 = vmatpush1.bf16.msra.mxu0 0
        %2443 = vmatprep.subr.bf16.mxu0 0
        %2444 = vmatpush1.bf16.msra.mxu0 0
        %2445 = vmatprep.subr.bf16.mxu0 0
        %2446 = vmatpush1.bf16.msra.mxu0 0
        %2447 = vmatprep.subr.bf16.mxu0 0
        %2448 = vmatpush1.bf16.msra.mxu0 0
        %2449 = vmatprep.subr.bf16.mxu0 0
        %2450 = vmatpush1.bf16.msra.mxu0 0
        %2451 = vmatprep.subr.bf16.mxu0 0
        %2452 = vmatpush1.bf16.msra.mxu0 0
        %2453 = vmatprep.mubr.bf16.mxu0 0
        %2454 = vmatmul.mubr.bf16.gmra.mrb[0].mxu0 %v2378
        %v2455 = vpop.f32.mrb[0].mxu0
        %v2456 = vadd.f32 %v2375, %v2455
        %v2457 = vpop.f32.mrb[0].mxu0
        %v2458 = vadd.f32 %v2375, %v2457
        %v2459 = vpop.f32.mrb[0].mxu0
        %v2460 = vpop.f32.mrb[0].mxu0
        %2461 = vdwg.mxu0
        %v2462 = vpack.c.bf16 %v2415, %v2415
        %v2463 = vpack.c.bf16 %v2417, %v2417
        %v2464 = vpack.c.bf16 %v2456, %v2456
        %v2465 = vpack.c.bf16 %v2458, %v2458
        %v2470 = vcombine.low %v2462, %v2463
        %v2471 = vcombine.low %v2464, %v2465
        %v2473 = vunpack.c.l.s4 1983009808
        %v2474 = vunpack.c.0.s8 %v2473
        %v2475 = vlaneseq
        %v2476 = vshrl.u32 %v2475, 7
        %v2477 = vsub.s32 %v2474, %v2476
        %v2478 = vrot.slane %v2470, %v2477
        %v2480 = vunpack.c.l.s4 1983009808
        %v2481 = vunpack.c.0.s8 %v2480
        %v2482 = vlaneseq
        %v2483 = vshrl.u32 %v2482, 7
        %v2484 = vsub.s32 %v2481, %v2483
        %v2485 = vrot.slane %v2471, %v2484
        %v2486 = vcombine.low %v2478, %v2485
        %2488 = vst [vmem:[%s298] sm:$0xff] %v2486
        %v2489 = vld [vmem:[%s6] sm:$0x3]
        %v2490 = vld [vmem:[%s7] sm:$0xf]
        %2492 = vset.pattern.permute.xlu0 0
        %2493 = vperm.xlu0 %2492, %v2490
        %v2494 = vpop.permute.xlu0 %2493
        %v2497 = vsel %vm667, %v2489, 0
        %2499 = vmatprep.subr.bf16.mxu0 %v2359
        %2500 = vmatpush1.bf16.msra.mxu0 %v2358
        %2501 = vmatprep.subr.bf16.mxu0 0
        %2502 = vmatpush1.bf16.msra.mxu0 0
        %2503 = vmatprep.subr.bf16.mxu0 0
        %2504 = vmatpush1.bf16.msra.mxu0 0
        %2505 = vmatprep.subr.bf16.mxu0 0
        %2506 = vmatpush1.bf16.msra.mxu0 0
        %2507 = vmatprep.subr.bf16.mxu0 0
        %2508 = vmatpush1.bf16.msra.mxu0 0
        %2509 = vmatprep.subr.bf16.mxu0 0
        %2510 = vmatpush1.bf16.msra.mxu0 0
        %2511 = vmatprep.subr.bf16.mxu0 0
        %2512 = vmatpush1.bf16.msra.mxu0 0
        %2513 = vmatprep.subr.bf16.mxu0 0
        %2514 = vmatpush1.bf16.msra.mxu0 0
        %2515 = vmatprep.subr.bf16.mxu0 0
        %2516 = vmatpush1.bf16.msra.mxu0 0
        %2517 = vmatprep.subr.bf16.mxu0 0
        %2518 = vmatpush1.bf16.msra.mxu0 0
        %2519 = vmatprep.subr.bf16.mxu0 0
        %2520 = vmatpush1.bf16.msra.mxu0 0
        %2521 = vmatprep.subr.bf16.mxu0 0
        %2522 = vmatpush1.bf16.msra.mxu0 0
        %2523 = vmatprep.subr.bf16.mxu0 0
        %2524 = vmatpush1.bf16.msra.mxu0 0
        %2525 = vmatprep.subr.bf16.mxu0 0
        %2526 = vmatpush1.bf16.msra.mxu0 0
        %2527 = vmatprep.subr.bf16.mxu0 0
        %2528 = vmatpush1.bf16.msra.mxu0 0
        %2529 = vmatprep.subr.bf16.mxu0 0
        %2530 = vmatpush1.bf16.msra.mxu0 0
        %2531 = vmatprep.mubr.bf16.mxu0 0
        %2532 = vmatmul.mubr.bf16.gmra.mrb[0].mxu0 %v2497
        %v2533 = vpop.f32.mrb[0].mxu0
        %v2534 = vadd.f32 %v2494, %v2533
        %v2535 = vpop.f32.mrb[0].mxu0
        %v2536 = vadd.f32 %v2494, %v2535
        %v2537 = vpop.f32.mrb[0].mxu0
        %v2538 = vpop.f32.mrb[0].mxu0
        %2539 = vdwg.mxu0
        %2540 = vmatprep.subr.bf16.mxu0 %v2361
        %2541 = vmatpush1.bf16.msra.mxu0 %v2360
        %2542 = vmatprep.subr.bf16.mxu0 0
        %2543 = vmatpush1.bf16.msra.mxu0 0
        %2544 = vmatprep.subr.bf16.mxu0 0
        %2545 = vmatpush1.bf16.msra.mxu0 0
        %2546 = vmatprep.subr.bf16.mxu0 0
        %2547 = vmatpush1.bf16.msra.mxu0 0
        %2548 = vmatprep.subr.bf16.mxu0 0
        %2549 = vmatpush1.bf16.msra.mxu0 0
        %2550 = vmatprep.subr.bf16.mxu0 0
        %2551 = vmatpush1.bf16.msra.mxu0 0
        %2552 = vmatprep.subr.bf16.mxu0 0
        %2553 = vmatpush1.bf16.msra.mxu0 0
        %2554 = vmatprep.subr.bf16.mxu0 0
        %2555 = vmatpush1.bf16.msra.mxu0 0
        %2556 = vmatprep.subr.bf16.mxu0 0
        %2557 = vmatpush1.bf16.msra.mxu0 0
        %2558 = vmatprep.subr.bf16.mxu0 0
        %2559 = vmatpush1.bf16.msra.mxu0 0
        %2560 = vmatprep.subr.bf16.mxu0 0
        %2561 = vmatpush1.bf16.msra.mxu0 0
        %2562 = vmatprep.subr.bf16.mxu0 0
        %2563 = vmatpush1.bf16.msra.mxu0 0
        %2564 = vmatprep.subr.bf16.mxu0 0
        %2565 = vmatpush1.bf16.msra.mxu0 0
        %2566 = vmatprep.subr.bf16.mxu0 0
        %2567 = vmatpush1.bf16.msra.mxu0 0
        %2568 = vmatprep.subr.bf16.mxu0 0
        %2569 = vmatpush1.bf16.msra.mxu0 0
        %2570 = vmatprep.subr.bf16.mxu0 0
        %2571 = vmatpush1.bf16.msra.mxu0 0
        %2572 = vmatprep.mubr.bf16.mxu0 0
        %2573 = vmatmul.mubr.bf16.gmra.mrb[0].mxu0 %v2497
        %v2574 = vpop.f32.mrb[0].mxu0
        %v2575 = vadd.f32 %v2494, %v2574
        %v2576 = vpop.f32.mrb[0].mxu0
        %v2577 = vadd.f32 %v2494, %v2576
        %v2578 = vpop.f32.mrb[0].mxu0
        %v2579 = vpop.f32.mrb[0].mxu0
        %2580 = vdwg.mxu0
        %v2581 = vpack.c.bf16 %v2534, %v2534
        %v2582 = vpack.c.bf16 %v2536, %v2536
        %v2583 = vpack.c.bf16 %v2575, %v2575
        %v2584 = vpack.c.bf16 %v2577, %v2577
        %v2589 = vcombine.low %v2581, %v2582
        %v2590 = vcombine.low %v2583, %v2584
        %v2592 = vunpack.c.l.s4 1983009808
        %v2593 = vunpack.c.0.s8 %v2592
        %v2594 = vlaneseq
        %v2595 = vshrl.u32 %v2594, 7
        %v2596 = vsub.s32 %v2593, %v2595
        %v2597 = vrot.slane %v2589, %v2596
        %v2599 = vunpack.c.l.s4 1983009808
        %v2600 = vunpack.c.0.s8 %v2599
        %v2601 = vlaneseq
        %v2602 = vshrl.u32 %v2601, 7
        %v2603 = vsub.s32 %v2600, %v2602
        %v2604 = vrot.slane %v2590, %v2603
        %v2605 = vcombine.low %v2597, %v2604
        %s2607 = scalar_lea.vmem %s298, 8 [#allocation3]
        %2608 = vst [vmem:[%s2607] sm:$0xff] %v2605
        %v2609 = vld [vmem:[%s6] sm:$0x3]
        %v2610 = vld [vmem:[%s7] sm:$0xf]
        %2612 = vset.pattern.permute.xlu0 0
        %2613 = vperm.xlu0 %2612, %v2610
        %v2614 = vpop.permute.xlu0 %2613
        %v2617 = vsel %vm667, %v2609, 0
        %2619 = vmatprep.subr.bf16.mxu0 %v2363
        %2620 = vmatpush1.bf16.msra.mxu0 %v2362
        %2621 = vmatprep.subr.bf16.mxu0 0
        %2622 = vmatpush1.bf16.msra.mxu0 0
        %2623 = vmatprep.subr.bf16.mxu0 0
        %2624 = vmatpush1.bf16.msra.mxu0 0
        %2625 = vmatprep.subr.bf16.mxu0 0
        %2626 = vmatpush1.bf16.msra.mxu0 0
        %2627 = vmatprep.subr.bf16.mxu0 0
        %2628 = vmatpush1.bf16.msra.mxu0 0
        %2629 = vmatprep.subr.bf16.mxu0 0
        %2630 = vmatpush1.bf16.msra.mxu0 0
        %2631 = vmatprep.subr.bf16.mxu0 0
        %2632 = vmatpush1.bf16.msra.mxu0 0
        %2633 = vmatprep.subr.bf16.mxu0 0
        %2634 = vmatpush1.bf16.msra.mxu0 0
        %2635 = vmatprep.subr.bf16.mxu0 0
        %2636 = vmatpush1.bf16.msra.mxu0 0
        %2637 = vmatprep.subr.bf16.mxu0 0
        %2638 = vmatpush1.bf16.msra.mxu0 0
        %2639 = vmatprep.subr.bf16.mxu0 0
        %2640 = vmatpush1.bf16.msra.mxu0 0
        %2641 = vmatprep.subr.bf16.mxu0 0
        %2642 = vmatpush1.bf16.msra.mxu0 0
        %2643 = vmatprep.subr.bf16.mxu0 0
        %2644 = vmatpush1.bf16.msra.mxu0 0
        %2645 = vmatprep.subr.bf16.mxu0 0
        %2646 = vmatpush1.bf16.msra.mxu0 0
        %2647 = vmatprep.subr.bf16.mxu0 0
        %2648 = vmatpush1.bf16.msra.mxu0 0
        %2649 = vmatprep.subr.bf16.mxu0 0
        %2650 = vmatpush1.bf16.msra.mxu0 0
        %2651 = vmatprep.mubr.bf16.mxu0 0
        %2652 = vmatmul.mubr.bf16.gmra.mrb[0].mxu0 %v2617
        %v2653 = vpop.f32.mrb[0].mxu0
        %v2654 = vadd.f32 %v2614, %v2653
        %v2655 = vpop.f32.mrb[0].mxu0
        %v2656 = vadd.f32 %v2614, %v2655
        %v2657 = vpop.f32.mrb[0].mxu0
        %v2658 = vpop.f32.mrb[0].mxu0
        %2659 = vdwg.mxu0
        %2660 = vmatprep.subr.bf16.mxu0 %v2365
        %2661 = vmatpush1.bf16.msra.mxu0 %v2364
        %2662 = vmatprep.subr.bf16.mxu0 0
        %2663 = vmatpush1.bf16.msra.mxu0 0
        %2664 = vmatprep.subr.bf16.mxu0 0
        %2665 = vmatpush1.bf16.msra.mxu0 0
        %2666 = vmatprep.subr.bf16.mxu0 0
        %2667 = vmatpush1.bf16.msra.mxu0 0
        %2668 = vmatprep.subr.bf16.mxu0 0
        %2669 = vmatpush1.bf16.msra.mxu0 0
        %2670 = vmatprep.subr.bf16.mxu0 0
        %2671 = vmatpush1.bf16.msra.mxu0 0
        %2672 = vmatprep.subr.bf16.mxu0 0
        %2673 = vmatpush1.bf16.msra.mxu0 0
        %2674 = vmatprep.subr.bf16.mxu0 0
        %2675 = vmatpush1.bf16.msra.mxu0 0
        %2676 = vmatprep.subr.bf16.mxu0 0
        %2677 = vmatpush1.bf16.msra.mxu0 0
        %2678 = vmatprep.subr.bf16.mxu0 0
        %2679 = vmatpush1.bf16.msra.mxu0 0
        %2680 = vmatprep.subr.bf16.mxu0 0
        %2681 = vmatpush1.bf16.msra.mxu0 0
        %2682 = vmatprep.subr.bf16.mxu0 0
        %2683 = vmatpush1.bf16.msra.mxu0 0
        %2684 = vmatprep.subr.bf16.mxu0 0
        %2685 = vmatpush1.bf16.msra.mxu0 0
        %2686 = vmatprep.subr.bf16.mxu0 0
        %2687 = vmatpush1.bf16.msra.mxu0 0
        %2688 = vmatprep.subr.bf16.mxu0 0
        %2689 = vmatpush1.bf16.msra.mxu0 0
        %2690 = vmatprep.subr.bf16.mxu0 0
        %2691 = vmatpush1.bf16.msra.mxu0 0
        %2692 = vmatprep.mubr.bf16.mxu0 0
        %2693 = vmatmul.mubr.bf16.gmra.mrb[0].mxu0 %v2617
        %v2694 = vpop.f32.mrb[0].mxu0
        %v2695 = vadd.f32 %v2614, %v2694
        %v2696 = vpop.f32.mrb[0].mxu0
        %v2697 = vadd.f32 %v2614, %v2696
        %v2698 = vpop.f32.mrb[0].mxu0
        %v2699 = vpop.f32.mrb[0].mxu0
        %2700 = vdwg.mxu0
        %v2701 = vpack.c.bf16 %v2654, %v2654
        %v2702 = vpack.c.bf16 %v2656, %v2656
        %v2703 = vpack.c.bf16 %v2695, %v2695
        %v2704 = vpack.c.bf16 %v2697, %v2697
        %v2709 = vcombine.low %v2701, %v2702
        %v2710 = vcombine.low %v2703, %v2704
        %v2712 = vunpack.c.l.s4 1983009808
        %v2713 = vunpack.c.0.s8 %v2712
        %v2714 = vlaneseq
        %v2715 = vshrl.u32 %v2714, 7
        %v2716 = vsub.s32 %v2713, %v2715
        %v2717 = vrot.slane %v2709, %v2716
        %v2719 = vunpack.c.l.s4 1983009808
        %v2720 = vunpack.c.0.s8 %v2719
        %v2721 = vlaneseq
        %v2722 = vshrl.u32 %v2721, 7
        %v2723 = vsub.s32 %v2720, %v2722
        %v2724 = vrot.slane %v2710, %v2723
        %v2725 = vcombine.low %v2717, %v2724
        %s2727 = scalar_lea.vmem %s298, 16 [#allocation3]
        %2728 = vst [vmem:[%s2727] sm:$0xff] %v2725
        %v2729 = vld [vmem:[%s6] sm:$0x3]
        %v2730 = vld [vmem:[%s7] sm:$0xf]
        %2732 = vset.pattern.permute.xlu0 0
        %2733 = vperm.xlu0 %2732, %v2730
        %v2734 = vpop.permute.xlu0 %2733
        %v2737 = vsel %vm667, %v2729, 0
        %2739 = vmatprep.subr.bf16.mxu0 %v2367
        %2740 = vmatpush1.bf16.msra.mxu0 %v2366
        %2741 = vmatprep.subr.bf16.mxu0 0
        %2742 = vmatpush1.bf16.msra.mxu0 0
        %2743 = vmatprep.subr.bf16.mxu0 0
        %2744 = vmatpush1.bf16.msra.mxu0 0
        %2745 = vmatprep.subr.bf16.mxu0 0
        %2746 = vmatpush1.bf16.msra.mxu0 0
        %2747 = vmatprep.subr.bf16.mxu0 0
        %2748 = vmatpush1.bf16.msra.mxu0 0
        %2749 = vmatprep.subr.bf16.mxu0 0
        %2750 = vmatpush1.bf16.msra.mxu0 0
        %2751 = vmatprep.subr.bf16.mxu0 0
        %2752 = vmatpush1.bf16.msra.mxu0 0
        %2753 = vmatprep.subr.bf16.mxu0 0
        %2754 = vmatpush1.bf16.msra.mxu0 0
        %2755 = vmatprep.subr.bf16.mxu0 0
        %2756 = vmatpush1.bf16.msra.mxu0 0
        %2757 = vmatprep.subr.bf16.mxu0 0
        %2758 = vmatpush1.bf16.msra.mxu0 0
        %2759 = vmatprep.subr.bf16.mxu0 0
        %2760 = vmatpush1.bf16.msra.mxu0 0
        %2761 = vmatprep.subr.bf16.mxu0 0
        %2762 = vmatpush1.bf16.msra.mxu0 0
        %2763 = vmatprep.subr.bf16.mxu0 0
        %2764 = vmatpush1.bf16.msra.mxu0 0
        %2765 = vmatprep.subr.bf16.mxu0 0
        %2766 = vmatpush1.bf16.msra.mxu0 0
        %2767 = vmatprep.subr.bf16.mxu0 0
        %2768 = vmatpush1.bf16.msra.mxu0 0
        %2769 = vmatprep.subr.bf16.mxu0 0
        %2770 = vmatpush1.bf16.msra.mxu0 0
        %2771 = vmatprep.mubr.bf16.mxu0 0
        %2772 = vmatmul.mubr.bf16.gmra.mrb[0].mxu0 %v2737
        %v2773 = vpop.f32.mrb[0].mxu0
        %v2774 = vadd.f32 %v2734, %v2773
        %v2775 = vpop.f32.mrb[0].mxu0
        %v2776 = vadd.f32 %v2734, %v2775
        %v2777 = vpop.f32.mrb[0].mxu0
        %v2778 = vpop.f32.mrb[0].mxu0
        %2779 = vdwg.mxu0
        %2780 = vmatprep.subr.bf16.mxu0 %v2369
        %2781 = vmatpush1.bf16.msra.mxu0 %v2368
        %2782 = vmatprep.subr.bf16.mxu0 0
        %2783 = vmatpush1.bf16.msra.mxu0 0
        %2784 = vmatprep.subr.bf16.mxu0 0
        %2785 = vmatpush1.bf16.msra.mxu0 0
        %2786 = vmatprep.subr.bf16.mxu0 0
        %2787 = vmatpush1.bf16.msra.mxu0 0
        %2788 = vmatprep.subr.bf16.mxu0 0
        %2789 = vmatpush1.bf16.msra.mxu0 0
        %2790 = vmatprep.subr.bf16.mxu0 0
        %2791 = vmatpush1.bf16.msra.mxu0 0
        %2792 = vmatprep.subr.bf16.mxu0 0
        %2793 = vmatpush1.bf16.msra.mxu0 0
        %2794 = vmatprep.subr.bf16.mxu0 0
        %2795 = vmatpush1.bf16.msra.mxu0 0
        %2796 = vmatprep.subr.bf16.mxu0 0
        %2797 = vmatpush1.bf16.msra.mxu0 0
        %2798 = vmatprep.subr.bf16.mxu0 0
        %2799 = vmatpush1.bf16.msra.mxu0 0
        %2800 = vmatprep.subr.bf16.mxu0 0
        %2801 = vmatpush1.bf16.msra.mxu0 0
        %2802 = vmatprep.subr.bf16.mxu0 0
        %2803 = vmatpush1.bf16.msra.mxu0 0
        %2804 = vmatprep.subr.bf16.mxu0 0
        %2805 = vmatpush1.bf16.msra.mxu0 0
        %2806 = vmatprep.subr.bf16.mxu0 0
        %2807 = vmatpush1.bf16.msra.mxu0 0
        %2808 = vmatprep.subr.bf16.mxu0 0
        %2809 = vmatpush1.bf16.msra.mxu0 0
        %2810 = vmatprep.subr.bf16.mxu0 0
        %2811 = vmatpush1.bf16.msra.mxu0 0
        %2812 = vmatprep.mubr.bf16.mxu0 0
        %2813 = vmatmul.mubr.bf16.gmra.mrb[0].mxu0 %v2737
        %v2814 = vpop.f32.mrb[0].mxu0
        %v2815 = vadd.f32 %v2734, %v2814
        %v2816 = vpop.f32.mrb[0].mxu0
        %v2817 = vadd.f32 %v2734, %v2816
        %v2818 = vpop.f32.mrb[0].mxu0
        %v2819 = vpop.f32.mrb[0].mxu0
        %2820 = vdwg.mxu0
        %v2821 = vpack.c.bf16 %v2774, %v2774
        %v2822 = vpack.c.bf16 %v2776, %v2776
        %v2823 = vpack.c.bf16 %v2815, %v2815
        %v2824 = vpack.c.bf16 %v2817, %v2817
        %v2829 = vcombine.low %v2821, %v2822
        %v2830 = vcombine.low %v2823, %v2824
        %v2832 = vunpack.c.l.s4 1983009808
        %v2833 = vunpack.c.0.s8 %v2832
        %v2834 = vlaneseq
        %v2835 = vshrl.u32 %v2834, 7
        %v2836 = vsub.s32 %v2833, %v2835
        %v2837 = vrot.slane %v2829, %v2836
        %v2839 = vunpack.c.l.s4 1983009808
        %v2840 = vunpack.c.0.s8 %v2839
        %v2841 = vlaneseq
        %v2842 = vshrl.u32 %v2841, 7
        %v2843 = vsub.s32 %v2840, %v2842
        %v2844 = vrot.slane %v2830, %v2843
        %v2845 = vcombine.low %v2837, %v2844
        %s2847 = scalar_lea.vmem %s298, 24 [#allocation3]
        %2848 = vst [vmem:[%s2847] sm:$0xff] %v2845
        %s2849 = sand.u32 %s203, 1
        %s2850 = scalar_lea.sflag [#allocation4], %s2849
        %s2851 = sand.u32 %s203, 1
        %s2852 = smul.addr %s2851, 32
        %s2853 = scalar_lea.vmem [#allocation3], %s2852
        // Predicated region
        $region53: #{tpu_custom_call.1} parent=51 // pred_check
          %p2854 = pneg %p213
        $region54: #{tpu_custom_call.1} parent=51 // pred_check_branch
          %2856 = sbr.rel (%p2854) target = $region56
        $region55: #{tpu_custom_call.1} parent=51 // pred_region
          %s2858 = ssub.s32 512, 512
          %2859 = vsyncadd %s2850, %s2858
          %s2860 = smul.addr %s22, 16
          %s2861 = smul.addr %s2860, 32
          %s2862 = scalar_lea.hbm %s8, %s2861
          %s2863 = sshll.u32 %s2853, 4
          %s2864 = int_to_ptr.vmem [resolvable:$true] %s2863
          %2869 = dma.vmem_to_hbm [thread:$0]  %s2864, 512, %s2862, %s2850, 128, 128, 8
        $region56: #{tpu_custom_call.1} parent=51 // pred_fallthru
          _
      $region52: #{tpu_custom_call.1} parent=5 // pred_fallthru
        _
      %p2870 = scmp.le.s32.totalorder 2, %s17
      // Predicated region
      $region57: #{tpu_custom_call.1} parent=5 // pred_check
        %p2871 = pneg %p2870
      $region58: #{tpu_custom_call.1} parent=5 // pred_check_branch
        %2873 = sbr.rel (%p2871) target = $region60
      $region59: #{tpu_custom_call.1} parent=5 // pred_region
        %s2874 = ssub.s32 %s17, 2
        // Predicated region
        $region61: #{tpu_custom_call.1} parent=59 // pred_check
          %p2875 = pneg %p219
        $region62: #{tpu_custom_call.1} parent=59 // pred_check_branch
          %2877 = sbr.rel (%p2875) target = $region64
        $region63: #{tpu_custom_call.1} parent=59 // pred_region
          %s2878 = sand.u32 %s204, 1
          %s2879 = scalar_lea.sflag [#allocation4], %s2878
          %s2880 = sand.u32 %s204, 1
          %s2881 = smul.addr %s2880, 32
          %s2882 = scalar_lea.vmem [#allocation3], %s2881
          %2883 = dma.done %s2879, 512
        $region64: #{tpu_custom_call.1} parent=59 // pred_fallthru
          _
      $region60: #{tpu_custom_call.1} parent=5 // pred_fallthru
        _
    $region6: #{tpu_custom_call.1} parent=1 // loop_footer
      %s21 = sadd.s32 1, %s17
    $region7: #{tpu_custom_call.1} parent=1 // loop_footer_branch
      %16 = sbr.rel target = $region3
    $region8: #{tpu_custom_call.1} parent=1 // loop_exit
      _
    %2884 = vsyncpa [#allocation4], 1
    %s2885 = scalar_lea.sflag [#allocation4], 1
    %2886 = vsyncpa %s2885, 1

</llo_original>
